<compile_context>
chip_gen: v7x
topology: tpu7x:2x2x1
jax: 0.10.0
libtpu: 0.0.40
codegen_flags: <defaults>
</compile_context>

<pallas_src>
import numpy as np

import jax
import jax.numpy as jnp
from jax import lax
from jax.experimental import pallas as pl
from jax.experimental.pallas import tpu as pltpu

LANE = 128
SUBLANE = 8


def _round_up(x, m):
    return ((x + m - 1) // m) * m


# ----------------------------------------------------------------------------
# Fused kernel factory: all LSTM layers + final FC in one pallas_call.
# ----------------------------------------------------------------------------
def _make_lstm_net_kernel(num_layers, T, B, H):
    """B is the (sublane-padded) batch size used inside the kernel."""

    def kernel(*refs):
        # inputs: x, then per layer (w_ih, w_hh, b), then fc_w, fc_b
        x_ref = refs[0]                               # (T*B, Din), time-major rows
        layer_refs = refs[1:1 + 3 * num_layers]
        fc_w_ref = refs[1 + 3 * num_layers]           # (H, O_pad)
        fc_b_ref = refs[2 + 3 * num_layers]           # (1, O_pad)
        out_ref = refs[3 + 3 * num_layers]            # (B, O_pad)
        proj_ref, seq_ref, h_ref, c_ref = refs[4 + 3 * num_layers:]

        for layer in range(num_layers):
            w_ih_ref = layer_refs[3 * layer + 0]      # (Din_l, 4H)
            w_hh_ref = layer_refs[3 * layer + 1]      # (H, 4H)
            b_ref = layer_refs[3 * layer + 2]         # (1, 4H) == b_ih + b_hh

            # ---- hoisted input projection: one bulk MXU matmul for all T ----
            xin = x_ref[...] if layer == 0 else seq_ref[...]     # (T*B, Din_l)
            proj_ref[...] = (
                jnp.dot(xin, w_ih_ref[...], preferred_element_type=jnp.float32)
                + b_ref[...]
            )                                                    # (T*B, 4H)

            # ---- sequential recurrence: only h @ W_hh on the serial path ----
            h_ref[...] = jnp.zeros_like(h_ref)
            c_ref[...] = jnp.zeros_like(c_ref)
            w_hh = w_hh_ref[...]                                 # hoist weight load
            write_seq = layer < num_layers - 1                   # last layer only needs h

            def step(t, carry, w_hh=w_hh, write_seq=write_seq):
                row = pl.multiple_of(t * B, SUBLANE)
                gates = proj_ref[pl.ds(row, B), :] + jnp.dot(
                    h_ref[...], w_hh, preferred_element_type=jnp.float32
                )                                                # (B, 4H)
                i_g = jax.nn.sigmoid(gates[:, 0 * H:1 * H])
                f_g = jax.nn.sigmoid(gates[:, 1 * H:2 * H])
                g_g = jnp.tanh(gates[:, 2 * H:3 * H])
                o_g = jax.nn.sigmoid(gates[:, 3 * H:4 * H])
                c_new = f_g * c_ref[...] + i_g * g_g
                h_new = o_g * jnp.tanh(c_new)
                c_ref[...] = c_new
                h_ref[...] = h_new
                if write_seq:
                    seq_ref[pl.ds(row, B), :] = h_new            # feeds next layer
                return carry

            lax.fori_loop(0, T, step, 0, unroll=True)

        # ---- final Linear on the last-timestep hidden state of last layer ----
        out_ref[...] = (
            jnp.dot(h_ref[...], fc_w_ref[...], preferred_element_type=jnp.float32)
            + fc_b_ref[...]
        )

    return kernel


# ----------------------------------------------------------------------------
# Host-side wrapper.
# ----------------------------------------------------------------------------
def lstm_net_forward(params, x):
    """x: (B, T, input_size), batch_first, as in the PyTorch module."""
    B, T, Din = x.shape
    H = params["lstm"][0]["w_hh"].shape[0]
    O = params["fc"]["w"].shape[1]
    num_layers = len(params["lstm"])

    # Pad batch to the 8-row sublane width (padded rows are sliced off below).
    B_pad = _round_up(B, SUBLANE)
    if B_pad != B:
        x = jnp.pad(x, ((0, B_pad - B), (0, 0), (0, 0)))

    # Pad FC output width to a full 128-lane vreg so the final store is
    # unmasked; extra columns are zero and sliced off after the call.
    O_pad = _round_up(O, LANE)
    fc_w = params["fc"]["w"]
    fc_b = params["fc"]["b"]
    if O_pad != O:
        fc_w = jnp.pad(fc_w, ((0, 0), (0, O_pad - O)))
        fc_b = jnp.pad(fc_b, ((0, 0), (0, O_pad - O)))

    # Time-major rows: row block [t*B_pad : (t+1)*B_pad] is timestep t.
    x_tb = jnp.transpose(x, (1, 0, 2)).reshape(T * B_pad, Din)

    inputs = [x_tb]
    in_specs = [pl.BlockSpec((T * B_pad, Din), lambda i: (0, 0))]
    for layer in params["lstm"]:
        for name in ("w_ih", "w_hh", "b"):
            arr = layer[name]
            inputs.append(arr)
            in_specs.append(pl.BlockSpec(arr.shape, lambda i: (0, 0)))
    for arr in (fc_w, fc_b):
        inputs.append(arr)
        in_specs.append(pl.BlockSpec(arr.shape, lambda i: (0, 0)))

    kernel = _make_lstm_net_kernel(num_layers, T, B_pad, H)

    out = pl.pallas_call(
        kernel,
        out_shape=jax.ShapeDtypeStruct((B_pad, O_pad), jnp.float32),
        grid_spec=pltpu.PrefetchScalarGridSpec(
            num_scalar_prefetch=0,
            grid=(1,),
            in_specs=in_specs,
            out_specs=pl.BlockSpec((B_pad, O_pad), lambda i: (0, 0)),
            scratch_shapes=[
                pltpu.VMEM((T * B_pad, 4 * H), jnp.float32),  # X@W_ih + b (all T)
                pltpu.VMEM((T * B_pad, H), jnp.float32),      # inter-layer sequence
                pltpu.VMEM((B_pad, H), jnp.float32),          # h
                pltpu.VMEM((B_pad, H), jnp.float32),          # c
            ],
        ),
        compiler_params=pltpu.CompilerParams(
            dimension_semantics=("arbitrary",),  # recurrence is sequential
        ),
    )(*inputs)
    return out[:B, :O]


# ----------------------------------------------------------------------------
# Pure-JAX reference (mirrors nn.LSTM + nn.Linear forward) for verification.
# ----------------------------------------------------------------------------
def lstm_net_reference(params, x):
    B, T, _ = x.shape
    seq = x
    for layer in params["lstm"]:
        H = layer["w_hh"].shape[0]
        h = jnp.zeros((B, H), jnp.float32)
        c = jnp.zeros((B, H), jnp.float32)
        outs = []
        for t in range(T):
            gates = seq[:, t, :] @ layer["w_ih"] + h @ layer["w_hh"] + layer["b"]
            i_g = jax.nn.sigmoid(gates[:, 0 * H:1 * H])
            f_g = jax.nn.sigmoid(gates[:, 1 * H:2 * H])
            g_g = jnp.tanh(gates[:, 2 * H:3 * H])
            o_g = jax.nn.sigmoid(gates[:, 3 * H:4 * H])
            c = f_g * c + i_g * g_g
            h = o_g * jnp.tanh(c)
            outs.append(h)
        seq = jnp.stack(outs, axis=1)
    return seq[:, -1, :] @ params["fc"]["w"] + params["fc"]["b"]


# ----------------------------------------------------------------------------
# Parameter init (deterministic, PyTorch-shaped; weights pre-transposed).
# ----------------------------------------------------------------------------
def init_params(key, input_size, hidden_size, num_layers, output_size):
    params = {"lstm": [], "fc": {}}
    bound = 1.0 / float(np.sqrt(hidden_size))
    for layer in range(num_layers):
        d_in = input_size if layer == 0 else hidden_size
        key, k1, k2, k3, k4 = jax.random.split(key, 5)
        # PyTorch stores (4H, D); we pre-transpose to (D, 4H) for x @ W.
        w_ih = jax.random.uniform(k1, (d_in, 4 * hidden_size), jnp.float32,
                                  -bound, bound)
        w_hh = jax.random.uniform(k2, (hidden_size, 4 * hidden_size),
                                  jnp.float32, -bound, bound)
        b_ih = jax.random.uniform(k3, (4 * hidden_size,), jnp.float32,
                                  -bound, bound)
        b_hh = jax.random.uniform(k4, (4 * hidden_size,), jnp.float32,
                                  -bound, bound)
        params["lstm"].append(
            {"w_ih": w_ih, "w_hh": w_hh, "b": (b_ih + b_hh)[None, :]}
        )
    key, k1, k2 = jax.random.split(key, 3)
    params["fc"]["w"] = jax.random.uniform(
        k1, (hidden_size, output_size), jnp.float32, -bound, bound)
    params["fc"]["b"] = jax.random.uniform(
        k2, (1, output_size), jnp.float32, -bound, bound)
    return params


if __name__ == "__main__":
    input_size = 16
    hidden_size = 32
    num_layers = 2
    output_size = 4
    batch = 2
    seq = 8

    key = jax.random.PRNGKey(0)
    key, xk = jax.random.split(key)
    x = jax.random.normal(xk, (batch, seq, input_size), jnp.float32)

    params = init_params(key, input_size, hidden_size, num_layers, output_size)

    out = lstm_net_forward(params, x)
    out = jax.block_until_ready(out)
    assert out.shape == (batch, output_size), out.shape

    ref = jax.block_until_ready(lstm_net_reference(params, x))
    np.testing.assert_allclose(np.asarray(out), np.asarray(ref),
                               rtol=1e-4, atol=1e-4)
    print("KERNEL_OK")
</pallas_src>

<mosaic_0001>
module attributes {stable_mosaic.version = 11 : i64} {
  func.func @kernel(%arg0: i32, %arg1: memref<64x16xf32, #tpu.memory_space<vmem>>, %arg2: memref<16x128xf32, #tpu.memory_space<vmem>>, %arg3: memref<32x128xf32, #tpu.memory_space<vmem>>, %arg4: memref<1x128xf32, #tpu.memory_space<vmem>>, %arg5: memref<32x128xf32, #tpu.memory_space<vmem>>, %arg6: memref<32x128xf32, #tpu.memory_space<vmem>>, %arg7: memref<1x128xf32, #tpu.memory_space<vmem>>, %arg8: memref<32x128xf32, #tpu.memory_space<vmem>>, %arg9: memref<1x128xf32, #tpu.memory_space<vmem>>, %arg10: memref<8x128xf32, #tpu.memory_space<vmem>>, %arg11: memref<64x128xf32, #tpu.memory_space<vmem>>, %arg12: memref<64x32xf32, #tpu.memory_space<vmem>>, %arg13: memref<8x32xf32, #tpu.memory_space<vmem>>, %arg14: memref<8x32xf32, #tpu.memory_space<vmem>>) attributes {dimension_semantics = [#tpu.dimension_semantics<arbitrary>], iteration_bounds = array<i64: 1>, scalar_prefetch = 0 : i64, scratch_operands = 4 : i64, tpu.core_type = #tpu.core_type<tc>, window_params = [{pipeline_mode = #tpu.pipeline_mode<synchronous>, transform_indices = @transform_0, window_bounds = array<i64: 64, 16>}, {pipeline_mode = #tpu.pipeline_mode<synchronous>, transform_indices = @transform_1, window_bounds = array<i64: 16, 128>}, {pipeline_mode = #tpu.pipeline_mode<synchronous>, transform_indices = @transform_2, window_bounds = array<i64: 32, 128>}, {pipeline_mode = #tpu.pipeline_mode<synchronous>, transform_indices = @transform_3, window_bounds = array<i64: 1, 128>}, {pipeline_mode = #tpu.pipeline_mode<synchronous>, transform_indices = @transform_4, window_bounds = array<i64: 32, 128>}, {pipeline_mode = #tpu.pipeline_mode<synchronous>, transform_indices = @transform_5, window_bounds = array<i64: 32, 128>}, {pipeline_mode = #tpu.pipeline_mode<synchronous>, transform_indices = @transform_6, window_bounds = array<i64: 1, 128>}, {pipeline_mode = #tpu.pipeline_mode<synchronous>, transform_indices = @transform_7, window_bounds = array<i64: 32, 128>}, {pipeline_mode = #tpu.pipeline_mode<synchronous>, transform_indices = @transform_8, window_bounds = array<i64: 1, 128>}, {pipeline_mode = #tpu.pipeline_mode<synchronous>, transform_indices = @transform_9, window_bounds = array<i64: 8, 128>}]} {
    %c0 = arith.constant 0 : index
    %c0_0 = arith.constant 0 : index
    %0 = vector.load %arg1[%c0, %c0_0] : memref<64x16xf32, #tpu.memory_space<vmem>>, vector<64x16xf32>
    %c0_1 = arith.constant 0 : index
    %c0_2 = arith.constant 0 : index
    %1 = vector.load %arg2[%c0_1, %c0_2] : memref<16x128xf32, #tpu.memory_space<vmem>>, vector<16x128xf32>
    %cst = arith.constant dense<0.000000e+00> : vector<64x128xf32>
    %2 = tpu.matmul %0, %1, %cst {dimension_numbers = #tpu.dot_dimension_numbers<[1], [0], [0], [1], [0, 0, 1, 1], [], []>} : vector<64x16xf32>, vector<16x128xf32>, vector<64x128xf32> -> vector<64x128xf32>
    %c0_3 = arith.constant 0 : index
    %c0_4 = arith.constant 0 : index
    %3 = vector.load %arg4[%c0_3, %c0_4] : memref<1x128xf32, #tpu.memory_space<vmem>>, vector<1x128xf32>
    %4 = vector.broadcast %3 : vector<1x128xf32> to vector<64x128xf32>
    %5 = arith.addf %2, %4 : vector<64x128xf32>
    %c0_5 = arith.constant 0 : index
    %c0_6 = arith.constant 0 : index
    %6 = vector.load %arg11[%c0_5, %c0_6] : memref<64x128xf32, #tpu.memory_space<vmem>>, vector<64x128xf32>
    tpu.vector_store %arg11[%c0_5, %c0_6], %5 {strides = array<i32>} : memref<64x128xf32, #tpu.memory_space<vmem>>, vector<64x128xf32>,
    %cst_7 = arith.constant 0.000000e+00 : f32
    %7 = vector.broadcast %cst_7 : f32 to vector<8x32xf32>
    %c0_8 = arith.constant 0 : index
    %c0_9 = arith.constant 0 : index
    %8 = vector.load %arg13[%c0_8, %c0_9] : memref<8x32xf32, #tpu.memory_space<vmem>>, vector<8x32xf32>
    tpu.vector_store %arg13[%c0_8, %c0_9], %7 {strides = array<i32>} : memref<8x32xf32, #tpu.memory_space<vmem>>, vector<8x32xf32>,
    %cst_10 = arith.constant 0.000000e+00 : f32
    %9 = vector.broadcast %cst_10 : f32 to vector<8x32xf32>
    %c0_11 = arith.constant 0 : index
    %c0_12 = arith.constant 0 : index
    %10 = vector.load %arg14[%c0_11, %c0_12] : memref<8x32xf32, #tpu.memory_space<vmem>>, vector<8x32xf32>
    tpu.vector_store %arg14[%c0_11, %c0_12], %9 {strides = array<i32>} : memref<8x32xf32, #tpu.memory_space<vmem>>, vector<8x32xf32>,
    %c0_13 = arith.constant 0 : index
    %c0_14 = arith.constant 0 : index
    %11 = vector.load %arg3[%c0_13, %c0_14] : memref<32x128xf32, #tpu.memory_space<vmem>>, vector<32x128xf32>
    %c0_i32 = arith.constant 0 : i32
    %c8_i32 = arith.constant 8 : i32
    %12 = arith.muli %c0_i32, %c8_i32 : i32
    %13 = tpu.assume_multiple %12, 8 : i32
    %14 = arith.index_cast %13 : i32 to index
    %c0_15 = arith.constant 0 : index
    %15 = vector.load %arg11[%14, %c0_15] : memref<64x128xf32, #tpu.memory_space<vmem>>, vector<8x128xf32>
    %c0_16 = arith.constant 0 : index
    %c0_17 = arith.constant 0 : index
    %16 = vector.load %arg13[%c0_16, %c0_17] : memref<8x32xf32, #tpu.memory_space<vmem>>, vector<8x32xf32>
    %cst_18 = arith.constant dense<0.000000e+00> : vector<8x128xf32>
    %17 = tpu.matmul %16, %11, %cst_18 {dimension_numbers = #tpu.dot_dimension_numbers<[1], [0], [0], [1], [0, 0, 1, 1], [], []>} : vector<8x32xf32>, vector<32x128xf32>, vector<8x128xf32> -> vector<8x128xf32>
    %18 = arith.addf %15, %17 : vector<8x128xf32>
    %19 = vector.extract_strided_slice %18 {offsets = [0, 0], sizes = [8, 32], strides = [1, 1]} : vector<8x128xf32> to vector<8x32xf32>
    %20 = arith.negf %19 : vector<8x32xf32>
    %21 = math.exp %20 : vector<8x32xf32>
    %cst_19 = arith.constant 1.000000e+00 : f32
    %22 = vector.broadcast %cst_19 : f32 to vector<8x32xf32>
    %23 = arith.addf %22, %21 : vector<8x32xf32>
    %24 = arith.divf %22, %23 : vector<8x32xf32>
    %25 = vector.extract_strided_slice %18 {offsets = [0, 32], sizes = [8, 32], strides = [1, 1]} : vector<8x128xf32> to vector<8x32xf32>
    %26 = arith.negf %25 : vector<8x32xf32>
    %27 = math.exp %26 : vector<8x32xf32>
    %cst_20 = arith.constant 1.000000e+00 : f32
    %28 = vector.broadcast %cst_20 : f32 to vector<8x32xf32>
    %29 = arith.addf %28, %27 : vector<8x32xf32>
    %30 = arith.divf %28, %29 : vector<8x32xf32>
    %31 = vector.extract_strided_slice %18 {offsets = [0, 64], sizes = [8, 32], strides = [1, 1]} : vector<8x128xf32> to vector<8x32xf32>
    %32 = math.tanh %31 : vector<8x32xf32>
    %33 = vector.extract_strided_slice %18 {offsets = [0, 96], sizes = [8, 32], strides = [1, 1]} : vector<8x128xf32> to vector<8x32xf32>
    %34 = arith.negf %33 : vector<8x32xf32>
    %35 = math.exp %34 : vector<8x32xf32>
    %cst_21 = arith.constant 1.000000e+00 : f32
    %36 = vector.broadcast %cst_21 : f32 to vector<8x32xf32>
    %37 = arith.addf %36, %35 : vector<8x32xf32>
    %38 = arith.divf %36, %37 : vector<8x32xf32>
    %c0_22 = arith.constant 0 : index
    %c0_23 = arith.constant 0 : index
    %39 = vector.load %arg14[%c0_22, %c0_23] : memref<8x32xf32, #tpu.memory_space<vmem>>, vector<8x32xf32>
    %40 = arith.mulf %30, %39 : vector<8x32xf32>
    %41 = arith.mulf %24, %32 : vector<8x32xf32>
    %42 = arith.addf %40, %41 : vector<8x32xf32>
    %43 = math.tanh %42 : vector<8x32xf32>
    %44 = arith.mulf %38, %43 : vector<8x32xf32>
    %c0_24 = arith.constant 0 : index
    %c0_25 = arith.constant 0 : index
    %45 = vector.load %arg14[%c0_24, %c0_25] : memref<8x32xf32, #tpu.memory_space<vmem>>, vector<8x32xf32>
    tpu.vector_store %arg14[%c0_24, %c0_25], %42 {strides = array<i32>} : memref<8x32xf32, #tpu.memory_space<vmem>>, vector<8x32xf32>,
    %c0_26 = arith.constant 0 : index
    %c0_27 = arith.constant 0 : index
    %46 = vector.load %arg13[%c0_26, %c0_27] : memref<8x32xf32, #tpu.memory_space<vmem>>, vector<8x32xf32>
    tpu.vector_store %arg13[%c0_26, %c0_27], %44 {strides = array<i32>} : memref<8x32xf32, #tpu.memory_space<vmem>>, vector<8x32xf32>,
    %47 = arith.index_cast %13 : i32 to index
    %c0_28 = arith.constant 0 : index
    %48 = vector.load %arg12[%47, %c0_28] : memref<64x32xf32, #tpu.memory_space<vmem>>, vector<8x32xf32>
    tpu.vector_store %arg12[%47, %c0_28], %44 {strides = array<i32>} : memref<64x32xf32, #tpu.memory_space<vmem>>, vector<8x32xf32>,
    %c1_i32 = arith.constant 1 : i32
    %c8_i32_29 = arith.constant 8 : i32
    %49 = arith.muli %c1_i32, %c8_i32_29 : i32
    %50 = tpu.assume_multiple %49, 8 : i32
    %51 = arith.index_cast %50 : i32 to index
    %c0_30 = arith.constant 0 : index
    %52 = vector.load %arg11[%51, %c0_30] : memref<64x128xf32, #tpu.memory_space<vmem>>, vector<8x128xf32>
    %c0_31 = arith.constant 0 : index
    %c0_32 = arith.constant 0 : index
    %53 = vector.load %arg13[%c0_31, %c0_32] : memref<8x32xf32, #tpu.memory_space<vmem>>, vector<8x32xf32>
    %cst_33 = arith.constant dense<0.000000e+00> : vector<8x128xf32>
    %54 = tpu.matmul %53, %11, %cst_33 {dimension_numbers = #tpu.dot_dimension_numbers<[1], [0], [0], [1], [0, 0, 1, 1], [], []>} : vector<8x32xf32>, vector<32x128xf32>, vector<8x128xf32> -> vector<8x128xf32>
    %55 = arith.addf %52, %54 : vector<8x128xf32>
    %56 = vector.extract_strided_slice %55 {offsets = [0, 0], sizes = [8, 32], strides = [1, 1]} : vector<8x128xf32> to vector<8x32xf32>
    %57 = arith.negf %56 : vector<8x32xf32>
    %58 = math.exp %57 : vector<8x32xf32>
    %cst_34 = arith.constant 1.000000e+00 : f32
    %59 = vector.broadcast %cst_34 : f32 to vector<8x32xf32>
    %60 = arith.addf %59, %58 : vector<8x32xf32>
    %61 = arith.divf %59, %60 : vector<8x32xf32>
    %62 = vector.extract_strided_slice %55 {offsets = [0, 32], sizes = [8, 32], strides = [1, 1]} : vector<8x128xf32> to vector<8x32xf32>
    %63 = arith.negf %62 : vector<8x32xf32>
    %64 = math.exp %63 : vector<8x32xf32>
    %cst_35 = arith.constant 1.000000e+00 : f32
    %65 = vector.broadcast %cst_35 : f32 to vector<8x32xf32>
    %66 = arith.addf %65, %64 : vector<8x32xf32>
    %67 = arith.divf %65, %66 : vector<8x32xf32>
    %68 = vector.extract_strided_slice %55 {offsets = [0, 64], sizes = [8, 32], strides = [1, 1]} : vector<8x128xf32> to vector<8x32xf32>
    %69 = math.tanh %68 : vector<8x32xf32>
    %70 = vector.extract_strided_slice %55 {offsets = [0, 96], sizes = [8, 32], strides = [1, 1]} : vector<8x128xf32> to vector<8x32xf32>
    %71 = arith.negf %70 : vector<8x32xf32>
    %72 = math.exp %71 : vector<8x32xf32>
    %cst_36 = arith.constant 1.000000e+00 : f32
    %73 = vector.broadcast %cst_36 : f32 to vector<8x32xf32>
    %74 = arith.addf %73, %72 : vector<8x32xf32>
    %75 = arith.divf %73, %74 : vector<8x32xf32>
    %c0_37 = arith.constant 0 : index
    %c0_38 = arith.constant 0 : index
    %76 = vector.load %arg14[%c0_37, %c0_38] : memref<8x32xf32, #tpu.memory_space<vmem>>, vector<8x32xf32>
    %77 = arith.mulf %67, %76 : vector<8x32xf32>
    %78 = arith.mulf %61, %69 : vector<8x32xf32>
    %79 = arith.addf %77, %78 : vector<8x32xf32>
    %80 = math.tanh %79 : vector<8x32xf32>
    %81 = arith.mulf %75, %80 : vector<8x32xf32>
    %c0_39 = arith.constant 0 : index
    %c0_40 = arith.constant 0 : index
    %82 = vector.load %arg14[%c0_39, %c0_40] : memref<8x32xf32, #tpu.memory_space<vmem>>, vector<8x32xf32>
    tpu.vector_store %arg14[%c0_39, %c0_40], %79 {strides = array<i32>} : memref<8x32xf32, #tpu.memory_space<vmem>>, vector<8x32xf32>,
    %c0_41 = arith.constant 0 : index
    %c0_42 = arith.constant 0 : index
    %83 = vector.load %arg13[%c0_41, %c0_42] : memref<8x32xf32, #tpu.memory_space<vmem>>, vector<8x32xf32>
    tpu.vector_store %arg13[%c0_41, %c0_42], %81 {strides = array<i32>} : memref<8x32xf32, #tpu.memory_space<vmem>>, vector<8x32xf32>,
    %84 = arith.index_cast %50 : i32 to index
    %c0_43 = arith.constant 0 : index
    %85 = vector.load %arg12[%84, %c0_43] : memref<64x32xf32, #tpu.memory_space<vmem>>, vector<8x32xf32>
    tpu.vector_store %arg12[%84, %c0_43], %81 {strides = array<i32>} : memref<64x32xf32, #tpu.memory_space<vmem>>, vector<8x32xf32>,
    %c2_i32 = arith.constant 2 : i32
    %c8_i32_44 = arith.constant 8 : i32
    %86 = arith.muli %c2_i32, %c8_i32_44 : i32
    %87 = tpu.assume_multiple %86, 8 : i32
    %88 = arith.index_cast %87 : i32 to index
    %c0_45 = arith.constant 0 : index
    %89 = vector.load %arg11[%88, %c0_45] : memref<64x128xf32, #tpu.memory_space<vmem>>, vector<8x128xf32>
    %c0_46 = arith.constant 0 : index
    %c0_47 = arith.constant 0 : index
    %90 = vector.load %arg13[%c0_46, %c0_47] : memref<8x32xf32, #tpu.memory_space<vmem>>, vector<8x32xf32>
    %cst_48 = arith.constant dense<0.000000e+00> : vector<8x128xf32>
    %91 = tpu.matmul %90, %11, %cst_48 {dimension_numbers = #tpu.dot_dimension_numbers<[1], [0], [0], [1], [0, 0, 1, 1], [], []>} : vector<8x32xf32>, vector<32x128xf32>, vector<8x128xf32> -> vector<8x128xf32>
    %92 = arith.addf %89, %91 : vector<8x128xf32>
    %93 = vector.extract_strided_slice %92 {offsets = [0, 0], sizes = [8, 32], strides = [1, 1]} : vector<8x128xf32> to vector<8x32xf32>
    %94 = arith.negf %93 : vector<8x32xf32>
    %95 = math.exp %94 : vector<8x32xf32>
    %cst_49 = arith.constant 1.000000e+00 : f32
    %96 = vector.broadcast %cst_49 : f32 to vector<8x32xf32>
    %97 = arith.addf %96, %95 : vector<8x32xf32>
    %98 = arith.divf %96, %97 : vector<8x32xf32>
    %99 = vector.extract_strided_slice %92 {offsets = [0, 32], sizes = [8, 32], strides = [1, 1]} : vector<8x128xf32> to vector<8x32xf32>
    %100 = arith.negf %99 : vector<8x32xf32>
    %101 = math.exp %100 : vector<8x32xf32>
    %cst_50 = arith.constant 1.000000e+00 : f32
    %102 = vector.broadcast %cst_50 : f32 to vector<8x32xf32>
    %103 = arith.addf %102, %101 : vector<8x32xf32>
    %104 = arith.divf %102, %103 : vector<8x32xf32>
    %105 = vector.extract_strided_slice %92 {offsets = [0, 64], sizes = [8, 32], strides = [1, 1]} : vector<8x128xf32> to vector<8x32xf32>
    %106 = math.tanh %105 : vector<8x32xf32>
    %107 = vector.extract_strided_slice %92 {offsets = [0, 96], sizes = [8, 32], strides = [1, 1]} : vector<8x128xf32> to vector<8x32xf32>
    %108 = arith.negf %107 : vector<8x32xf32>
    %109 = math.exp %108 : vector<8x32xf32>
    %cst_51 = arith.constant 1.000000e+00 : f32
    %110 = vector.broadcast %cst_51 : f32 to vector<8x32xf32>
    %111 = arith.addf %110, %109 : vector<8x32xf32>
    %112 = arith.divf %110, %111 : vector<8x32xf32>
    %c0_52 = arith.constant 0 : index
    %c0_53 = arith.constant 0 : index
    %113 = vector.load %arg14[%c0_52, %c0_53] : memref<8x32xf32, #tpu.memory_space<vmem>>, vector<8x32xf32>
    %114 = arith.mulf %104, %113 : vector<8x32xf32>
    %115 = arith.mulf %98, %106 : vector<8x32xf32>
    %116 = arith.addf %114, %115 : vector<8x32xf32>
    %117 = math.tanh %116 : vector<8x32xf32>
    %118 = arith.mulf %112, %117 : vector<8x32xf32>
    %c0_54 = arith.constant 0 : index
    %c0_55 = arith.constant 0 : index
    %119 = vector.load %arg14[%c0_54, %c0_55] : memref<8x32xf32, #tpu.memory_space<vmem>>, vector<8x32xf32>
    tpu.vector_store %arg14[%c0_54, %c0_55], %116 {strides = array<i32>} : memref<8x32xf32, #tpu.memory_space<vmem>>, vector<8x32xf32>,
    %c0_56 = arith.constant 0 : index
    %c0_57 = arith.constant 0 : index
    %120 = vector.load %arg13[%c0_56, %c0_57] : memref<8x32xf32, #tpu.memory_space<vmem>>, vector<8x32xf32>
    tpu.vector_store %arg13[%c0_56, %c0_57], %118 {strides = array<i32>} : memref<8x32xf32, #tpu.memory_space<vmem>>, vector<8x32xf32>,
    %121 = arith.index_cast %87 : i32 to index
    %c0_58 = arith.constant 0 : index
    %122 = vector.load %arg12[%121, %c0_58] : memref<64x32xf32, #tpu.memory_space<vmem>>, vector<8x32xf32>
    tpu.vector_store %arg12[%121, %c0_58], %118 {strides = array<i32>} : memref<64x32xf32, #tpu.memory_space<vmem>>, vector<8x32xf32>,
    %c3_i32 = arith.constant 3 : i32
    %c8_i32_59 = arith.constant 8 : i32
    %123 = arith.muli %c3_i32, %c8_i32_59 : i32
    %124 = tpu.assume_multiple %123, 8 : i32
    %125 = arith.index_cast %124 : i32 to index
    %c0_60 = arith.constant 0 : index
    %126 = vector.load %arg11[%125, %c0_60] : memref<64x128xf32, #tpu.memory_space<vmem>>, vector<8x128xf32>
    %c0_61 = arith.constant 0 : index
    %c0_62 = arith.constant 0 : index
    %127 = vector.load %arg13[%c0_61, %c0_62] : memref<8x32xf32, #tpu.memory_space<vmem>>, vector<8x32xf32>
    %cst_63 = arith.constant dense<0.000000e+00> : vector<8x128xf32>
    %128 = tpu.matmul %127, %11, %cst_63 {dimension_numbers = #tpu.dot_dimension_numbers<[1], [0], [0], [1], [0, 0, 1, 1], [], []>} : vector<8x32xf32>, vector<32x128xf32>, vector<8x128xf32> -> vector<8x128xf32>
    %129 = arith.addf %126, %128 : vector<8x128xf32>
    %130 = vector.extract_strided_slice %129 {offsets = [0, 0], sizes = [8, 32], strides = [1, 1]} : vector<8x128xf32> to vector<8x32xf32>
    %131 = arith.negf %130 : vector<8x32xf32>
    %132 = math.exp %131 : vector<8x32xf32>
    %cst_64 = arith.constant 1.000000e+00 : f32
    %133 = vector.broadcast %cst_64 : f32 to vector<8x32xf32>
    %134 = arith.addf %133, %132 : vector<8x32xf32>
    %135 = arith.divf %133, %134 : vector<8x32xf32>
    %136 = vector.extract_strided_slice %129 {offsets = [0, 32], sizes = [8, 32], strides = [1, 1]} : vector<8x128xf32> to vector<8x32xf32>
    %137 = arith.negf %136 : vector<8x32xf32>
    %138 = math.exp %137 : vector<8x32xf32>
    %cst_65 = arith.constant 1.000000e+00 : f32
    %139 = vector.broadcast %cst_65 : f32 to vector<8x32xf32>
    %140 = arith.addf %139, %138 : vector<8x32xf32>
    %141 = arith.divf %139, %140 : vector<8x32xf32>
    %142 = vector.extract_strided_slice %129 {offsets = [0, 64], sizes = [8, 32], strides = [1, 1]} : vector<8x128xf32> to vector<8x32xf32>
    %143 = math.tanh %142 : vector<8x32xf32>
    %144 = vector.extract_strided_slice %129 {offsets = [0, 96], sizes = [8, 32], strides = [1, 1]} : vector<8x128xf32> to vector<8x32xf32>
    %145 = arith.negf %144 : vector<8x32xf32>
    %146 = math.exp %145 : vector<8x32xf32>
    %cst_66 = arith.constant 1.000000e+00 : f32
    %147 = vector.broadcast %cst_66 : f32 to vector<8x32xf32>
    %148 = arith.addf %147, %146 : vector<8x32xf32>
    %149 = arith.divf %147, %148 : vector<8x32xf32>
    %c0_67 = arith.constant 0 : index
    %c0_68 = arith.constant 0 : index
    %150 = vector.load %arg14[%c0_67, %c0_68] : memref<8x32xf32, #tpu.memory_space<vmem>>, vector<8x32xf32>
    %151 = arith.mulf %141, %150 : vector<8x32xf32>
    %152 = arith.mulf %135, %143 : vector<8x32xf32>
    %153 = arith.addf %151, %152 : vector<8x32xf32>
    %154 = math.tanh %153 : vector<8x32xf32>
    %155 = arith.mulf %149, %154 : vector<8x32xf32>
    %c0_69 = arith.constant 0 : index
    %c0_70 = arith.constant 0 : index
    %156 = vector.load %arg14[%c0_69, %c0_70] : memref<8x32xf32, #tpu.memory_space<vmem>>, vector<8x32xf32>
    tpu.vector_store %arg14[%c0_69, %c0_70], %153 {strides = array<i32>} : memref<8x32xf32, #tpu.memory_space<vmem>>, vector<8x32xf32>,
    %c0_71 = arith.constant 0 : index
    %c0_72 = arith.constant 0 : index
    %157 = vector.load %arg13[%c0_71, %c0_72] : memref<8x32xf32, #tpu.memory_space<vmem>>, vector<8x32xf32>
    tpu.vector_store %arg13[%c0_71, %c0_72], %155 {strides = array<i32>} : memref<8x32xf32, #tpu.memory_space<vmem>>, vector<8x32xf32>,
    %158 = arith.index_cast %124 : i32 to index
    %c0_73 = arith.constant 0 : index
    %159 = vector.load %arg12[%158, %c0_73] : memref<64x32xf32, #tpu.memory_space<vmem>>, vector<8x32xf32>
    tpu.vector_store %arg12[%158, %c0_73], %155 {strides = array<i32>} : memref<64x32xf32, #tpu.memory_space<vmem>>, vector<8x32xf32>,
    %c4_i32 = arith.constant 4 : i32
    %c8_i32_74 = arith.constant 8 : i32
    %160 = arith.muli %c4_i32, %c8_i32_74 : i32
    %161 = tpu.assume_multiple %160, 8 : i32
    %162 = arith.index_cast %161 : i32 to index
    %c0_75 = arith.constant 0 : index
    %163 = vector.load %arg11[%162, %c0_75] : memref<64x128xf32, #tpu.memory_space<vmem>>, vector<8x128xf32>
    %c0_76 = arith.constant 0 : index
    %c0_77 = arith.constant 0 : index
    %164 = vector.load %arg13[%c0_76, %c0_77] : memref<8x32xf32, #tpu.memory_space<vmem>>, vector<8x32xf32>
    %cst_78 = arith.constant dense<0.000000e+00> : vector<8x128xf32>
    %165 = tpu.matmul %164, %11, %cst_78 {dimension_numbers = #tpu.dot_dimension_numbers<[1], [0], [0], [1], [0, 0, 1, 1], [], []>} : vector<8x32xf32>, vector<32x128xf32>, vector<8x128xf32> -> vector<8x128xf32>
    %166 = arith.addf %163, %165 : vector<8x128xf32>
    %167 = vector.extract_strided_slice %166 {offsets = [0, 0], sizes = [8, 32], strides = [1, 1]} : vector<8x128xf32> to vector<8x32xf32>
    %168 = arith.negf %167 : vector<8x32xf32>
    %169 = math.exp %168 : vector<8x32xf32>
    %cst_79 = arith.constant 1.000000e+00 : f32
    %170 = vector.broadcast %cst_79 : f32 to vector<8x32xf32>
    %171 = arith.addf %170, %169 : vector<8x32xf32>
    %172 = arith.divf %170, %171 : vector<8x32xf32>
    %173 = vector.extract_strided_slice %166 {offsets = [0, 32], sizes = [8, 32], strides = [1, 1]} : vector<8x128xf32> to vector<8x32xf32>
    %174 = arith.negf %173 : vector<8x32xf32>
    %175 = math.exp %174 : vector<8x32xf32>
    %cst_80 = arith.constant 1.000000e+00 : f32
    %176 = vector.broadcast %cst_80 : f32 to vector<8x32xf32>
    %177 = arith.addf %176, %175 : vector<8x32xf32>
    %178 = arith.divf %176, %177 : vector<8x32xf32>
    %179 = vector.extract_strided_slice %166 {offsets = [0, 64], sizes = [8, 32], strides = [1, 1]} : vector<8x128xf32> to vector<8x32xf32>
    %180 = math.tanh %179 : vector<8x32xf32>
    %181 = vector.extract_strided_slice %166 {offsets = [0, 96], sizes = [8, 32], strides = [1, 1]} : vector<8x128xf32> to vector<8x32xf32>
    %182 = arith.negf %181 : vector<8x32xf32>
    %183 = math.exp %182 : vector<8x32xf32>
    %cst_81 = arith.constant 1.000000e+00 : f32
    %184 = vector.broadcast %cst_81 : f32 to vector<8x32xf32>
    %185 = arith.addf %184, %183 : vector<8x32xf32>
    %186 = arith.divf %184, %185 : vector<8x32xf32>
    %c0_82 = arith.constant 0 : index
    %c0_83 = arith.constant 0 : index
    %187 = vector.load %arg14[%c0_82, %c0_83] : memref<8x32xf32, #tpu.memory_space<vmem>>, vector<8x32xf32>
    %188 = arith.mulf %178, %187 : vector<8x32xf32>
    %189 = arith.mulf %172, %180 : vector<8x32xf32>
    %190 = arith.addf %188, %189 : vector<8x32xf32>
    %191 = math.tanh %190 : vector<8x32xf32>
    %192 = arith.mulf %186, %191 : vector<8x32xf32>
    %c0_84 = arith.constant 0 : index
    %c0_85 = arith.constant 0 : index
    %193 = vector.load %arg14[%c0_84, %c0_85] : memref<8x32xf32, #tpu.memory_space<vmem>>, vector<8x32xf32>
    tpu.vector_store %arg14[%c0_84, %c0_85], %190 {strides = array<i32>} : memref<8x32xf32, #tpu.memory_space<vmem>>, vector<8x32xf32>,
    %c0_86 = arith.constant 0 : index
    %c0_87 = arith.constant 0 : index
    %194 = vector.load %arg13[%c0_86, %c0_87] : memref<8x32xf32, #tpu.memory_space<vmem>>, vector<8x32xf32>
    tpu.vector_store %arg13[%c0_86, %c0_87], %192 {strides = array<i32>} : memref<8x32xf32, #tpu.memory_space<vmem>>, vector<8x32xf32>,
    %195 = arith.index_cast %161 : i32 to index
    %c0_88 = arith.constant 0 : index
    %196 = vector.load %arg12[%195, %c0_88] : memref<64x32xf32, #tpu.memory_space<vmem>>, vector<8x32xf32>
    tpu.vector_store %arg12[%195, %c0_88], %192 {strides = array<i32>} : memref<64x32xf32, #tpu.memory_space<vmem>>, vector<8x32xf32>,
    %c5_i32 = arith.constant 5 : i32
    %c8_i32_89 = arith.constant 8 : i32
    %197 = arith.muli %c5_i32, %c8_i32_89 : i32
    %198 = tpu.assume_multiple %197, 8 : i32
    %199 = arith.index_cast %198 : i32 to index
    %c0_90 = arith.constant 0 : index
    %200 = vector.load %arg11[%199, %c0_90] : memref<64x128xf32, #tpu.memory_space<vmem>>, vector<8x128xf32>
    %c0_91 = arith.constant 0 : index
    %c0_92 = arith.constant 0 : index
    %201 = vector.load %arg13[%c0_91, %c0_92] : memref<8x32xf32, #tpu.memory_space<vmem>>, vector<8x32xf32>
    %cst_93 = arith.constant dense<0.000000e+00> : vector<8x128xf32>
    %202 = tpu.matmul %201, %11, %cst_93 {dimension_numbers = #tpu.dot_dimension_numbers<[1], [0], [0], [1], [0, 0, 1, 1], [], []>} : vector<8x32xf32>, vector<32x128xf32>, vector<8x128xf32> -> vector<8x128xf32>
    %203 = arith.addf %200, %202 : vector<8x128xf32>
    %204 = vector.extract_strided_slice %203 {offsets = [0, 0], sizes = [8, 32], strides = [1, 1]} : vector<8x128xf32> to vector<8x32xf32>
    %205 = arith.negf %204 : vector<8x32xf32>
    %206 = math.exp %205 : vector<8x32xf32>
    %cst_94 = arith.constant 1.000000e+00 : f32
    %207 = vector.broadcast %cst_94 : f32 to vector<8x32xf32>
    %208 = arith.addf %207, %206 : vector<8x32xf32>
    %209 = arith.divf %207, %208 : vector<8x32xf32>
    %210 = vector.extract_strided_slice %203 {offsets = [0, 32], sizes = [8, 32], strides = [1, 1]} : vector<8x128xf32> to vector<8x32xf32>
    %211 = arith.negf %210 : vector<8x32xf32>
    %212 = math.exp %211 : vector<8x32xf32>
    %cst_95 = arith.constant 1.000000e+00 : f32
    %213 = vector.broadcast %cst_95 : f32 to vector<8x32xf32>
    %214 = arith.addf %213, %212 : vector<8x32xf32>
    %215 = arith.divf %213, %214 : vector<8x32xf32>
    %216 = vector.extract_strided_slice %203 {offsets = [0, 64], sizes = [8, 32], strides = [1, 1]} : vector<8x128xf32> to vector<8x32xf32>
    %217 = math.tanh %216 : vector<8x32xf32>
    %218 = vector.extract_strided_slice %203 {offsets = [0, 96], sizes = [8, 32], strides = [1, 1]} : vector<8x128xf32> to vector<8x32xf32>
    %219 = arith.negf %218 : vector<8x32xf32>
    %220 = math.exp %219 : vector<8x32xf32>
    %cst_96 = arith.constant 1.000000e+00 : f32
    %221 = vector.broadcast %cst_96 : f32 to vector<8x32xf32>
    %222 = arith.addf %221, %220 : vector<8x32xf32>
    %223 = arith.divf %221, %222 : vector<8x32xf32>
    %c0_97 = arith.constant 0 : index
    %c0_98 = arith.constant 0 : index
    %224 = vector.load %arg14[%c0_97, %c0_98] : memref<8x32xf32, #tpu.memory_space<vmem>>, vector<8x32xf32>
    %225 = arith.mulf %215, %224 : vector<8x32xf32>
    %226 = arith.mulf %209, %217 : vector<8x32xf32>
    %227 = arith.addf %225, %226 : vector<8x32xf32>
    %228 = math.tanh %227 : vector<8x32xf32>
    %229 = arith.mulf %223, %228 : vector<8x32xf32>
    %c0_99 = arith.constant 0 : index
    %c0_100 = arith.constant 0 : index
    %230 = vector.load %arg14[%c0_99, %c0_100] : memref<8x32xf32, #tpu.memory_space<vmem>>, vector<8x32xf32>
    tpu.vector_store %arg14[%c0_99, %c0_100], %227 {strides = array<i32>} : memref<8x32xf32, #tpu.memory_space<vmem>>, vector<8x32xf32>,
    %c0_101 = arith.constant 0 : index
    %c0_102 = arith.constant 0 : index
    %231 = vector.load %arg13[%c0_101, %c0_102] : memref<8x32xf32, #tpu.memory_space<vmem>>, vector<8x32xf32>
    tpu.vector_store %arg13[%c0_101, %c0_102], %229 {strides = array<i32>} : memref<8x32xf32, #tpu.memory_space<vmem>>, vector<8x32xf32>,
    %232 = arith.index_cast %198 : i32 to index
    %c0_103 = arith.constant 0 : index
    %233 = vector.load %arg12[%232, %c0_103] : memref<64x32xf32, #tpu.memory_space<vmem>>, vector<8x32xf32>
    tpu.vector_store %arg12[%232, %c0_103], %229 {strides = array<i32>} : memref<64x32xf32, #tpu.memory_space<vmem>>, vector<8x32xf32>,
    %c6_i32 = arith.constant 6 : i32
    %c8_i32_104 = arith.constant 8 : i32
    %234 = arith.muli %c6_i32, %c8_i32_104 : i32
    %235 = tpu.assume_multiple %234, 8 : i32
    %236 = arith.index_cast %235 : i32 to index
    %c0_105 = arith.constant 0 : index
    %237 = vector.load %arg11[%236, %c0_105] : memref<64x128xf32, #tpu.memory_space<vmem>>, vector<8x128xf32>
    %c0_106 = arith.constant 0 : index
    %c0_107 = arith.constant 0 : index
    %238 = vector.load %arg13[%c0_106, %c0_107] : memref<8x32xf32, #tpu.memory_space<vmem>>, vector<8x32xf32>
    %cst_108 = arith.constant dense<0.000000e+00> : vector<8x128xf32>
    %239 = tpu.matmul %238, %11, %cst_108 {dimension_numbers = #tpu.dot_dimension_numbers<[1], [0], [0], [1], [0, 0, 1, 1], [], []>} : vector<8x32xf32>, vector<32x128xf32>, vector<8x128xf32> -> vector<8x128xf32>
    %240 = arith.addf %237, %239 : vector<8x128xf32>
    %241 = vector.extract_strided_slice %240 {offsets = [0, 0], sizes = [8, 32], strides = [1, 1]} : vector<8x128xf32> to vector<8x32xf32>
    %242 = arith.negf %241 : vector<8x32xf32>
    %243 = math.exp %242 : vector<8x32xf32>
    %cst_109 = arith.constant 1.000000e+00 : f32
    %244 = vector.broadcast %cst_109 : f32 to vector<8x32xf32>
    %245 = arith.addf %244, %243 : vector<8x32xf32>
    %246 = arith.divf %244, %245 : vector<8x32xf32>
    %247 = vector.extract_strided_slice %240 {offsets = [0, 32], sizes = [8, 32], strides = [1, 1]} : vector<8x128xf32> to vector<8x32xf32>
    %248 = arith.negf %247 : vector<8x32xf32>
    %249 = math.exp %248 : vector<8x32xf32>
    %cst_110 = arith.constant 1.000000e+00 : f32
    %250 = vector.broadcast %cst_110 : f32 to vector<8x32xf32>
    %251 = arith.addf %250, %249 : vector<8x32xf32>
    %252 = arith.divf %250, %251 : vector<8x32xf32>
    %253 = vector.extract_strided_slice %240 {offsets = [0, 64], sizes = [8, 32], strides = [1, 1]} : vector<8x128xf32> to vector<8x32xf32>
    %254 = math.tanh %253 : vector<8x32xf32>
    %255 = vector.extract_strided_slice %240 {offsets = [0, 96], sizes = [8, 32], strides = [1, 1]} : vector<8x128xf32> to vector<8x32xf32>
    %256 = arith.negf %255 : vector<8x32xf32>
    %257 = math.exp %256 : vector<8x32xf32>
    %cst_111 = arith.constant 1.000000e+00 : f32
    %258 = vector.broadcast %cst_111 : f32 to vector<8x32xf32>
    %259 = arith.addf %258, %257 : vector<8x32xf32>
    %260 = arith.divf %258, %259 : vector<8x32xf32>
    %c0_112 = arith.constant 0 : index
    %c0_113 = arith.constant 0 : index
    %261 = vector.load %arg14[%c0_112, %c0_113] : memref<8x32xf32, #tpu.memory_space<vmem>>, vector<8x32xf32>
    %262 = arith.mulf %252, %261 : vector<8x32xf32>
    %263 = arith.mulf %246, %254 : vector<8x32xf32>
    %264 = arith.addf %262, %263 : vector<8x32xf32>
    %265 = math.tanh %264 : vector<8x32xf32>
    %266 = arith.mulf %260, %265 : vector<8x32xf32>
    %c0_114 = arith.constant 0 : index
    %c0_115 = arith.constant 0 : index
    %267 = vector.load %arg14[%c0_114, %c0_115] : memref<8x32xf32, #tpu.memory_space<vmem>>, vector<8x32xf32>
    tpu.vector_store %arg14[%c0_114, %c0_115], %264 {strides = array<i32>} : memref<8x32xf32, #tpu.memory_space<vmem>>, vector<8x32xf32>,
    %c0_116 = arith.constant 0 : index
    %c0_117 = arith.constant 0 : index
    %268 = vector.load %arg13[%c0_116, %c0_117] : memref<8x32xf32, #tpu.memory_space<vmem>>, vector<8x32xf32>
    tpu.vector_store %arg13[%c0_116, %c0_117], %266 {strides = array<i32>} : memref<8x32xf32, #tpu.memory_space<vmem>>, vector<8x32xf32>,
    %269 = arith.index_cast %235 : i32 to index
    %c0_118 = arith.constant 0 : index
    %270 = vector.load %arg12[%269, %c0_118] : memref<64x32xf32, #tpu.memory_space<vmem>>, vector<8x32xf32>
    tpu.vector_store %arg12[%269, %c0_118], %266 {strides = array<i32>} : memref<64x32xf32, #tpu.memory_space<vmem>>, vector<8x32xf32>,
    %c7_i32 = arith.constant 7 : i32
    %c8_i32_119 = arith.constant 8 : i32
    %271 = arith.muli %c7_i32, %c8_i32_119 : i32
    %272 = tpu.assume_multiple %271, 8 : i32
    %273 = arith.index_cast %272 : i32 to index
    %c0_120 = arith.constant 0 : index
    %274 = vector.load %arg11[%273, %c0_120] : memref<64x128xf32, #tpu.memory_space<vmem>>, vector<8x128xf32>
    %c0_121 = arith.constant 0 : index
    %c0_122 = arith.constant 0 : index
    %275 = vector.load %arg13[%c0_121, %c0_122] : memref<8x32xf32, #tpu.memory_space<vmem>>, vector<8x32xf32>
    %cst_123 = arith.constant dense<0.000000e+00> : vector<8x128xf32>
    %276 = tpu.matmul %275, %11, %cst_123 {dimension_numbers = #tpu.dot_dimension_numbers<[1], [0], [0], [1], [0, 0, 1, 1], [], []>} : vector<8x32xf32>, vector<32x128xf32>, vector<8x128xf32> -> vector<8x128xf32>
    %277 = arith.addf %274, %276 : vector<8x128xf32>
    %278 = vector.extract_strided_slice %277 {offsets = [0, 0], sizes = [8, 32], strides = [1, 1]} : vector<8x128xf32> to vector<8x32xf32>
    %279 = arith.negf %278 : vector<8x32xf32>
    %280 = math.exp %279 : vector<8x32xf32>
    %cst_124 = arith.constant 1.000000e+00 : f32
    %281 = vector.broadcast %cst_124 : f32 to vector<8x32xf32>
    %282 = arith.addf %281, %280 : vector<8x32xf32>
    %283 = arith.divf %281, %282 : vector<8x32xf32>
    %284 = vector.extract_strided_slice %277 {offsets = [0, 32], sizes = [8, 32], strides = [1, 1]} : vector<8x128xf32> to vector<8x32xf32>
    %285 = arith.negf %284 : vector<8x32xf32>
    %286 = math.exp %285 : vector<8x32xf32>
    %cst_125 = arith.constant 1.000000e+00 : f32
    %287 = vector.broadcast %cst_125 : f32 to vector<8x32xf32>
    %288 = arith.addf %287, %286 : vector<8x32xf32>
    %289 = arith.divf %287, %288 : vector<8x32xf32>
    %290 = vector.extract_strided_slice %277 {offsets = [0, 64], sizes = [8, 32], strides = [1, 1]} : vector<8x128xf32> to vector<8x32xf32>
    %291 = math.tanh %290 : vector<8x32xf32>
    %292 = vector.extract_strided_slice %277 {offsets = [0, 96], sizes = [8, 32], strides = [1, 1]} : vector<8x128xf32> to vector<8x32xf32>
    %293 = arith.negf %292 : vector<8x32xf32>
    %294 = math.exp %293 : vector<8x32xf32>
    %cst_126 = arith.constant 1.000000e+00 : f32
    %295 = vector.broadcast %cst_126 : f32 to vector<8x32xf32>
    %296 = arith.addf %295, %294 : vector<8x32xf32>
    %297 = arith.divf %295, %296 : vector<8x32xf32>
    %c0_127 = arith.constant 0 : index
    %c0_128 = arith.constant 0 : index
    %298 = vector.load %arg14[%c0_127, %c0_128] : memref<8x32xf32, #tpu.memory_space<vmem>>, vector<8x32xf32>
    %299 = arith.mulf %289, %298 : vector<8x32xf32>
    %300 = arith.mulf %283, %291 : vector<8x32xf32>
    %301 = arith.addf %299, %300 : vector<8x32xf32>
    %302 = math.tanh %301 : vector<8x32xf32>
    %303 = arith.mulf %297, %302 : vector<8x32xf32>
    %c0_129 = arith.constant 0 : index
    %c0_130 = arith.constant 0 : index
    %304 = vector.load %arg14[%c0_129, %c0_130] : memref<8x32xf32, #tpu.memory_space<vmem>>, vector<8x32xf32>
    tpu.vector_store %arg14[%c0_129, %c0_130], %301 {strides = array<i32>} : memref<8x32xf32, #tpu.memory_space<vmem>>, vector<8x32xf32>,
    %c0_131 = arith.constant 0 : index
    %c0_132 = arith.constant 0 : index
    %305 = vector.load %arg13[%c0_131, %c0_132] : memref<8x32xf32, #tpu.memory_space<vmem>>, vector<8x32xf32>
    tpu.vector_store %arg13[%c0_131, %c0_132], %303 {strides = array<i32>} : memref<8x32xf32, #tpu.memory_space<vmem>>, vector<8x32xf32>,
    %306 = arith.index_cast %272 : i32 to index
    %c0_133 = arith.constant 0 : index
    %307 = vector.load %arg12[%306, %c0_133] : memref<64x32xf32, #tpu.memory_space<vmem>>, vector<8x32xf32>
    tpu.vector_store %arg12[%306, %c0_133], %303 {strides = array<i32>} : memref<64x32xf32, #tpu.memory_space<vmem>>, vector<8x32xf32>,
    %c8_i32_134 = arith.constant 8 : i32
    %c0_135 = arith.constant 0 : index
    %c0_136 = arith.constant 0 : index
    %308 = vector.load %arg12[%c0_135, %c0_136] : memref<64x32xf32, #tpu.memory_space<vmem>>, vector<64x32xf32>
    %c0_137 = arith.constant 0 : index
    %c0_138 = arith.constant 0 : index
    %309 = vector.load %arg5[%c0_137, %c0_138] : memref<32x128xf32, #tpu.memory_space<vmem>>, vector<32x128xf32>
    %cst_139 = arith.constant dense<0.000000e+00> : vector<64x128xf32>
    %310 = tpu.matmul %308, %309, %cst_139 {dimension_numbers = #tpu.dot_dimension_numbers<[1], [0], [0], [1], [0, 0, 1, 1], [], []>} : vector<64x32xf32>, vector<32x128xf32>, vector<64x128xf32> -> vector<64x128xf32>
    %c0_140 = arith.constant 0 : index
    %c0_141 = arith.constant 0 : index
    %311 = vector.load %arg7[%c0_140, %c0_141] : memref<1x128xf32, #tpu.memory_space<vmem>>, vector<1x128xf32>
    %312 = vector.broadcast %311 : vector<1x128xf32> to vector<64x128xf32>
    %313 = arith.addf %310, %312 : vector<64x128xf32>
    %c0_142 = arith.constant 0 : index
    %c0_143 = arith.constant 0 : index
    %314 = vector.load %arg11[%c0_142, %c0_143] : memref<64x128xf32, #tpu.memory_space<vmem>>, vector<64x128xf32>
    tpu.vector_store %arg11[%c0_142, %c0_143], %313 {strides = array<i32>} : memref<64x128xf32, #tpu.memory_space<vmem>>, vector<64x128xf32>,
    %cst_144 = arith.constant 0.000000e+00 : f32
    %315 = vector.broadcast %cst_144 : f32 to vector<8x32xf32>
    %c0_145 = arith.constant 0 : index
    %c0_146 = arith.constant 0 : index
    %316 = vector.load %arg13[%c0_145, %c0_146] : memref<8x32xf32, #tpu.memory_space<vmem>>, vector<8x32xf32>
    tpu.vector_store %arg13[%c0_145, %c0_146], %315 {strides = array<i32>} : memref<8x32xf32, #tpu.memory_space<vmem>>, vector<8x32xf32>,
    %cst_147 = arith.constant 0.000000e+00 : f32
    %317 = vector.broadcast %cst_147 : f32 to vector<8x32xf32>
    %c0_148 = arith.constant 0 : index
    %c0_149 = arith.constant 0 : index
    %318 = vector.load %arg14[%c0_148, %c0_149] : memref<8x32xf32, #tpu.memory_space<vmem>>, vector<8x32xf32>
    tpu.vector_store %arg14[%c0_148, %c0_149], %317 {strides = array<i32>} : memref<8x32xf32, #tpu.memory_space<vmem>>, vector<8x32xf32>,
    %c0_150 = arith.constant 0 : index
    %c0_151 = arith.constant 0 : index
    %319 = vector.load %arg6[%c0_150, %c0_151] : memref<32x128xf32, #tpu.memory_space<vmem>>, vector<32x128xf32>
    %c0_i32_152 = arith.constant 0 : i32
    %c8_i32_153 = arith.constant 8 : i32
    %320 = arith.muli %c0_i32_152, %c8_i32_153 : i32
    %321 = tpu.assume_multiple %320, 8 : i32
    %322 = arith.index_cast %321 : i32 to index
    %c0_154 = arith.constant 0 : index
    %323 = vector.load %arg11[%322, %c0_154] : memref<64x128xf32, #tpu.memory_space<vmem>>, vector<8x128xf32>
    %c0_155 = arith.constant 0 : index
    %c0_156 = arith.constant 0 : index
    %324 = vector.load %arg13[%c0_155, %c0_156] : memref<8x32xf32, #tpu.memory_space<vmem>>, vector<8x32xf32>
    %cst_157 = arith.constant dense<0.000000e+00> : vector<8x128xf32>
    %325 = tpu.matmul %324, %319, %cst_157 {dimension_numbers = #tpu.dot_dimension_numbers<[1], [0], [0], [1], [0, 0, 1, 1], [], []>} : vector<8x32xf32>, vector<32x128xf32>, vector<8x128xf32> -> vector<8x128xf32>
    %326 = arith.addf %323, %325 : vector<8x128xf32>
    %327 = vector.extract_strided_slice %326 {offsets = [0, 0], sizes = [8, 32], strides = [1, 1]} : vector<8x128xf32> to vector<8x32xf32>
    %328 = arith.negf %327 : vector<8x32xf32>
    %329 = math.exp %328 : vector<8x32xf32>
    %cst_158 = arith.constant 1.000000e+00 : f32
    %330 = vector.broadcast %cst_158 : f32 to vector<8x32xf32>
    %331 = arith.addf %330, %329 : vector<8x32xf32>
    %332 = arith.divf %330, %331 : vector<8x32xf32>
    %333 = vector.extract_strided_slice %326 {offsets = [0, 32], sizes = [8, 32], strides = [1, 1]} : vector<8x128xf32> to vector<8x32xf32>
    %334 = arith.negf %333 : vector<8x32xf32>
    %335 = math.exp %334 : vector<8x32xf32>
    %cst_159 = arith.constant 1.000000e+00 : f32
    %336 = vector.broadcast %cst_159 : f32 to vector<8x32xf32>
    %337 = arith.addf %336, %335 : vector<8x32xf32>
    %338 = arith.divf %336, %337 : vector<8x32xf32>
    %339 = vector.extract_strided_slice %326 {offsets = [0, 64], sizes = [8, 32], strides = [1, 1]} : vector<8x128xf32> to vector<8x32xf32>
    %340 = math.tanh %339 : vector<8x32xf32>
    %341 = vector.extract_strided_slice %326 {offsets = [0, 96], sizes = [8, 32], strides = [1, 1]} : vector<8x128xf32> to vector<8x32xf32>
    %342 = arith.negf %341 : vector<8x32xf32>
    %343 = math.exp %342 : vector<8x32xf32>
    %cst_160 = arith.constant 1.000000e+00 : f32
    %344 = vector.broadcast %cst_160 : f32 to vector<8x32xf32>
    %345 = arith.addf %344, %343 : vector<8x32xf32>
    %346 = arith.divf %344, %345 : vector<8x32xf32>
    %c0_161 = arith.constant 0 : index
    %c0_162 = arith.constant 0 : index
    %347 = vector.load %arg14[%c0_161, %c0_162] : memref<8x32xf32, #tpu.memory_space<vmem>>, vector<8x32xf32>
    %348 = arith.mulf %338, %347 : vector<8x32xf32>
    %349 = arith.mulf %332, %340 : vector<8x32xf32>
    %350 = arith.addf %348, %349 : vector<8x32xf32>
    %351 = math.tanh %350 : vector<8x32xf32>
    %352 = arith.mulf %346, %351 : vector<8x32xf32>
    %c0_163 = arith.constant 0 : index
    %c0_164 = arith.constant 0 : index
    %353 = vector.load %arg14[%c0_163, %c0_164] : memref<8x32xf32, #tpu.memory_space<vmem>>, vector<8x32xf32>
    tpu.vector_store %arg14[%c0_163, %c0_164], %350 {strides = array<i32>} : memref<8x32xf32, #tpu.memory_space<vmem>>, vector<8x32xf32>,
    %c0_165 = arith.constant 0 : index
    %c0_166 = arith.constant 0 : index
    %354 = vector.load %arg13[%c0_165, %c0_166] : memref<8x32xf32, #tpu.memory_space<vmem>>, vector<8x32xf32>
    tpu.vector_store %arg13[%c0_165, %c0_166], %352 {strides = array<i32>} : memref<8x32xf32, #tpu.memory_space<vmem>>, vector<8x32xf32>,
    %c1_i32_167 = arith.constant 1 : i32
    %c8_i32_168 = arith.constant 8 : i32
    %355 = arith.muli %c1_i32_167, %c8_i32_168 : i32
    %356 = tpu.assume_multiple %355, 8 : i32
    %357 = arith.index_cast %356 : i32 to index
    %c0_169 = arith.constant 0 : index
    %358 = vector.load %arg11[%357, %c0_169] : memref<64x128xf32, #tpu.memory_space<vmem>>, vector<8x128xf32>
    %c0_170 = arith.constant 0 : index
    %c0_171 = arith.constant 0 : index
    %359 = vector.load %arg13[%c0_170, %c0_171] : memref<8x32xf32, #tpu.memory_space<vmem>>, vector<8x32xf32>
    %cst_172 = arith.constant dense<0.000000e+00> : vector<8x128xf32>
    %360 = tpu.matmul %359, %319, %cst_172 {dimension_numbers = #tpu.dot_dimension_numbers<[1], [0], [0], [1], [0, 0, 1, 1], [], []>} : vector<8x32xf32>, vector<32x128xf32>, vector<8x128xf32> -> vector<8x128xf32>
    %361 = arith.addf %358, %360 : vector<8x128xf32>
    %362 = vector.extract_strided_slice %361 {offsets = [0, 0], sizes = [8, 32], strides = [1, 1]} : vector<8x128xf32> to vector<8x32xf32>
    %363 = arith.negf %362 : vector<8x32xf32>
    %364 = math.exp %363 : vector<8x32xf32>
    %cst_173 = arith.constant 1.000000e+00 : f32
    %365 = vector.broadcast %cst_173 : f32 to vector<8x32xf32>
    %366 = arith.addf %365, %364 : vector<8x32xf32>
    %367 = arith.divf %365, %366 : vector<8x32xf32>
    %368 = vector.extract_strided_slice %361 {offsets = [0, 32], sizes = [8, 32], strides = [1, 1]} : vector<8x128xf32> to vector<8x32xf32>
    %369 = arith.negf %368 : vector<8x32xf32>
    %370 = math.exp %369 : vector<8x32xf32>
    %cst_174 = arith.constant 1.000000e+00 : f32
    %371 = vector.broadcast %cst_174 : f32 to vector<8x32xf32>
    %372 = arith.addf %371, %370 : vector<8x32xf32>
    %373 = arith.divf %371, %372 : vector<8x32xf32>
    %374 = vector.extract_strided_slice %361 {offsets = [0, 64], sizes = [8, 32], strides = [1, 1]} : vector<8x128xf32> to vector<8x32xf32>
    %375 = math.tanh %374 : vector<8x32xf32>
    %376 = vector.extract_strided_slice %361 {offsets = [0, 96], sizes = [8, 32], strides = [1, 1]} : vector<8x128xf32> to vector<8x32xf32>
    %377 = arith.negf %376 : vector<8x32xf32>
    %378 = math.exp %377 : vector<8x32xf32>
    %cst_175 = arith.constant 1.000000e+00 : f32
    %379 = vector.broadcast %cst_175 : f32 to vector<8x32xf32>
    %380 = arith.addf %379, %378 : vector<8x32xf32>
    %381 = arith.divf %379, %380 : vector<8x32xf32>
    %c0_176 = arith.constant 0 : index
    %c0_177 = arith.constant 0 : index
    %382 = vector.load %arg14[%c0_176, %c0_177] : memref<8x32xf32, #tpu.memory_space<vmem>>, vector<8x32xf32>
    %383 = arith.mulf %373, %382 : vector<8x32xf32>
    %384 = arith.mulf %367, %375 : vector<8x32xf32>
    %385 = arith.addf %383, %384 : vector<8x32xf32>
    %386 = math.tanh %385 : vector<8x32xf32>
    %387 = arith.mulf %381, %386 : vector<8x32xf32>
    %c0_178 = arith.constant 0 : index
    %c0_179 = arith.constant 0 : index
    %388 = vector.load %arg14[%c0_178, %c0_179] : memref<8x32xf32, #tpu.memory_space<vmem>>, vector<8x32xf32>
    tpu.vector_store %arg14[%c0_178, %c0_179], %385 {strides = array<i32>} : memref<8x32xf32, #tpu.memory_space<vmem>>, vector<8x32xf32>,
    %c0_180 = arith.constant 0 : index
    %c0_181 = arith.constant 0 : index
    %389 = vector.load %arg13[%c0_180, %c0_181] : memref<8x32xf32, #tpu.memory_space<vmem>>, vector<8x32xf32>
    tpu.vector_store %arg13[%c0_180, %c0_181], %387 {strides = array<i32>} : memref<8x32xf32, #tpu.memory_space<vmem>>, vector<8x32xf32>,
    %c2_i32_182 = arith.constant 2 : i32
    %c8_i32_183 = arith.constant 8 : i32
    %390 = arith.muli %c2_i32_182, %c8_i32_183 : i32
    %391 = tpu.assume_multiple %390, 8 : i32
    %392 = arith.index_cast %391 : i32 to index
    %c0_184 = arith.constant 0 : index
    %393 = vector.load %arg11[%392, %c0_184] : memref<64x128xf32, #tpu.memory_space<vmem>>, vector<8x128xf32>
    %c0_185 = arith.constant 0 : index
    %c0_186 = arith.constant 0 : index
    %394 = vector.load %arg13[%c0_185, %c0_186] : memref<8x32xf32, #tpu.memory_space<vmem>>, vector<8x32xf32>
    %cst_187 = arith.constant dense<0.000000e+00> : vector<8x128xf32>
    %395 = tpu.matmul %394, %319, %cst_187 {dimension_numbers = #tpu.dot_dimension_numbers<[1], [0], [0], [1], [0, 0, 1, 1], [], []>} : vector<8x32xf32>, vector<32x128xf32>, vector<8x128xf32> -> vector<8x128xf32>
    %396 = arith.addf %393, %395 : vector<8x128xf32>
    %397 = vector.extract_strided_slice %396 {offsets = [0, 0], sizes = [8, 32], strides = [1, 1]} : vector<8x128xf32> to vector<8x32xf32>
    %398 = arith.negf %397 : vector<8x32xf32>
    %399 = math.exp %398 : vector<8x32xf32>
    %cst_188 = arith.constant 1.000000e+00 : f32
    %400 = vector.broadcast %cst_188 : f32 to vector<8x32xf32>
    %401 = arith.addf %400, %399 : vector<8x32xf32>
    %402 = arith.divf %400, %401 : vector<8x32xf32>
    %403 = vector.extract_strided_slice %396 {offsets = [0, 32], sizes = [8, 32], strides = [1, 1]} : vector<8x128xf32> to vector<8x32xf32>
    %404 = arith.negf %403 : vector<8x32xf32>
    %405 = math.exp %404 : vector<8x32xf32>
    %cst_189 = arith.constant 1.000000e+00 : f32
    %406 = vector.broadcast %cst_189 : f32 to vector<8x32xf32>
    %407 = arith.addf %406, %405 : vector<8x32xf32>
    %408 = arith.divf %406, %407 : vector<8x32xf32>
    %409 = vector.extract_strided_slice %396 {offsets = [0, 64], sizes = [8, 32], strides = [1, 1]} : vector<8x128xf32> to vector<8x32xf32>
    %410 = math.tanh %409 : vector<8x32xf32>
    %411 = vector.extract_strided_slice %396 {offsets = [0, 96], sizes = [8, 32], strides = [1, 1]} : vector<8x128xf32> to vector<8x32xf32>
    %412 = arith.negf %411 : vector<8x32xf32>
    %413 = math.exp %412 : vector<8x32xf32>
    %cst_190 = arith.constant 1.000000e+00 : f32
    %414 = vector.broadcast %cst_190 : f32 to vector<8x32xf32>
    %415 = arith.addf %414, %413 : vector<8x32xf32>
    %416 = arith.divf %414, %415 : vector<8x32xf32>
    %c0_191 = arith.constant 0 : index
    %c0_192 = arith.constant 0 : index
    %417 = vector.load %arg14[%c0_191, %c0_192] : memref<8x32xf32, #tpu.memory_space<vmem>>, vector<8x32xf32>
    %418 = arith.mulf %408, %417 : vector<8x32xf32>
    %419 = arith.mulf %402, %410 : vector<8x32xf32>
    %420 = arith.addf %418, %419 : vector<8x32xf32>
    %421 = math.tanh %420 : vector<8x32xf32>
    %422 = arith.mulf %416, %421 : vector<8x32xf32>
    %c0_193 = arith.constant 0 : index
    %c0_194 = arith.constant 0 : index
    %423 = vector.load %arg14[%c0_193, %c0_194] : memref<8x32xf32, #tpu.memory_space<vmem>>, vector<8x32xf32>
    tpu.vector_store %arg14[%c0_193, %c0_194], %420 {strides = array<i32>} : memref<8x32xf32, #tpu.memory_space<vmem>>, vector<8x32xf32>,
    %c0_195 = arith.constant 0 : index
    %c0_196 = arith.constant 0 : index
    %424 = vector.load %arg13[%c0_195, %c0_196] : memref<8x32xf32, #tpu.memory_space<vmem>>, vector<8x32xf32>
    tpu.vector_store %arg13[%c0_195, %c0_196], %422 {strides = array<i32>} : memref<8x32xf32, #tpu.memory_space<vmem>>, vector<8x32xf32>,
    %c3_i32_197 = arith.constant 3 : i32
    %c8_i32_198 = arith.constant 8 : i32
    %425 = arith.muli %c3_i32_197, %c8_i32_198 : i32
    %426 = tpu.assume_multiple %425, 8 : i32
    %427 = arith.index_cast %426 : i32 to index
    %c0_199 = arith.constant 0 : index
    %428 = vector.load %arg11[%427, %c0_199] : memref<64x128xf32, #tpu.memory_space<vmem>>, vector<8x128xf32>
    %c0_200 = arith.constant 0 : index
    %c0_201 = arith.constant 0 : index
    %429 = vector.load %arg13[%c0_200, %c0_201] : memref<8x32xf32, #tpu.memory_space<vmem>>, vector<8x32xf32>
    %cst_202 = arith.constant dense<0.000000e+00> : vector<8x128xf32>
    %430 = tpu.matmul %429, %319, %cst_202 {dimension_numbers = #tpu.dot_dimension_numbers<[1], [0], [0], [1], [0, 0, 1, 1], [], []>} : vector<8x32xf32>, vector<32x128xf32>, vector<8x128xf32> -> vector<8x128xf32>
    %431 = arith.addf %428, %430 : vector<8x128xf32>
    %432 = vector.extract_strided_slice %431 {offsets = [0, 0], sizes = [8, 32], strides = [1, 1]} : vector<8x128xf32> to vector<8x32xf32>
    %433 = arith.negf %432 : vector<8x32xf32>
    %434 = math.exp %433 : vector<8x32xf32>
    %cst_203 = arith.constant 1.000000e+00 : f32
    %435 = vector.broadcast %cst_203 : f32 to vector<8x32xf32>
    %436 = arith.addf %435, %434 : vector<8x32xf32>
    %437 = arith.divf %435, %436 : vector<8x32xf32>
    %438 = vector.extract_strided_slice %431 {offsets = [0, 32], sizes = [8, 32], strides = [1, 1]} : vector<8x128xf32> to vector<8x32xf32>
    %439 = arith.negf %438 : vector<8x32xf32>
    %440 = math.exp %439 : vector<8x32xf32>
    %cst_204 = arith.constant 1.000000e+00 : f32
    %441 = vector.broadcast %cst_204 : f32 to vector<8x32xf32>
    %442 = arith.addf %441, %440 : vector<8x32xf32>
    %443 = arith.divf %441, %442 : vector<8x32xf32>
    %444 = vector.extract_strided_slice %431 {offsets = [0, 64], sizes = [8, 32], strides = [1, 1]} : vector<8x128xf32> to vector<8x32xf32>
    %445 = math.tanh %444 : vector<8x32xf32>
    %446 = vector.extract_strided_slice %431 {offsets = [0, 96], sizes = [8, 32], strides = [1, 1]} : vector<8x128xf32> to vector<8x32xf32>
    %447 = arith.negf %446 : vector<8x32xf32>
    %448 = math.exp %447 : vector<8x32xf32>
    %cst_205 = arith.constant 1.000000e+00 : f32
    %449 = vector.broadcast %cst_205 : f32 to vector<8x32xf32>
    %450 = arith.addf %449, %448 : vector<8x32xf32>
    %451 = arith.divf %449, %450 : vector<8x32xf32>
    %c0_206 = arith.constant 0 : index
    %c0_207 = arith.constant 0 : index
    %452 = vector.load %arg14[%c0_206, %c0_207] : memref<8x32xf32, #tpu.memory_space<vmem>>, vector<8x32xf32>
    %453 = arith.mulf %443, %452 : vector<8x32xf32>
    %454 = arith.mulf %437, %445 : vector<8x32xf32>
    %455 = arith.addf %453, %454 : vector<8x32xf32>
    %456 = math.tanh %455 : vector<8x32xf32>
    %457 = arith.mulf %451, %456 : vector<8x32xf32>
    %c0_208 = arith.constant 0 : index
    %c0_209 = arith.constant 0 : index
    %458 = vector.load %arg14[%c0_208, %c0_209] : memref<8x32xf32, #tpu.memory_space<vmem>>, vector<8x32xf32>
    tpu.vector_store %arg14[%c0_208, %c0_209], %455 {strides = array<i32>} : memref<8x32xf32, #tpu.memory_space<vmem>>, vector<8x32xf32>,
    %c0_210 = arith.constant 0 : index
    %c0_211 = arith.constant 0 : index
    %459 = vector.load %arg13[%c0_210, %c0_211] : memref<8x32xf32, #tpu.memory_space<vmem>>, vector<8x32xf32>
    tpu.vector_store %arg13[%c0_210, %c0_211], %457 {strides = array<i32>} : memref<8x32xf32, #tpu.memory_space<vmem>>, vector<8x32xf32>,
    %c4_i32_212 = arith.constant 4 : i32
    %c8_i32_213 = arith.constant 8 : i32
    %460 = arith.muli %c4_i32_212, %c8_i32_213 : i32
    %461 = tpu.assume_multiple %460, 8 : i32
    %462 = arith.index_cast %461 : i32 to index
    %c0_214 = arith.constant 0 : index
    %463 = vector.load %arg11[%462, %c0_214] : memref<64x128xf32, #tpu.memory_space<vmem>>, vector<8x128xf32>
    %c0_215 = arith.constant 0 : index
    %c0_216 = arith.constant 0 : index
    %464 = vector.load %arg13[%c0_215, %c0_216] : memref<8x32xf32, #tpu.memory_space<vmem>>, vector<8x32xf32>
    %cst_217 = arith.constant dense<0.000000e+00> : vector<8x128xf32>
    %465 = tpu.matmul %464, %319, %cst_217 {dimension_numbers = #tpu.dot_dimension_numbers<[1], [0], [0], [1], [0, 0, 1, 1], [], []>} : vector<8x32xf32>, vector<32x128xf32>, vector<8x128xf32> -> vector<8x128xf32>
    %466 = arith.addf %463, %465 : vector<8x128xf32>
    %467 = vector.extract_strided_slice %466 {offsets = [0, 0], sizes = [8, 32], strides = [1, 1]} : vector<8x128xf32> to vector<8x32xf32>
    %468 = arith.negf %467 : vector<8x32xf32>
    %469 = math.exp %468 : vector<8x32xf32>
    %cst_218 = arith.constant 1.000000e+00 : f32
    %470 = vector.broadcast %cst_218 : f32 to vector<8x32xf32>
    %471 = arith.addf %470, %469 : vector<8x32xf32>
    %472 = arith.divf %470, %471 : vector<8x32xf32>
    %473 = vector.extract_strided_slice %466 {offsets = [0, 32], sizes = [8, 32], strides = [1, 1]} : vector<8x128xf32> to vector<8x32xf32>
    %474 = arith.negf %473 : vector<8x32xf32>
    %475 = math.exp %474 : vector<8x32xf32>
    %cst_219 = arith.constant 1.000000e+00 : f32
    %476 = vector.broadcast %cst_219 : f32 to vector<8x32xf32>
    %477 = arith.addf %476, %475 : vector<8x32xf32>
    %478 = arith.divf %476, %477 : vector<8x32xf32>
    %479 = vector.extract_strided_slice %466 {offsets = [0, 64], sizes = [8, 32], strides = [1, 1]} : vector<8x128xf32> to vector<8x32xf32>
    %480 = math.tanh %479 : vector<8x32xf32>
    %481 = vector.extract_strided_slice %466 {offsets = [0, 96], sizes = [8, 32], strides = [1, 1]} : vector<8x128xf32> to vector<8x32xf32>
    %482 = arith.negf %481 : vector<8x32xf32>
    %483 = math.exp %482 : vector<8x32xf32>
    %cst_220 = arith.constant 1.000000e+00 : f32
    %484 = vector.broadcast %cst_220 : f32 to vector<8x32xf32>
    %485 = arith.addf %484, %483 : vector<8x32xf32>
    %486 = arith.divf %484, %485 : vector<8x32xf32>
    %c0_221 = arith.constant 0 : index
    %c0_222 = arith.constant 0 : index
    %487 = vector.load %arg14[%c0_221, %c0_222] : memref<8x32xf32, #tpu.memory_space<vmem>>, vector<8x32xf32>
    %488 = arith.mulf %478, %487 : vector<8x32xf32>
    %489 = arith.mulf %472, %480 : vector<8x32xf32>
    %490 = arith.addf %488, %489 : vector<8x32xf32>
    %491 = math.tanh %490 : vector<8x32xf32>
    %492 = arith.mulf %486, %491 : vector<8x32xf32>
    %c0_223 = arith.constant 0 : index
    %c0_224 = arith.constant 0 : index
    %493 = vector.load %arg14[%c0_223, %c0_224] : memref<8x32xf32, #tpu.memory_space<vmem>>, vector<8x32xf32>
    tpu.vector_store %arg14[%c0_223, %c0_224], %490 {strides = array<i32>} : memref<8x32xf32, #tpu.memory_space<vmem>>, vector<8x32xf32>,
    %c0_225 = arith.constant 0 : index
    %c0_226 = arith.constant 0 : index
    %494 = vector.load %arg13[%c0_225, %c0_226] : memref<8x32xf32, #tpu.memory_space<vmem>>, vector<8x32xf32>
    tpu.vector_store %arg13[%c0_225, %c0_226], %492 {strides = array<i32>} : memref<8x32xf32, #tpu.memory_space<vmem>>, vector<8x32xf32>,
    %c5_i32_227 = arith.constant 5 : i32
    %c8_i32_228 = arith.constant 8 : i32
    %495 = arith.muli %c5_i32_227, %c8_i32_228 : i32
    %496 = tpu.assume_multiple %495, 8 : i32
    %497 = arith.index_cast %496 : i32 to index
    %c0_229 = arith.constant 0 : index
    %498 = vector.load %arg11[%497, %c0_229] : memref<64x128xf32, #tpu.memory_space<vmem>>, vector<8x128xf32>
    %c0_230 = arith.constant 0 : index
    %c0_231 = arith.constant 0 : index
    %499 = vector.load %arg13[%c0_230, %c0_231] : memref<8x32xf32, #tpu.memory_space<vmem>>, vector<8x32xf32>
    %cst_232 = arith.constant dense<0.000000e+00> : vector<8x128xf32>
    %500 = tpu.matmul %499, %319, %cst_232 {dimension_numbers = #tpu.dot_dimension_numbers<[1], [0], [0], [1], [0, 0, 1, 1], [], []>} : vector<8x32xf32>, vector<32x128xf32>, vector<8x128xf32> -> vector<8x128xf32>
    %501 = arith.addf %498, %500 : vector<8x128xf32>
    %502 = vector.extract_strided_slice %501 {offsets = [0, 0], sizes = [8, 32], strides = [1, 1]} : vector<8x128xf32> to vector<8x32xf32>
    %503 = arith.negf %502 : vector<8x32xf32>
    %504 = math.exp %503 : vector<8x32xf32>
    %cst_233 = arith.constant 1.000000e+00 : f32
    %505 = vector.broadcast %cst_233 : f32 to vector<8x32xf32>
    %506 = arith.addf %505, %504 : vector<8x32xf32>
    %507 = arith.divf %505, %506 : vector<8x32xf32>
    %508 = vector.extract_strided_slice %501 {offsets = [0, 32], sizes = [8, 32], strides = [1, 1]} : vector<8x128xf32> to vector<8x32xf32>
    %509 = arith.negf %508 : vector<8x32xf32>
    %510 = math.exp %509 : vector<8x32xf32>
    %cst_234 = arith.constant 1.000000e+00 : f32
    %511 = vector.broadcast %cst_234 : f32 to vector<8x32xf32>
    %512 = arith.addf %511, %510 : vector<8x32xf32>
    %513 = arith.divf %511, %512 : vector<8x32xf32>
    %514 = vector.extract_strided_slice %501 {offsets = [0, 64], sizes = [8, 32], strides = [1, 1]} : vector<8x128xf32> to vector<8x32xf32>
    %515 = math.tanh %514 : vector<8x32xf32>
    %516 = vector.extract_strided_slice %501 {offsets = [0, 96], sizes = [8, 32], strides = [1, 1]} : vector<8x128xf32> to vector<8x32xf32>
    %517 = arith.negf %516 : vector<8x32xf32>
    %518 = math.exp %517 : vector<8x32xf32>
    %cst_235 = arith.constant 1.000000e+00 : f32
    %519 = vector.broadcast %cst_235 : f32 to vector<8x32xf32>
    %520 = arith.addf %519, %518 : vector<8x32xf32>
    %521 = arith.divf %519, %520 : vector<8x32xf32>
    %c0_236 = arith.constant 0 : index
    %c0_237 = arith.constant 0 : index
    %522 = vector.load %arg14[%c0_236, %c0_237] : memref<8x32xf32, #tpu.memory_space<vmem>>, vector<8x32xf32>
    %523 = arith.mulf %513, %522 : vector<8x32xf32>
    %524 = arith.mulf %507, %515 : vector<8x32xf32>
    %525 = arith.addf %523, %524 : vector<8x32xf32>
    %526 = math.tanh %525 : vector<8x32xf32>
    %527 = arith.mulf %521, %526 : vector<8x32xf32>
    %c0_238 = arith.constant 0 : index
    %c0_239 = arith.constant 0 : index
    %528 = vector.load %arg14[%c0_238, %c0_239] : memref<8x32xf32, #tpu.memory_space<vmem>>, vector<8x32xf32>
    tpu.vector_store %arg14[%c0_238, %c0_239], %525 {strides = array<i32>} : memref<8x32xf32, #tpu.memory_space<vmem>>, vector<8x32xf32>,
    %c0_240 = arith.constant 0 : index
    %c0_241 = arith.constant 0 : index
    %529 = vector.load %arg13[%c0_240, %c0_241] : memref<8x32xf32, #tpu.memory_space<vmem>>, vector<8x32xf32>
    tpu.vector_store %arg13[%c0_240, %c0_241], %527 {strides = array<i32>} : memref<8x32xf32, #tpu.memory_space<vmem>>, vector<8x32xf32>,
    %c6_i32_242 = arith.constant 6 : i32
    %c8_i32_243 = arith.constant 8 : i32
    %530 = arith.muli %c6_i32_242, %c8_i32_243 : i32
    %531 = tpu.assume_multiple %530, 8 : i32
    %532 = arith.index_cast %531 : i32 to index
    %c0_244 = arith.constant 0 : index
    %533 = vector.load %arg11[%532, %c0_244] : memref<64x128xf32, #tpu.memory_space<vmem>>, vector<8x128xf32>
    %c0_245 = arith.constant 0 : index
    %c0_246 = arith.constant 0 : index
    %534 = vector.load %arg13[%c0_245, %c0_246] : memref<8x32xf32, #tpu.memory_space<vmem>>, vector<8x32xf32>
    %cst_247 = arith.constant dense<0.000000e+00> : vector<8x128xf32>
    %535 = tpu.matmul %534, %319, %cst_247 {dimension_numbers = #tpu.dot_dimension_numbers<[1], [0], [0], [1], [0, 0, 1, 1], [], []>} : vector<8x32xf32>, vector<32x128xf32>, vector<8x128xf32> -> vector<8x128xf32>
    %536 = arith.addf %533, %535 : vector<8x128xf32>
    %537 = vector.extract_strided_slice %536 {offsets = [0, 0], sizes = [8, 32], strides = [1, 1]} : vector<8x128xf32> to vector<8x32xf32>
    %538 = arith.negf %537 : vector<8x32xf32>
    %539 = math.exp %538 : vector<8x32xf32>
    %cst_248 = arith.constant 1.000000e+00 : f32
    %540 = vector.broadcast %cst_248 : f32 to vector<8x32xf32>
    %541 = arith.addf %540, %539 : vector<8x32xf32>
    %542 = arith.divf %540, %541 : vector<8x32xf32>
    %543 = vector.extract_strided_slice %536 {offsets = [0, 32], sizes = [8, 32], strides = [1, 1]} : vector<8x128xf32> to vector<8x32xf32>
    %544 = arith.negf %543 : vector<8x32xf32>
    %545 = math.exp %544 : vector<8x32xf32>
    %cst_249 = arith.constant 1.000000e+00 : f32
    %546 = vector.broadcast %cst_249 : f32 to vector<8x32xf32>
    %547 = arith.addf %546, %545 : vector<8x32xf32>
    %548 = arith.divf %546, %547 : vector<8x32xf32>
    %549 = vector.extract_strided_slice %536 {offsets = [0, 64], sizes = [8, 32], strides = [1, 1]} : vector<8x128xf32> to vector<8x32xf32>
    %550 = math.tanh %549 : vector<8x32xf32>
    %551 = vector.extract_strided_slice %536 {offsets = [0, 96], sizes = [8, 32], strides = [1, 1]} : vector<8x128xf32> to vector<8x32xf32>
    %552 = arith.negf %551 : vector<8x32xf32>
    %553 = math.exp %552 : vector<8x32xf32>
    %cst_250 = arith.constant 1.000000e+00 : f32
    %554 = vector.broadcast %cst_250 : f32 to vector<8x32xf32>
    %555 = arith.addf %554, %553 : vector<8x32xf32>
    %556 = arith.divf %554, %555 : vector<8x32xf32>
    %c0_251 = arith.constant 0 : index
    %c0_252 = arith.constant 0 : index
    %557 = vector.load %arg14[%c0_251, %c0_252] : memref<8x32xf32, #tpu.memory_space<vmem>>, vector<8x32xf32>
    %558 = arith.mulf %548, %557 : vector<8x32xf32>
    %559 = arith.mulf %542, %550 : vector<8x32xf32>
    %560 = arith.addf %558, %559 : vector<8x32xf32>
    %561 = math.tanh %560 : vector<8x32xf32>
    %562 = arith.mulf %556, %561 : vector<8x32xf32>
    %c0_253 = arith.constant 0 : index
    %c0_254 = arith.constant 0 : index
    %563 = vector.load %arg14[%c0_253, %c0_254] : memref<8x32xf32, #tpu.memory_space<vmem>>, vector<8x32xf32>
    tpu.vector_store %arg14[%c0_253, %c0_254], %560 {strides = array<i32>} : memref<8x32xf32, #tpu.memory_space<vmem>>, vector<8x32xf32>,
    %c0_255 = arith.constant 0 : index
    %c0_256 = arith.constant 0 : index
    %564 = vector.load %arg13[%c0_255, %c0_256] : memref<8x32xf32, #tpu.memory_space<vmem>>, vector<8x32xf32>
    tpu.vector_store %arg13[%c0_255, %c0_256], %562 {strides = array<i32>} : memref<8x32xf32, #tpu.memory_space<vmem>>, vector<8x32xf32>,
    %c7_i32_257 = arith.constant 7 : i32
    %c8_i32_258 = arith.constant 8 : i32
    %565 = arith.muli %c7_i32_257, %c8_i32_258 : i32
    %566 = tpu.assume_multiple %565, 8 : i32
    %567 = arith.index_cast %566 : i32 to index
    %c0_259 = arith.constant 0 : index
    %568 = vector.load %arg11[%567, %c0_259] : memref<64x128xf32, #tpu.memory_space<vmem>>, vector<8x128xf32>
    %c0_260 = arith.constant 0 : index
    %c0_261 = arith.constant 0 : index
    %569 = vector.load %arg13[%c0_260, %c0_261] : memref<8x32xf32, #tpu.memory_space<vmem>>, vector<8x32xf32>
    %cst_262 = arith.constant dense<0.000000e+00> : vector<8x128xf32>
    %570 = tpu.matmul %569, %319, %cst_262 {dimension_numbers = #tpu.dot_dimension_numbers<[1], [0], [0], [1], [0, 0, 1, 1], [], []>} : vector<8x32xf32>, vector<32x128xf32>, vector<8x128xf32> -> vector<8x128xf32>
    %571 = arith.addf %568, %570 : vector<8x128xf32>
    %572 = vector.extract_strided_slice %571 {offsets = [0, 0], sizes = [8, 32], strides = [1, 1]} : vector<8x128xf32> to vector<8x32xf32>
    %573 = arith.negf %572 : vector<8x32xf32>
    %574 = math.exp %573 : vector<8x32xf32>
    %cst_263 = arith.constant 1.000000e+00 : f32
    %575 = vector.broadcast %cst_263 : f32 to vector<8x32xf32>
    %576 = arith.addf %575, %574 : vector<8x32xf32>
    %577 = arith.divf %575, %576 : vector<8x32xf32>
    %578 = vector.extract_strided_slice %571 {offsets = [0, 32], sizes = [8, 32], strides = [1, 1]} : vector<8x128xf32> to vector<8x32xf32>
    %579 = arith.negf %578 : vector<8x32xf32>
    %580 = math.exp %579 : vector<8x32xf32>
    %cst_264 = arith.constant 1.000000e+00 : f32
    %581 = vector.broadcast %cst_264 : f32 to vector<8x32xf32>
    %582 = arith.addf %581, %580 : vector<8x32xf32>
    %583 = arith.divf %581, %582 : vector<8x32xf32>
    %584 = vector.extract_strided_slice %571 {offsets = [0, 64], sizes = [8, 32], strides = [1, 1]} : vector<8x128xf32> to vector<8x32xf32>
    %585 = math.tanh %584 : vector<8x32xf32>
    %586 = vector.extract_strided_slice %571 {offsets = [0, 96], sizes = [8, 32], strides = [1, 1]} : vector<8x128xf32> to vector<8x32xf32>
    %587 = arith.negf %586 : vector<8x32xf32>
    %588 = math.exp %587 : vector<8x32xf32>
    %cst_265 = arith.constant 1.000000e+00 : f32
    %589 = vector.broadcast %cst_265 : f32 to vector<8x32xf32>
    %590 = arith.addf %589, %588 : vector<8x32xf32>
    %591 = arith.divf %589, %590 : vector<8x32xf32>
    %c0_266 = arith.constant 0 : index
    %c0_267 = arith.constant 0 : index
    %592 = vector.load %arg14[%c0_266, %c0_267] : memref<8x32xf32, #tpu.memory_space<vmem>>, vector<8x32xf32>
    %593 = arith.mulf %583, %592 : vector<8x32xf32>
    %594 = arith.mulf %577, %585 : vector<8x32xf32>
    %595 = arith.addf %593, %594 : vector<8x32xf32>
    %596 = math.tanh %595 : vector<8x32xf32>
    %597 = arith.mulf %591, %596 : vector<8x32xf32>
    %c0_268 = arith.constant 0 : index
    %c0_269 = arith.constant 0 : index
    %598 = vector.load %arg14[%c0_268, %c0_269] : memref<8x32xf32, #tpu.memory_space<vmem>>, vector<8x32xf32>
    tpu.vector_store %arg14[%c0_268, %c0_269], %595 {strides = array<i32>} : memref<8x32xf32, #tpu.memory_space<vmem>>, vector<8x32xf32>,
    %c0_270 = arith.constant 0 : index
    %c0_271 = arith.constant 0 : index
    %599 = vector.load %arg13[%c0_270, %c0_271] : memref<8x32xf32, #tpu.memory_space<vmem>>, vector<8x32xf32>
    tpu.vector_store %arg13[%c0_270, %c0_271], %597 {strides = array<i32>} : memref<8x32xf32, #tpu.memory_space<vmem>>, vector<8x32xf32>,
    %c8_i32_272 = arith.constant 8 : i32
    %c0_273 = arith.constant 0 : index
    %c0_274 = arith.constant 0 : index
    %600 = vector.load %arg13[%c0_273, %c0_274] : memref<8x32xf32, #tpu.memory_space<vmem>>, vector<8x32xf32>
    %c0_275 = arith.constant 0 : index
    %c0_276 = arith.constant 0 : index
    %601 = vector.load %arg8[%c0_275, %c0_276] : memref<32x128xf32, #tpu.memory_space<vmem>>, vector<32x128xf32>
    %cst_277 = arith.constant dense<0.000000e+00> : vector<8x128xf32>
    %602 = tpu.matmul %600, %601, %cst_277 {dimension_numbers = #tpu.dot_dimension_numbers<[1], [0], [0], [1], [0, 0, 1, 1], [], []>} : vector<8x32xf32>, vector<32x128xf32>, vector<8x128xf32> -> vector<8x128xf32>
    %c0_278 = arith.constant 0 : index
    %c0_279 = arith.constant 0 : index
    %603 = vector.load %arg9[%c0_278, %c0_279] : memref<1x128xf32, #tpu.memory_space<vmem>>, vector<1x128xf32>
    %604 = vector.broadcast %603 : vector<1x128xf32> to vector<8x128xf32>
    %605 = arith.addf %602, %604 : vector<8x128xf32>
    %c0_280 = arith.constant 0 : index
    %c0_281 = arith.constant 0 : index
    %606 = vector.load %arg10[%c0_280, %c0_281] : memref<8x128xf32, #tpu.memory_space<vmem>>, vector<8x128xf32>
    tpu.vector_store %arg10[%c0_280, %c0_281], %605 {strides = array<i32>} : memref<8x128xf32, #tpu.memory_space<vmem>>, vector<8x128xf32>,
    return
  }
  func.func @transform_0(%arg0: i32) -> (i32, i32) {
    %c0_i32 = arith.constant 0 : i32
    %c0_i32_0 = arith.constant 0 : i32
    %c0_i32_1 = arith.constant 0 : i32
    return %c0_i32, %c0_i32_0 : i32, i32
  }
  func.func @transform_1(%arg0: i32) -> (i32, i32) {
    %c0_i32 = arith.constant 0 : i32
    %c0_i32_0 = arith.constant 0 : i32
    %c0_i32_1 = arith.constant 0 : i32
    return %c0_i32, %c0_i32_0 : i32, i32
  }
  func.func @transform_2(%arg0: i32) -> (i32, i32) {
    %c0_i32 = arith.constant 0 : i32
    %c0_i32_0 = arith.constant 0 : i32
    %c0_i32_1 = arith.constant 0 : i32
    return %c0_i32, %c0_i32_0 : i32, i32
  }
  func.func @transform_3(%arg0: i32) -> (i32, i32) {
    %c0_i32 = arith.constant 0 : i32
    %c0_i32_0 = arith.constant 0 : i32
    %c0_i32_1 = arith.constant 0 : i32
    return %c0_i32, %c0_i32_0 : i32, i32
  }
  func.func @transform_4(%arg0: i32) -> (i32, i32) {
    %c0_i32 = arith.constant 0 : i32
    %c0_i32_0 = arith.constant 0 : i32
    %c0_i32_1 = arith.constant 0 : i32
    return %c0_i32, %c0_i32_0 : i32, i32
  }
  func.func @transform_5(%arg0: i32) -> (i32, i32) {
    %c0_i32 = arith.constant 0 : i32
    %c0_i32_0 = arith.constant 0 : i32
    %c0_i32_1 = arith.constant 0 : i32
    return %c0_i32, %c0_i32_0 : i32, i32
  }
  func.func @transform_6(%arg0: i32) -> (i32, i32) {
    %c0_i32 = arith.constant 0 : i32
    %c0_i32_0 = arith.constant 0 : i32
    %c0_i32_1 = arith.constant 0 : i32
    return %c0_i32, %c0_i32_0 : i32, i32
  }
  func.func @transform_7(%arg0: i32) -> (i32, i32) {
    %c0_i32 = arith.constant 0 : i32
    %c0_i32_0 = arith.constant 0 : i32
    %c0_i32_1 = arith.constant 0 : i32
    return %c0_i32, %c0_i32_0 : i32, i32
  }
  func.func @transform_8(%arg0: i32) -> (i32, i32) {
    %c0_i32 = arith.constant 0 : i32
    %c0_i32_0 = arith.constant 0 : i32
    %c0_i32_1 = arith.constant 0 : i32
    return %c0_i32, %c0_i32_0 : i32, i32
  }
  func.func @transform_9(%arg0: i32) -> (i32, i32) {
    %c0_i32 = arith.constant 0 : i32
    %c0_i32_0 = arith.constant 0 : i32
    %c0_i32_1 = arith.constant 0 : i32
    return %c0_i32, %c0_i32_0 : i32, i32
  }
}

</mosaic_0001>

<llo_original>
// kernel: tpu_custom_call.1
$region0: #{tpu_custom_call.1}
  #allocation0 [shape = 'u32[]', space=smem, size = 0x4, offset = 0x4, fixed_abs, tag = 'smem constant byte address 0x4 - core index']
  #allocation1 [shape = 'u32[144,128]{1,0:T(1,128)}', space=vmem, size = 0x12000, scoped, tag = 'internal scratch']
  #allocation2 [shape = 'f32[64,128]{1,0:T(8,128)}', space=vmem, size = 0x8000, scoped, tag = 'scratch operand']
  #allocation3 [shape = 'f32[64,32]{1,0:T(8,128)}', space=vmem, size = 0x8000, scoped, tag = 'scratch operand']
  #allocation4 [shape = 'f32[8,32]{1,0:T(8,128)}', space=vmem, size = 0x1000, scoped, tag = 'scratch operand']
  #allocation5 [shape = 'f32[8,32]{1,0:T(8,128)}', space=vmem, size = 0x1000, scoped, tag = 'scratch operand']
  %s0 = inlined_call_operand.vmem [shape: f32[64,16], index: 0, kind: input, shape index: {}]
  %s1 = inlined_call_operand.hbm [shape: f32[16,128], index: 1, kind: input, shape index: {}]
  %s2 = inlined_call_operand.vmem [shape: f32[32,128], index: 2, kind: input, shape index: {}]
  %s3 = inlined_call_operand.vmem [shape: f32[1,128], index: 3, kind: input, shape index: {}]
  %s4 = inlined_call_operand.vmem [shape: f32[32,128], index: 4, kind: input, shape index: {}]
  %s5 = inlined_call_operand.vmem [shape: f32[32,128], index: 5, kind: input, shape index: {}]
  %s6 = inlined_call_operand.vmem [shape: f32[1,128], index: 6, kind: input, shape index: {}]
  %s7 = inlined_call_operand.hbm [shape: f32[32,128], index: 7, kind: input, shape index: {}]
  %s8 = inlined_call_operand.vmem [shape: f32[1,128], index: 8, kind: input, shape index: {}]
  %s9 = inlined_call_operand.hbm [shape: f32[8,128], index: 9, kind: output, shape index: {}]
  %s10 = sld [smem:[#allocation0]]
  $region54: #{tpu_custom_call.1} parent=0
    _
  %s12 = ssub.s32 1, %s10
  %s13 = scalar_select 0, %s12, %s10
  $region1: #{tpu_custom_call.1} parent=0
    #allocation6 [shape = 'u8[8192]{0}', space=vmem, size = 0x2000, scoped, tag = 'input window, operand 1, single buffered']
    #allocation7 [shape = 's32[1]{0}', space=sflag, size = 0x4, scoped, tag = 'scoped memory for tpu_custom_call.1']
    #allocation8 [shape = 's32[1]{0}', space=sflag, size = 0x4, scoped, tag = 'scoped memory for tpu_custom_call.1']
    #allocation9 [shape = 'u8[16384]{0}', space=vmem, size = 0x4000, scoped, tag = 'input window, operand 7, single buffered']
    #allocation10 [shape = 's32[1]{0}', space=sflag, size = 0x4, scoped, tag = 'scoped memory for tpu_custom_call.1']
    #allocation11 [shape = 'u8[4096]{0}', space=vmem, size = 0x1000, scoped, tag = 'output window, operand 0, single buffered']
    %14 = vsyncpa [#allocation7], 0
    %15 = vsyncpa [#allocation10], 0
    %16 = vsyncpa [#allocation8], 0
    // Predicated region
    $region2: #{tpu_custom_call.1} parent=1 // pred_check
      _
    $region3: #{tpu_custom_call.1} parent=1 // pred_check_branch
      %18 = sbr.rel (0) target = $region5
    $region4: #{tpu_custom_call.1} parent=1 // pred_region
      _
    $region5: #{tpu_custom_call.1} parent=1 // pred_fallthru
      _
    // Predicated region
    $region6: #{tpu_custom_call.1} parent=1 // pred_check
      _
    $region7: #{tpu_custom_call.1} parent=1 // pred_check_branch
      %20 = sbr.rel (0) target = $region9
    $region8: #{tpu_custom_call.1} parent=1 // pred_region
      %s22 = ssub.s32 256, 256
      %23 = vsyncadd [#allocation7], %s22
      %s24 = sshll.u32 [#allocation6], 4
      %s25 = int_to_ptr.vmem [resolvable:$true] %s24
      %30 = dma.hbm_to_vmem [thread:$0]  %s1, 256, %s25, [#allocation7], 128, 128, 8
    $region9: #{tpu_custom_call.1} parent=1 // pred_fallthru
      _
    // Predicated region
    $region10: #{tpu_custom_call.1} parent=1 // pred_check
      _
    $region11: #{tpu_custom_call.1} parent=1 // pred_check_branch
      %32 = sbr.rel (0) target = $region13
    $region12: #{tpu_custom_call.1} parent=1 // pred_region
      _
    $region13: #{tpu_custom_call.1} parent=1 // pred_fallthru
      _
    // Predicated region
    $region14: #{tpu_custom_call.1} parent=1 // pred_check
      _
    $region15: #{tpu_custom_call.1} parent=1 // pred_check_branch
      %34 = sbr.rel (0) target = $region17
    $region16: #{tpu_custom_call.1} parent=1 // pred_region
      _
    $region17: #{tpu_custom_call.1} parent=1 // pred_fallthru
      _
    // Predicated region
    $region18: #{tpu_custom_call.1} parent=1 // pred_check
      _
    $region19: #{tpu_custom_call.1} parent=1 // pred_check_branch
      %36 = sbr.rel (0) target = $region21
    $region20: #{tpu_custom_call.1} parent=1 // pred_region
      _
    $region21: #{tpu_custom_call.1} parent=1 // pred_fallthru
      _
    // Predicated region
    $region22: #{tpu_custom_call.1} parent=1 // pred_check
      _
    $region23: #{tpu_custom_call.1} parent=1 // pred_check_branch
      %38 = sbr.rel (0) target = $region25
    $region24: #{tpu_custom_call.1} parent=1 // pred_region
      _
    $region25: #{tpu_custom_call.1} parent=1 // pred_fallthru
      _
    // Predicated region
    $region26: #{tpu_custom_call.1} parent=1 // pred_check
      _
    $region27: #{tpu_custom_call.1} parent=1 // pred_check_branch
      %40 = sbr.rel (0) target = $region29
    $region28: #{tpu_custom_call.1} parent=1 // pred_region
      _
    $region29: #{tpu_custom_call.1} parent=1 // pred_fallthru
      _
    // Predicated region
    $region30: #{tpu_custom_call.1} parent=1 // pred_check
      _
    $region31: #{tpu_custom_call.1} parent=1 // pred_check_branch
      %42 = sbr.rel (0) target = $region33
    $region32: #{tpu_custom_call.1} parent=1 // pred_region
      %s44 = ssub.s32 512, 512
      %45 = vsyncadd [#allocation10], %s44
      %s46 = sshll.u32 [#allocation9], 4
      %s47 = int_to_ptr.vmem [resolvable:$true] %s46
      %52 = dma.hbm_to_vmem [thread:$0]  %s7, 512, %s47, [#allocation10], 128, 128, 8
    $region33: #{tpu_custom_call.1} parent=1 // pred_fallthru
      _
    // Predicated region
    $region34: #{tpu_custom_call.1} parent=1 // pred_check
      _
    $region35: #{tpu_custom_call.1} parent=1 // pred_check_branch
      %54 = sbr.rel (0) target = $region37
    $region36: #{tpu_custom_call.1} parent=1 // pred_region
      _
    $region37: #{tpu_custom_call.1} parent=1 // pred_fallthru
      _
    // Predicated region
    $region38: #{tpu_custom_call.1} parent=1 // pred_check
      _
    $region39: #{tpu_custom_call.1} parent=1 // pred_check_branch
      %56 = sbr.rel (0) target = $region41
    $region40: #{tpu_custom_call.1} parent=1 // pred_region
      %57 = dma.done [#allocation7], 256
    $region41: #{tpu_custom_call.1} parent=1 // pred_fallthru
      _
    // Predicated region
    $region42: #{tpu_custom_call.1} parent=1 // pred_check
      _
    $region43: #{tpu_custom_call.1} parent=1 // pred_check_branch
      %59 = sbr.rel (0) target = $region45
    $region44: #{tpu_custom_call.1} parent=1 // pred_region
      %60 = dma.done [#allocation10], 512
    $region45: #{tpu_custom_call.1} parent=1 // pred_fallthru
      _
    %v61 = vld [vmem:[%s0] sm:$0xff]
    %v62 = vld [vmem:[%s0 + $0x8] sm:$0xff]
    %v63 = vld [vmem:[%s0 + $0x10] sm:$0xff]
    %v64 = vld [vmem:[%s0 + $0x18] sm:$0xff]
    %v65 = vld [vmem:[%s0 + $0x20] sm:$0xff]
    %v66 = vld [vmem:[%s0 + $0x28] sm:$0xff]
    %v67 = vld [vmem:[%s0 + $0x30] sm:$0xff]
    %v68 = vld [vmem:[%s0 + $0x38] sm:$0xff]
    %v69 = vld [vmem:[#allocation6] sm:$0xff]
    %v70 = vld [vmem:[#allocation6 + $0x8] sm:$0xff]
    %v71 = vld [vmem:[%s3] sm:$0x1]
    %v73 = vlaneseq
    %v74 = vshrl.u32 %v73, 7
    %v75 = vsub.s32 0, %v74
    %v76 = vrot.slane %v71, %v75
    %vm78 = vcmask 130048
    %v80 = vsel %vm78, %v61, 0
    %v83 = vsel %vm78, %v62, 0
    %v86 = vsel %vm78, %v63, 0
    %v89 = vsel %vm78, %v64, 0
    %v92 = vsel %vm78, %v65, 0
    %v95 = vsel %vm78, %v66, 0
    %v98 = vsel %vm78, %v67, 0
    %v101 = vsel %vm78, %v68, 0
    %103 = vmatprep.subr.mxu0 0.0
    %104 = vmatpush1.msra.mxu0 %v69
    %105 = vmatprep.subr.mxu0 0.0
    %106 = vmatpush1.msra.mxu0 %v70
    %107 = vmatprep.subr.mxu0 0.0
    %108 = vmatpush1.msra.mxu0 0.0
    %109 = vmatprep.subr.mxu0 0.0
    %110 = vmatpush1.msra.mxu0 0.0
    %111 = vmatprep.subr.mxu0 0.0
    %112 = vmatpush1.msra.mxu0 0.0
    %113 = vmatprep.subr.mxu0 0.0
    %114 = vmatpush1.msra.mxu0 0.0
    %115 = vmatprep.subr.mxu0 0.0
    %116 = vmatpush1.msra.mxu0 0.0
    %117 = vmatprep.subr.mxu0 0.0
    %118 = vmatpush1.msra.mxu0 0.0
    %119 = vmatprep.subr.mxu0 0.0
    %120 = vmatpush1.msra.mxu0 0.0
    %121 = vmatprep.subr.mxu0 0.0
    %122 = vmatpush1.msra.mxu0 0.0
    %123 = vmatprep.subr.mxu0 0.0
    %124 = vmatpush1.msra.mxu0 0.0
    %125 = vmatprep.subr.mxu0 0.0
    %126 = vmatpush1.msra.mxu0 0.0
    %127 = vmatprep.subr.mxu0 0.0
    %128 = vmatpush1.msra.mxu0 0.0
    %129 = vmatprep.subr.mxu0 0.0
    %130 = vmatpush1.msra.mxu0 0.0
    %131 = vmatprep.subr.mxu0 0.0
    %132 = vmatpush1.msra.mxu0 0.0
    %133 = vmatprep.subr.mxu0 0.0
    %134 = vmatpush1.msra.mxu0 0.0
    %135 = vmatprep.subr.mxu0 0.0
    %136 = vmatpush1.msra.mxu0 0.0
    %137 = vmatprep.subr.mxu0 0.0
    %138 = vmatpush1.msra.mxu0 0.0
    %139 = vmatprep.subr.mxu0 0.0
    %140 = vmatpush1.msra.mxu0 0.0
    %141 = vmatprep.subr.mxu0 0.0
    %142 = vmatpush1.msra.mxu0 0.0
    %143 = vmatprep.subr.mxu0 0.0
    %144 = vmatpush1.msra.mxu0 0.0
    %145 = vmatprep.subr.mxu0 0.0
    %146 = vmatpush1.msra.mxu0 0.0
    %147 = vmatprep.subr.mxu0 0.0
    %148 = vmatpush1.msra.mxu0 0.0
    %149 = vmatprep.subr.mxu0 0.0
    %150 = vmatpush1.msra.mxu0 0.0
    %151 = vmatprep.subr.mxu0 0.0
    %152 = vmatpush1.msra.mxu0 0.0
    %153 = vmatprep.subr.mxu0 0.0
    %154 = vmatpush1.msra.mxu0 0.0
    %155 = vmatprep.subr.mxu0 0.0
    %156 = vmatpush1.msra.mxu0 0.0
    %157 = vmatprep.subr.mxu0 0.0
    %158 = vmatpush1.msra.mxu0 0.0
    %159 = vmatprep.subr.mxu0 0.0
    %160 = vmatpush1.msra.mxu0 0.0
    %161 = vmatprep.subr.mxu0 0.0
    %162 = vmatpush1.msra.mxu0 0.0
    %163 = vmatprep.subr.mxu0 0.0
    %164 = vmatpush1.msra.mxu0 0.0
    %165 = vmatprep.subr.mxu0 0.0
    %166 = vmatpush1.msra.mxu0 0.0
    %167 = vmatprep.mubr.f32.mxu0 0.0
    %168 = vmatmul.mubr.f32.gmra.mrb[0].mxu0 %v80
    %v169 = vpop.f32.mrb[0].mxu0
    %v170 = vadd.f32 %v76, %v169
    %v171 = vpop.f32.mrb[0].mxu0
    %172 = vmatprep.mubr.f32.mxu0 0.0
    %173 = vmatmul.mubr.f32.gmra.mrb[0].mxu0 %v83
    %v174 = vpop.f32.mrb[0].mxu0
    %v175 = vadd.f32 %v76, %v174
    %v176 = vpop.f32.mrb[0].mxu0
    %177 = vmatprep.mubr.f32.mxu0 0.0
    %178 = vmatmul.mubr.f32.gmra.mrb[0].mxu0 %v86
    %v179 = vpop.f32.mrb[0].mxu0
    %v180 = vadd.f32 %v76, %v179
    %v181 = vpop.f32.mrb[0].mxu0
    %182 = vmatprep.mubr.f32.mxu0 0.0
    %183 = vmatmul.mubr.f32.gmra.mrb[0].mxu0 %v89
    %v184 = vpop.f32.mrb[0].mxu0
    %v185 = vadd.f32 %v76, %v184
    %v186 = vpop.f32.mrb[0].mxu0
    %187 = vmatprep.mubr.f32.mxu0 0.0
    %188 = vmatmul.mubr.f32.gmra.mrb[0].mxu0 %v92
    %v189 = vpop.f32.mrb[0].mxu0
    %v190 = vadd.f32 %v76, %v189
    %v191 = vpop.f32.mrb[0].mxu0
    %192 = vmatprep.mubr.f32.mxu0 0.0
    %193 = vmatmul.mubr.f32.gmra.mrb[0].mxu0 %v95
    %v194 = vpop.f32.mrb[0].mxu0
    %v195 = vadd.f32 %v76, %v194
    %v196 = vpop.f32.mrb[0].mxu0
    %197 = vmatprep.mubr.f32.mxu0 0.0
    %198 = vmatmul.mubr.f32.gmra.mrb[0].mxu0 %v98
    %v199 = vpop.f32.mrb[0].mxu0
    %v200 = vadd.f32 %v76, %v199
    %v201 = vpop.f32.mrb[0].mxu0
    %202 = vmatprep.mubr.f32.mxu0 0.0
    %203 = vmatmul.mubr.f32.gmra.mrb[0].mxu0 %v101
    %v204 = vpop.f32.mrb[0].mxu0
    %v205 = vadd.f32 %v76, %v204
    %v206 = vpop.f32.mrb[0].mxu0
    %207 = vdwg.mxu0
    %208 = vst [vmem:[#allocation2] sm:$0xff] %v170
    %209 = vst [vmem:[#allocation2 + $0x8] sm:$0xff] %v175
    %210 = vst [vmem:[#allocation2 + $0x10] sm:$0xff] %v180
    %211 = vst [vmem:[#allocation2 + $0x18] sm:$0xff] %v185
    %212 = vst [vmem:[#allocation2 + $0x20] sm:$0xff] %v190
    %213 = vst [vmem:[#allocation2 + $0x28] sm:$0xff] %v195
    %214 = vst [vmem:[#allocation2 + $0x30] sm:$0xff] %v200
    %215 = vst [vmem:[#allocation2 + $0x38] sm:$0xff] %v205
    %vm216 = vcmask 261120
    %217 = vst.msk [vmem:[#allocation4] sm:$0xff] %vm216, 0.0
    %218 = vst.msk [vmem:[#allocation5] sm:$0xff] %vm216, 0.0
    %v219 = vld [vmem:[%s2] sm:$0xff]
    %v220 = vld [vmem:[%s2 + $0x8] sm:$0xff]
    %v221 = vld [vmem:[%s2 + $0x10] sm:$0xff]
    %v222 = vld [vmem:[%s2 + $0x18] sm:$0xff]
    %v223 = vld [vmem:[#allocation2] sm:$0xff]
    %v224 = vld [vmem:[#allocation4] sm:$0xff]
    %v226 = vsel %vm216, %v224, 0
    %228 = vmatprep.subr.mxu0 0.0
    %229 = vmatpush1.msra.mxu0 %v219
    %230 = vmatprep.subr.mxu0 0.0
    %231 = vmatpush1.msra.mxu0 %v220
    %232 = vmatprep.subr.mxu0 0.0
    %233 = vmatpush1.msra.mxu0 %v221
    %234 = vmatprep.subr.mxu0 0.0
    %235 = vmatpush1.msra.mxu0 %v222
    %236 = vmatprep.subr.mxu0 0.0
    %237 = vmatpush1.msra.mxu0 0.0
    %238 = vmatprep.subr.mxu0 0.0
    %239 = vmatpush1.msra.mxu0 0.0
    %240 = vmatprep.subr.mxu0 0.0
    %241 = vmatpush1.msra.mxu0 0.0
    %242 = vmatprep.subr.mxu0 0.0
    %243 = vmatpush1.msra.mxu0 0.0
    %244 = vmatprep.subr.mxu0 0.0
    %245 = vmatpush1.msra.mxu0 0.0
    %246 = vmatprep.subr.mxu0 0.0
    %247 = vmatpush1.msra.mxu0 0.0
    %248 = vmatprep.subr.mxu0 0.0
    %249 = vmatpush1.msra.mxu0 0.0
    %250 = vmatprep.subr.mxu0 0.0
    %251 = vmatpush1.msra.mxu0 0.0
    %252 = vmatprep.subr.mxu0 0.0
    %253 = vmatpush1.msra.mxu0 0.0
    %254 = vmatprep.subr.mxu0 0.0
    %255 = vmatpush1.msra.mxu0 0.0
    %256 = vmatprep.subr.mxu0 0.0
    %257 = vmatpush1.msra.mxu0 0.0
    %258 = vmatprep.subr.mxu0 0.0
    %259 = vmatpush1.msra.mxu0 0.0
    %260 = vmatprep.subr.mxu0 0.0
    %261 = vmatpush1.msra.mxu0 0.0
    %262 = vmatprep.subr.mxu0 0.0
    %263 = vmatpush1.msra.mxu0 0.0
    %264 = vmatprep.subr.mxu0 0.0
    %265 = vmatpush1.msra.mxu0 0.0
    %266 = vmatprep.subr.mxu0 0.0
    %267 = vmatpush1.msra.mxu0 0.0
    %268 = vmatprep.subr.mxu0 0.0
    %269 = vmatpush1.msra.mxu0 0.0
    %270 = vmatprep.subr.mxu0 0.0
    %271 = vmatpush1.msra.mxu0 0.0
    %272 = vmatprep.subr.mxu0 0.0
    %273 = vmatpush1.msra.mxu0 0.0
    %274 = vmatprep.subr.mxu0 0.0
    %275 = vmatpush1.msra.mxu0 0.0
    %276 = vmatprep.subr.mxu0 0.0
    %277 = vmatpush1.msra.mxu0 0.0
    %278 = vmatprep.subr.mxu0 0.0
    %279 = vmatpush1.msra.mxu0 0.0
    %280 = vmatprep.subr.mxu0 0.0
    %281 = vmatpush1.msra.mxu0 0.0
    %282 = vmatprep.subr.mxu0 0.0
    %283 = vmatpush1.msra.mxu0 0.0
    %284 = vmatprep.subr.mxu0 0.0
    %285 = vmatpush1.msra.mxu0 0.0
    %286 = vmatprep.subr.mxu0 0.0
    %287 = vmatpush1.msra.mxu0 0.0
    %288 = vmatprep.subr.mxu0 0.0
    %289 = vmatpush1.msra.mxu0 0.0
    %290 = vmatprep.subr.mxu0 0.0
    %291 = vmatpush1.msra.mxu0 0.0
    %292 = vmatprep.mubr.f32.mxu0 0.0
    %293 = vmatmul.mubr.f32.gmra.mrb[0].mxu0 %v226
    %v294 = vpop.f32.mrb[0].mxu0
    %v295 = vadd.f32 0.0, %v294
    %v296 = vpop.f32.mrb[0].mxu0
    %297 = vdwg.mxu0
    %v298 = vadd.f32 %v223, %v295
    %v299 = vxor.u32 %v298, 2147483648
    %v300 = vmul.f32 %v299, 1.442695
    %v301 = vpow.pop %v300
    %v302 = vadd.f32 %v301, 1.0
    %v303 = vrcp.pop %v302
    %v304 = vmul.f32 1.0, %v303
    %v305 = vtanh.pop %v298
    %v306 = vld [vmem:[#allocation5] sm:$0xff]
    %308 = vrot.lane.b32.xlu0 %v306, 32
    %v309 = vpop.permute.xlu0 %308
    %v311 = vmul.f32 %v304, %v309
    %313 = vrot.lane.b32.xlu0 %v305, 64
    %v314 = vpop.permute.xlu0 %313
    %v316 = vmul.f32 %v304, %v314
    %318 = vrot.lane.b32.xlu0 %v316, 32
    %v319 = vpop.permute.xlu0 %318
    %v321 = vadd.f32 %v311, %v319
    %v322 = vtanh.pop %v321
    %324 = vrot.lane.b32.xlu0 %v322, 64
    %v325 = vpop.permute.xlu0 %324
    %v327 = vmul.f32 %v304, %v325
    %329 = vrot.lane.b32.xlu0 %v321, 96
    %v330 = vpop.permute.xlu0 %329
    %332 = vst.msk [vmem:[#allocation5] sm:$0xff] %vm216, %v330
    %334 = vrot.lane.b32.xlu0 %v327, 32
    %v335 = vpop.permute.xlu0 %334
    %337 = vst.msk [vmem:[#allocation4] sm:$0xff] %vm216, %v335
    %338 = vst.msk [vmem:[#allocation3] sm:$0xff] %vm216, %v335
    %s339 = scalar_lea.vmem [#allocation2], 8
    %v340 = vld [vmem:[%s339] sm:$0xff]
    %v341 = vld [vmem:[#allocation4] sm:$0xff]
    %v343 = vsel %vm216, %v341, 0
    %345 = vmatprep.subr.mxu0 0.0
    %346 = vmatpush1.msra.mxu0 %v219
    %347 = vmatprep.subr.mxu0 0.0
    %348 = vmatpush1.msra.mxu0 %v220
    %349 = vmatprep.subr.mxu0 0.0
    %350 = vmatpush1.msra.mxu0 %v221
    %351 = vmatprep.subr.mxu0 0.0
    %352 = vmatpush1.msra.mxu0 %v222
    %353 = vmatprep.subr.mxu0 0.0
    %354 = vmatpush1.msra.mxu0 0.0
    %355 = vmatprep.subr.mxu0 0.0
    %356 = vmatpush1.msra.mxu0 0.0
    %357 = vmatprep.subr.mxu0 0.0
    %358 = vmatpush1.msra.mxu0 0.0
    %359 = vmatprep.subr.mxu0 0.0
    %360 = vmatpush1.msra.mxu0 0.0
    %361 = vmatprep.subr.mxu0 0.0
    %362 = vmatpush1.msra.mxu0 0.0
    %363 = vmatprep.subr.mxu0 0.0
    %364 = vmatpush1.msra.mxu0 0.0
    %365 = vmatprep.subr.mxu0 0.0
    %366 = vmatpush1.msra.mxu0 0.0
    %367 = vmatprep.subr.mxu0 0.0
    %368 = vmatpush1.msra.mxu0 0.0
    %369 = vmatprep.subr.mxu0 0.0
    %370 = vmatpush1.msra.mxu0 0.0
    %371 = vmatprep.subr.mxu0 0.0
    %372 = vmatpush1.msra.mxu0 0.0
    %373 = vmatprep.subr.mxu0 0.0
    %374 = vmatpush1.msra.mxu0 0.0
    %375 = vmatprep.subr.mxu0 0.0
    %376 = vmatpush1.msra.mxu0 0.0
    %377 = vmatprep.subr.mxu0 0.0
    %378 = vmatpush1.msra.mxu0 0.0
    %379 = vmatprep.subr.mxu0 0.0
    %380 = vmatpush1.msra.mxu0 0.0
    %381 = vmatprep.subr.mxu0 0.0
    %382 = vmatpush1.msra.mxu0 0.0
    %383 = vmatprep.subr.mxu0 0.0
    %384 = vmatpush1.msra.mxu0 0.0
    %385 = vmatprep.subr.mxu0 0.0
    %386 = vmatpush1.msra.mxu0 0.0
    %387 = vmatprep.subr.mxu0 0.0
    %388 = vmatpush1.msra.mxu0 0.0
    %389 = vmatprep.subr.mxu0 0.0
    %390 = vmatpush1.msra.mxu0 0.0
    %391 = vmatprep.subr.mxu0 0.0
    %392 = vmatpush1.msra.mxu0 0.0
    %393 = vmatprep.subr.mxu0 0.0
    %394 = vmatpush1.msra.mxu0 0.0
    %395 = vmatprep.subr.mxu0 0.0
    %396 = vmatpush1.msra.mxu0 0.0
    %397 = vmatprep.subr.mxu0 0.0
    %398 = vmatpush1.msra.mxu0 0.0
    %399 = vmatprep.subr.mxu0 0.0
    %400 = vmatpush1.msra.mxu0 0.0
    %401 = vmatprep.subr.mxu0 0.0
    %402 = vmatpush1.msra.mxu0 0.0
    %403 = vmatprep.subr.mxu0 0.0
    %404 = vmatpush1.msra.mxu0 0.0
    %405 = vmatprep.subr.mxu0 0.0
    %406 = vmatpush1.msra.mxu0 0.0
    %407 = vmatprep.subr.mxu0 0.0
    %408 = vmatpush1.msra.mxu0 0.0
    %409 = vmatprep.mubr.f32.mxu0 0.0
    %410 = vmatmul.mubr.f32.gmra.mrb[0].mxu0 %v343
    %v411 = vpop.f32.mrb[0].mxu0
    %v412 = vadd.f32 0.0, %v411
    %v413 = vpop.f32.mrb[0].mxu0
    %414 = vdwg.mxu0
    %v415 = vadd.f32 %v340, %v412
    %v416 = vxor.u32 %v415, 2147483648
    %v417 = vmul.f32 %v416, 1.442695
    %v418 = vpow.pop %v417
    %v419 = vadd.f32 %v418, 1.0
    %v420 = vrcp.pop %v419
    %v421 = vmul.f32 1.0, %v420
    %v422 = vtanh.pop %v415
    %v423 = vld [vmem:[#allocation5] sm:$0xff]
    %425 = vrot.lane.b32.xlu0 %v423, 32
    %v426 = vpop.permute.xlu0 %425
    %v428 = vmul.f32 %v421, %v426
    %430 = vrot.lane.b32.xlu0 %v422, 64
    %v431 = vpop.permute.xlu0 %430
    %v433 = vmul.f32 %v421, %v431
    %435 = vrot.lane.b32.xlu0 %v433, 32
    %v436 = vpop.permute.xlu0 %435
    %v438 = vadd.f32 %v428, %v436
    %v439 = vtanh.pop %v438
    %441 = vrot.lane.b32.xlu0 %v439, 64
    %v442 = vpop.permute.xlu0 %441
    %v444 = vmul.f32 %v421, %v442
    %446 = vrot.lane.b32.xlu0 %v438, 96
    %v447 = vpop.permute.xlu0 %446
    %449 = vst.msk [vmem:[#allocation5] sm:$0xff] %vm216, %v447
    %451 = vrot.lane.b32.xlu0 %v444, 32
    %v452 = vpop.permute.xlu0 %451
    %454 = vst.msk [vmem:[#allocation4] sm:$0xff] %vm216, %v452
    %s455 = scalar_lea.vmem [#allocation3], 8
    %456 = vst.msk [vmem:[%s455] sm:$0xff] %vm216, %v452
    %s457 = scalar_lea.vmem [#allocation2], 16
    %v458 = vld [vmem:[%s457] sm:$0xff]
    %v459 = vld [vmem:[#allocation4] sm:$0xff]
    %v461 = vsel %vm216, %v459, 0
    %463 = vmatprep.subr.mxu0 0.0
    %464 = vmatpush1.msra.mxu0 %v219
    %465 = vmatprep.subr.mxu0 0.0
    %466 = vmatpush1.msra.mxu0 %v220
    %467 = vmatprep.subr.mxu0 0.0
    %468 = vmatpush1.msra.mxu0 %v221
    %469 = vmatprep.subr.mxu0 0.0
    %470 = vmatpush1.msra.mxu0 %v222
    %471 = vmatprep.subr.mxu0 0.0
    %472 = vmatpush1.msra.mxu0 0.0
    %473 = vmatprep.subr.mxu0 0.0
    %474 = vmatpush1.msra.mxu0 0.0
    %475 = vmatprep.subr.mxu0 0.0
    %476 = vmatpush1.msra.mxu0 0.0
    %477 = vmatprep.subr.mxu0 0.0
    %478 = vmatpush1.msra.mxu0 0.0
    %479 = vmatprep.subr.mxu0 0.0
    %480 = vmatpush1.msra.mxu0 0.0
    %481 = vmatprep.subr.mxu0 0.0
    %482 = vmatpush1.msra.mxu0 0.0
    %483 = vmatprep.subr.mxu0 0.0
    %484 = vmatpush1.msra.mxu0 0.0
    %485 = vmatprep.subr.mxu0 0.0
    %486 = vmatpush1.msra.mxu0 0.0
    %487 = vmatprep.subr.mxu0 0.0
    %488 = vmatpush1.msra.mxu0 0.0
    %489 = vmatprep.subr.mxu0 0.0
    %490 = vmatpush1.msra.mxu0 0.0
    %491 = vmatprep.subr.mxu0 0.0
    %492 = vmatpush1.msra.mxu0 0.0
    %493 = vmatprep.subr.mxu0 0.0
    %494 = vmatpush1.msra.mxu0 0.0
    %495 = vmatprep.subr.mxu0 0.0
    %496 = vmatpush1.msra.mxu0 0.0
    %497 = vmatprep.subr.mxu0 0.0
    %498 = vmatpush1.msra.mxu0 0.0
    %499 = vmatprep.subr.mxu0 0.0
    %500 = vmatpush1.msra.mxu0 0.0
    %501 = vmatprep.subr.mxu0 0.0
    %502 = vmatpush1.msra.mxu0 0.0
    %503 = vmatprep.subr.mxu0 0.0
    %504 = vmatpush1.msra.mxu0 0.0
    %505 = vmatprep.subr.mxu0 0.0
    %506 = vmatpush1.msra.mxu0 0.0
    %507 = vmatprep.subr.mxu0 0.0
    %508 = vmatpush1.msra.mxu0 0.0
    %509 = vmatprep.subr.mxu0 0.0
    %510 = vmatpush1.msra.mxu0 0.0
    %511 = vmatprep.subr.mxu0 0.0
    %512 = vmatpush1.msra.mxu0 0.0
    %513 = vmatprep.subr.mxu0 0.0
    %514 = vmatpush1.msra.mxu0 0.0
    %515 = vmatprep.subr.mxu0 0.0
    %516 = vmatpush1.msra.mxu0 0.0
    %517 = vmatprep.subr.mxu0 0.0
    %518 = vmatpush1.msra.mxu0 0.0
    %519 = vmatprep.subr.mxu0 0.0
    %520 = vmatpush1.msra.mxu0 0.0
    %521 = vmatprep.subr.mxu0 0.0
    %522 = vmatpush1.msra.mxu0 0.0
    %523 = vmatprep.subr.mxu0 0.0
    %524 = vmatpush1.msra.mxu0 0.0
    %525 = vmatprep.subr.mxu0 0.0
    %526 = vmatpush1.msra.mxu0 0.0
    %527 = vmatprep.mubr.f32.mxu0 0.0
    %528 = vmatmul.mubr.f32.gmra.mrb[0].mxu0 %v461
    %v529 = vpop.f32.mrb[0].mxu0
    %v530 = vadd.f32 0.0, %v529
    %v531 = vpop.f32.mrb[0].mxu0
    %532 = vdwg.mxu0
    %v533 = vadd.f32 %v458, %v530
    %v534 = vxor.u32 %v533, 2147483648
    %v535 = vmul.f32 %v534, 1.442695
    %v536 = vpow.pop %v535
    %v537 = vadd.f32 %v536, 1.0
    %v538 = vrcp.pop %v537
    %v539 = vmul.f32 1.0, %v538
    %v540 = vtanh.pop %v533
    %v541 = vld [vmem:[#allocation5] sm:$0xff]
    %543 = vrot.lane.b32.xlu0 %v541, 32
    %v544 = vpop.permute.xlu0 %543
    %v546 = vmul.f32 %v539, %v544
    %548 = vrot.lane.b32.xlu0 %v540, 64
    %v549 = vpop.permute.xlu0 %548
    %v551 = vmul.f32 %v539, %v549
    %553 = vrot.lane.b32.xlu0 %v551, 32
    %v554 = vpop.permute.xlu0 %553
    %v556 = vadd.f32 %v546, %v554
    %v557 = vtanh.pop %v556
    %559 = vrot.lane.b32.xlu0 %v557, 64
    %v560 = vpop.permute.xlu0 %559
    %v562 = vmul.f32 %v539, %v560
    %564 = vrot.lane.b32.xlu0 %v556, 96
    %v565 = vpop.permute.xlu0 %564
    %567 = vst.msk [vmem:[#allocation5] sm:$0xff] %vm216, %v565
    %569 = vrot.lane.b32.xlu0 %v562, 32
    %v570 = vpop.permute.xlu0 %569
    %572 = vst.msk [vmem:[#allocation4] sm:$0xff] %vm216, %v570
    %s573 = scalar_lea.vmem [#allocation3], 16
    %574 = vst.msk [vmem:[%s573] sm:$0xff] %vm216, %v570
    %s575 = scalar_lea.vmem [#allocation2], 24
    %v576 = vld [vmem:[%s575] sm:$0xff]
    %v577 = vld [vmem:[#allocation4] sm:$0xff]
    %v579 = vsel %vm216, %v577, 0
    %581 = vmatprep.subr.mxu0 0.0
    %582 = vmatpush1.msra.mxu0 %v219
    %583 = vmatprep.subr.mxu0 0.0
    %584 = vmatpush1.msra.mxu0 %v220
    %585 = vmatprep.subr.mxu0 0.0
    %586 = vmatpush1.msra.mxu0 %v221
    %587 = vmatprep.subr.mxu0 0.0
    %588 = vmatpush1.msra.mxu0 %v222
    %589 = vmatprep.subr.mxu0 0.0
    %590 = vmatpush1.msra.mxu0 0.0
    %591 = vmatprep.subr.mxu0 0.0
    %592 = vmatpush1.msra.mxu0 0.0
    %593 = vmatprep.subr.mxu0 0.0
    %594 = vmatpush1.msra.mxu0 0.0
    %595 = vmatprep.subr.mxu0 0.0
    %596 = vmatpush1.msra.mxu0 0.0
    %597 = vmatprep.subr.mxu0 0.0
    %598 = vmatpush1.msra.mxu0 0.0
    %599 = vmatprep.subr.mxu0 0.0
    %600 = vmatpush1.msra.mxu0 0.0
    %601 = vmatprep.subr.mxu0 0.0
    %602 = vmatpush1.msra.mxu0 0.0
    %603 = vmatprep.subr.mxu0 0.0
    %604 = vmatpush1.msra.mxu0 0.0
    %605 = vmatprep.subr.mxu0 0.0
    %606 = vmatpush1.msra.mxu0 0.0
    %607 = vmatprep.subr.mxu0 0.0
    %608 = vmatpush1.msra.mxu0 0.0
    %609 = vmatprep.subr.mxu0 0.0
    %610 = vmatpush1.msra.mxu0 0.0
    %611 = vmatprep.subr.mxu0 0.0
    %612 = vmatpush1.msra.mxu0 0.0
    %613 = vmatprep.subr.mxu0 0.0
    %614 = vmatpush1.msra.mxu0 0.0
    %615 = vmatprep.subr.mxu0 0.0
    %616 = vmatpush1.msra.mxu0 0.0
    %617 = vmatprep.subr.mxu0 0.0
    %618 = vmatpush1.msra.mxu0 0.0
    %619 = vmatprep.subr.mxu0 0.0
    %620 = vmatpush1.msra.mxu0 0.0
    %621 = vmatprep.subr.mxu0 0.0
    %622 = vmatpush1.msra.mxu0 0.0
    %623 = vmatprep.subr.mxu0 0.0
    %624 = vmatpush1.msra.mxu0 0.0
    %625 = vmatprep.subr.mxu0 0.0
    %626 = vmatpush1.msra.mxu0 0.0
    %627 = vmatprep.subr.mxu0 0.0
    %628 = vmatpush1.msra.mxu0 0.0
    %629 = vmatprep.subr.mxu0 0.0
    %630 = vmatpush1.msra.mxu0 0.0
    %631 = vmatprep.subr.mxu0 0.0
    %632 = vmatpush1.msra.mxu0 0.0
    %633 = vmatprep.subr.mxu0 0.0
    %634 = vmatpush1.msra.mxu0 0.0
    %635 = vmatprep.subr.mxu0 0.0
    %636 = vmatpush1.msra.mxu0 0.0
    %637 = vmatprep.subr.mxu0 0.0
    %638 = vmatpush1.msra.mxu0 0.0
    %639 = vmatprep.subr.mxu0 0.0
    %640 = vmatpush1.msra.mxu0 0.0
    %641 = vmatprep.subr.mxu0 0.0
    %642 = vmatpush1.msra.mxu0 0.0
    %643 = vmatprep.subr.mxu0 0.0
    %644 = vmatpush1.msra.mxu0 0.0
    %645 = vmatprep.mubr.f32.mxu0 0.0
    %646 = vmatmul.mubr.f32.gmra.mrb[0].mxu0 %v579
    %v647 = vpop.f32.mrb[0].mxu0
    %v648 = vadd.f32 0.0, %v647
    %v649 = vpop.f32.mrb[0].mxu0
    %650 = vdwg.mxu0
    %v651 = vadd.f32 %v576, %v648
    %v652 = vxor.u32 %v651, 2147483648
    %v653 = vmul.f32 %v652, 1.442695
    %v654 = vpow.pop %v653
    %v655 = vadd.f32 %v654, 1.0
    %v656 = vrcp.pop %v655
    %v657 = vmul.f32 1.0, %v656
    %v658 = vtanh.pop %v651
    %v659 = vld [vmem:[#allocation5] sm:$0xff]
    %661 = vrot.lane.b32.xlu0 %v659, 32
    %v662 = vpop.permute.xlu0 %661
    %v664 = vmul.f32 %v657, %v662
    %666 = vrot.lane.b32.xlu0 %v658, 64
    %v667 = vpop.permute.xlu0 %666
    %v669 = vmul.f32 %v657, %v667
    %671 = vrot.lane.b32.xlu0 %v669, 32
    %v672 = vpop.permute.xlu0 %671
    %v674 = vadd.f32 %v664, %v672
    %v675 = vtanh.pop %v674
    %677 = vrot.lane.b32.xlu0 %v675, 64
    %v678 = vpop.permute.xlu0 %677
    %v680 = vmul.f32 %v657, %v678
    %682 = vrot.lane.b32.xlu0 %v674, 96
    %v683 = vpop.permute.xlu0 %682
    %685 = vst.msk [vmem:[#allocation5] sm:$0xff] %vm216, %v683
    %687 = vrot.lane.b32.xlu0 %v680, 32
    %v688 = vpop.permute.xlu0 %687
    %690 = vst.msk [vmem:[#allocation4] sm:$0xff] %vm216, %v688
    %s691 = scalar_lea.vmem [#allocation3], 24
    %692 = vst.msk [vmem:[%s691] sm:$0xff] %vm216, %v688
    %s693 = scalar_lea.vmem [#allocation2], 32
    %v694 = vld [vmem:[%s693] sm:$0xff]
    %v695 = vld [vmem:[#allocation4] sm:$0xff]
    %v697 = vsel %vm216, %v695, 0
    %699 = vmatprep.subr.mxu0 0.0
    %700 = vmatpush1.msra.mxu0 %v219
    %701 = vmatprep.subr.mxu0 0.0
    %702 = vmatpush1.msra.mxu0 %v220
    %703 = vmatprep.subr.mxu0 0.0
    %704 = vmatpush1.msra.mxu0 %v221
    %705 = vmatprep.subr.mxu0 0.0
    %706 = vmatpush1.msra.mxu0 %v222
    %707 = vmatprep.subr.mxu0 0.0
    %708 = vmatpush1.msra.mxu0 0.0
    %709 = vmatprep.subr.mxu0 0.0
    %710 = vmatpush1.msra.mxu0 0.0
    %711 = vmatprep.subr.mxu0 0.0
    %712 = vmatpush1.msra.mxu0 0.0
    %713 = vmatprep.subr.mxu0 0.0
    %714 = vmatpush1.msra.mxu0 0.0
    %715 = vmatprep.subr.mxu0 0.0
    %716 = vmatpush1.msra.mxu0 0.0
    %717 = vmatprep.subr.mxu0 0.0
    %718 = vmatpush1.msra.mxu0 0.0
    %719 = vmatprep.subr.mxu0 0.0
    %720 = vmatpush1.msra.mxu0 0.0
    %721 = vmatprep.subr.mxu0 0.0
    %722 = vmatpush1.msra.mxu0 0.0
    %723 = vmatprep.subr.mxu0 0.0
    %724 = vmatpush1.msra.mxu0 0.0
    %725 = vmatprep.subr.mxu0 0.0
    %726 = vmatpush1.msra.mxu0 0.0
    %727 = vmatprep.subr.mxu0 0.0
    %728 = vmatpush1.msra.mxu0 0.0
    %729 = vmatprep.subr.mxu0 0.0
    %730 = vmatpush1.msra.mxu0 0.0
    %731 = vmatprep.subr.mxu0 0.0
    %732 = vmatpush1.msra.mxu0 0.0
    %733 = vmatprep.subr.mxu0 0.0
    %734 = vmatpush1.msra.mxu0 0.0
    %735 = vmatprep.subr.mxu0 0.0
    %736 = vmatpush1.msra.mxu0 0.0
    %737 = vmatprep.subr.mxu0 0.0
    %738 = vmatpush1.msra.mxu0 0.0
    %739 = vmatprep.subr.mxu0 0.0
    %740 = vmatpush1.msra.mxu0 0.0
    %741 = vmatprep.subr.mxu0 0.0
    %742 = vmatpush1.msra.mxu0 0.0
    %743 = vmatprep.subr.mxu0 0.0
    %744 = vmatpush1.msra.mxu0 0.0
    %745 = vmatprep.subr.mxu0 0.0
    %746 = vmatpush1.msra.mxu0 0.0
    %747 = vmatprep.subr.mxu0 0.0
    %748 = vmatpush1.msra.mxu0 0.0
    %749 = vmatprep.subr.mxu0 0.0
    %750 = vmatpush1.msra.mxu0 0.0
    %751 = vmatprep.subr.mxu0 0.0
    %752 = vmatpush1.msra.mxu0 0.0
    %753 = vmatprep.subr.mxu0 0.0
    %754 = vmatpush1.msra.mxu0 0.0
    %755 = vmatprep.subr.mxu0 0.0
    %756 = vmatpush1.msra.mxu0 0.0
    %757 = vmatprep.subr.mxu0 0.0
    %758 = vmatpush1.msra.mxu0 0.0
    %759 = vmatprep.subr.mxu0 0.0
    %760 = vmatpush1.msra.mxu0 0.0
    %761 = vmatprep.subr.mxu0 0.0
    %762 = vmatpush1.msra.mxu0 0.0
    %763 = vmatprep.mubr.f32.mxu0 0.0
    %764 = vmatmul.mubr.f32.gmra.mrb[0].mxu0 %v697
    %v765 = vpop.f32.mrb[0].mxu0
    %v766 = vadd.f32 0.0, %v765
    %v767 = vpop.f32.mrb[0].mxu0
    %768 = vdwg.mxu0
    %v769 = vadd.f32 %v694, %v766
    %v770 = vxor.u32 %v769, 2147483648
    %v771 = vmul.f32 %v770, 1.442695
    %v772 = vpow.pop %v771
    %v773 = vadd.f32 %v772, 1.0
    %v774 = vrcp.pop %v773
    %v775 = vmul.f32 1.0, %v774
    %v776 = vtanh.pop %v769
    %v777 = vld [vmem:[#allocation5] sm:$0xff]
    %779 = vrot.lane.b32.xlu0 %v777, 32
    %v780 = vpop.permute.xlu0 %779
    %v782 = vmul.f32 %v775, %v780
    %784 = vrot.lane.b32.xlu0 %v776, 64
    %v785 = vpop.permute.xlu0 %784
    %v787 = vmul.f32 %v775, %v785
    %789 = vrot.lane.b32.xlu0 %v787, 32
    %v790 = vpop.permute.xlu0 %789
    %v792 = vadd.f32 %v782, %v790
    %v793 = vtanh.pop %v792
    %795 = vrot.lane.b32.xlu0 %v793, 64
    %v796 = vpop.permute.xlu0 %795
    %v798 = vmul.f32 %v775, %v796
    %800 = vrot.lane.b32.xlu0 %v792, 96
    %v801 = vpop.permute.xlu0 %800
    %803 = vst.msk [vmem:[#allocation5] sm:$0xff] %vm216, %v801
    %805 = vrot.lane.b32.xlu0 %v798, 32
    %v806 = vpop.permute.xlu0 %805
    %808 = vst.msk [vmem:[#allocation4] sm:$0xff] %vm216, %v806
    %s809 = scalar_lea.vmem [#allocation3], 32
    %810 = vst.msk [vmem:[%s809] sm:$0xff] %vm216, %v806
    %s811 = scalar_lea.vmem [#allocation2], 40
    %v812 = vld [vmem:[%s811] sm:$0xff]
    %v813 = vld [vmem:[#allocation4] sm:$0xff]
    %v815 = vsel %vm216, %v813, 0
    %817 = vmatprep.subr.mxu0 0.0
    %818 = vmatpush1.msra.mxu0 %v219
    %819 = vmatprep.subr.mxu0 0.0
    %820 = vmatpush1.msra.mxu0 %v220
    %821 = vmatprep.subr.mxu0 0.0
    %822 = vmatpush1.msra.mxu0 %v221
    %823 = vmatprep.subr.mxu0 0.0
    %824 = vmatpush1.msra.mxu0 %v222
    %825 = vmatprep.subr.mxu0 0.0
    %826 = vmatpush1.msra.mxu0 0.0
    %827 = vmatprep.subr.mxu0 0.0
    %828 = vmatpush1.msra.mxu0 0.0
    %829 = vmatprep.subr.mxu0 0.0
    %830 = vmatpush1.msra.mxu0 0.0
    %831 = vmatprep.subr.mxu0 0.0
    %832 = vmatpush1.msra.mxu0 0.0
    %833 = vmatprep.subr.mxu0 0.0
    %834 = vmatpush1.msra.mxu0 0.0
    %835 = vmatprep.subr.mxu0 0.0
    %836 = vmatpush1.msra.mxu0 0.0
    %837 = vmatprep.subr.mxu0 0.0
    %838 = vmatpush1.msra.mxu0 0.0
    %839 = vmatprep.subr.mxu0 0.0
    %840 = vmatpush1.msra.mxu0 0.0
    %841 = vmatprep.subr.mxu0 0.0
    %842 = vmatpush1.msra.mxu0 0.0
    %843 = vmatprep.subr.mxu0 0.0
    %844 = vmatpush1.msra.mxu0 0.0
    %845 = vmatprep.subr.mxu0 0.0
    %846 = vmatpush1.msra.mxu0 0.0
    %847 = vmatprep.subr.mxu0 0.0
    %848 = vmatpush1.msra.mxu0 0.0
    %849 = vmatprep.subr.mxu0 0.0
    %850 = vmatpush1.msra.mxu0 0.0
    %851 = vmatprep.subr.mxu0 0.0
    %852 = vmatpush1.msra.mxu0 0.0
    %853 = vmatprep.subr.mxu0 0.0
    %854 = vmatpush1.msra.mxu0 0.0
    %855 = vmatprep.subr.mxu0 0.0
    %856 = vmatpush1.msra.mxu0 0.0
    %857 = vmatprep.subr.mxu0 0.0
    %858 = vmatpush1.msra.mxu0 0.0
    %859 = vmatprep.subr.mxu0 0.0
    %860 = vmatpush1.msra.mxu0 0.0
    %861 = vmatprep.subr.mxu0 0.0
    %862 = vmatpush1.msra.mxu0 0.0
    %863 = vmatprep.subr.mxu0 0.0
    %864 = vmatpush1.msra.mxu0 0.0
    %865 = vmatprep.subr.mxu0 0.0
    %866 = vmatpush1.msra.mxu0 0.0
    %867 = vmatprep.subr.mxu0 0.0
    %868 = vmatpush1.msra.mxu0 0.0
    %869 = vmatprep.subr.mxu0 0.0
    %870 = vmatpush1.msra.mxu0 0.0
    %871 = vmatprep.subr.mxu0 0.0
    %872 = vmatpush1.msra.mxu0 0.0
    %873 = vmatprep.subr.mxu0 0.0
    %874 = vmatpush1.msra.mxu0 0.0
    %875 = vmatprep.subr.mxu0 0.0
    %876 = vmatpush1.msra.mxu0 0.0
    %877 = vmatprep.subr.mxu0 0.0
    %878 = vmatpush1.msra.mxu0 0.0
    %879 = vmatprep.subr.mxu0 0.0
    %880 = vmatpush1.msra.mxu0 0.0
    %881 = vmatprep.mubr.f32.mxu0 0.0
    %882 = vmatmul.mubr.f32.gmra.mrb[0].mxu0 %v815
    %v883 = vpop.f32.mrb[0].mxu0
    %v884 = vadd.f32 0.0, %v883
    %v885 = vpop.f32.mrb[0].mxu0
    %886 = vdwg.mxu0
    %v887 = vadd.f32 %v812, %v884
    %v888 = vxor.u32 %v887, 2147483648
    %v889 = vmul.f32 %v888, 1.442695
    %v890 = vpow.pop %v889
    %v891 = vadd.f32 %v890, 1.0
    %v892 = vrcp.pop %v891
    %v893 = vmul.f32 1.0, %v892
    %v894 = vtanh.pop %v887
    %v895 = vld [vmem:[#allocation5] sm:$0xff]
    %897 = vrot.lane.b32.xlu0 %v895, 32
    %v898 = vpop.permute.xlu0 %897
    %v900 = vmul.f32 %v893, %v898
    %902 = vrot.lane.b32.xlu0 %v894, 64
    %v903 = vpop.permute.xlu0 %902
    %v905 = vmul.f32 %v893, %v903
    %907 = vrot.lane.b32.xlu0 %v905, 32
    %v908 = vpop.permute.xlu0 %907
    %v910 = vadd.f32 %v900, %v908
    %v911 = vtanh.pop %v910
    %913 = vrot.lane.b32.xlu0 %v911, 64
    %v914 = vpop.permute.xlu0 %913
    %v916 = vmul.f32 %v893, %v914
    %918 = vrot.lane.b32.xlu0 %v910, 96
    %v919 = vpop.permute.xlu0 %918
    %921 = vst.msk [vmem:[#allocation5] sm:$0xff] %vm216, %v919
    %923 = vrot.lane.b32.xlu0 %v916, 32
    %v924 = vpop.permute.xlu0 %923
    %926 = vst.msk [vmem:[#allocation4] sm:$0xff] %vm216, %v924
    %s927 = scalar_lea.vmem [#allocation3], 40
    %928 = vst.msk [vmem:[%s927] sm:$0xff] %vm216, %v924
    %s929 = scalar_lea.vmem [#allocation2], 48
    %v930 = vld [vmem:[%s929] sm:$0xff]
    %v931 = vld [vmem:[#allocation4] sm:$0xff]
    %v933 = vsel %vm216, %v931, 0
    %935 = vmatprep.subr.mxu0 0.0
    %936 = vmatpush1.msra.mxu0 %v219
    %937 = vmatprep.subr.mxu0 0.0
    %938 = vmatpush1.msra.mxu0 %v220
    %939 = vmatprep.subr.mxu0 0.0
    %940 = vmatpush1.msra.mxu0 %v221
    %941 = vmatprep.subr.mxu0 0.0
    %942 = vmatpush1.msra.mxu0 %v222
    %943 = vmatprep.subr.mxu0 0.0
    %944 = vmatpush1.msra.mxu0 0.0
    %945 = vmatprep.subr.mxu0 0.0
    %946 = vmatpush1.msra.mxu0 0.0
    %947 = vmatprep.subr.mxu0 0.0
    %948 = vmatpush1.msra.mxu0 0.0
    %949 = vmatprep.subr.mxu0 0.0
    %950 = vmatpush1.msra.mxu0 0.0
    %951 = vmatprep.subr.mxu0 0.0
    %952 = vmatpush1.msra.mxu0 0.0
    %953 = vmatprep.subr.mxu0 0.0
    %954 = vmatpush1.msra.mxu0 0.0
    %955 = vmatprep.subr.mxu0 0.0
    %956 = vmatpush1.msra.mxu0 0.0
    %957 = vmatprep.subr.mxu0 0.0
    %958 = vmatpush1.msra.mxu0 0.0
    %959 = vmatprep.subr.mxu0 0.0
    %960 = vmatpush1.msra.mxu0 0.0
    %961 = vmatprep.subr.mxu0 0.0
    %962 = vmatpush1.msra.mxu0 0.0
    %963 = vmatprep.subr.mxu0 0.0
    %964 = vmatpush1.msra.mxu0 0.0
    %965 = vmatprep.subr.mxu0 0.0
    %966 = vmatpush1.msra.mxu0 0.0
    %967 = vmatprep.subr.mxu0 0.0
    %968 = vmatpush1.msra.mxu0 0.0
    %969 = vmatprep.subr.mxu0 0.0
    %970 = vmatpush1.msra.mxu0 0.0
    %971 = vmatprep.subr.mxu0 0.0
    %972 = vmatpush1.msra.mxu0 0.0
    %973 = vmatprep.subr.mxu0 0.0
    %974 = vmatpush1.msra.mxu0 0.0
    %975 = vmatprep.subr.mxu0 0.0
    %976 = vmatpush1.msra.mxu0 0.0
    %977 = vmatprep.subr.mxu0 0.0
    %978 = vmatpush1.msra.mxu0 0.0
    %979 = vmatprep.subr.mxu0 0.0
    %980 = vmatpush1.msra.mxu0 0.0
    %981 = vmatprep.subr.mxu0 0.0
    %982 = vmatpush1.msra.mxu0 0.0
    %983 = vmatprep.subr.mxu0 0.0
    %984 = vmatpush1.msra.mxu0 0.0
    %985 = vmatprep.subr.mxu0 0.0
    %986 = vmatpush1.msra.mxu0 0.0
    %987 = vmatprep.subr.mxu0 0.0
    %988 = vmatpush1.msra.mxu0 0.0
    %989 = vmatprep.subr.mxu0 0.0
    %990 = vmatpush1.msra.mxu0 0.0
    %991 = vmatprep.subr.mxu0 0.0
    %992 = vmatpush1.msra.mxu0 0.0
    %993 = vmatprep.subr.mxu0 0.0
    %994 = vmatpush1.msra.mxu0 0.0
    %995 = vmatprep.subr.mxu0 0.0
    %996 = vmatpush1.msra.mxu0 0.0
    %997 = vmatprep.subr.mxu0 0.0
    %998 = vmatpush1.msra.mxu0 0.0
    %999 = vmatprep.mubr.f32.mxu0 0.0
    %1000 = vmatmul.mubr.f32.gmra.mrb[0].mxu0 %v933
    %v1001 = vpop.f32.mrb[0].mxu0
    %v1002 = vadd.f32 0.0, %v1001
    %v1003 = vpop.f32.mrb[0].mxu0
    %1004 = vdwg.mxu0
    %v1005 = vadd.f32 %v930, %v1002
    %v1006 = vxor.u32 %v1005, 2147483648
    %v1007 = vmul.f32 %v1006, 1.442695
    %v1008 = vpow.pop %v1007
    %v1009 = vadd.f32 %v1008, 1.0
    %v1010 = vrcp.pop %v1009
    %v1011 = vmul.f32 1.0, %v1010
    %v1012 = vtanh.pop %v1005
    %v1013 = vld [vmem:[#allocation5] sm:$0xff]
    %1015 = vrot.lane.b32.xlu0 %v1013, 32
    %v1016 = vpop.permute.xlu0 %1015
    %v1018 = vmul.f32 %v1011, %v1016
    %1020 = vrot.lane.b32.xlu0 %v1012, 64
    %v1021 = vpop.permute.xlu0 %1020
    %v1023 = vmul.f32 %v1011, %v1021
    %1025 = vrot.lane.b32.xlu0 %v1023, 32
    %v1026 = vpop.permute.xlu0 %1025
    %v1028 = vadd.f32 %v1018, %v1026
    %v1029 = vtanh.pop %v1028
    %1031 = vrot.lane.b32.xlu0 %v1029, 64
    %v1032 = vpop.permute.xlu0 %1031
    %v1034 = vmul.f32 %v1011, %v1032
    %1036 = vrot.lane.b32.xlu0 %v1028, 96
    %v1037 = vpop.permute.xlu0 %1036
    %1039 = vst.msk [vmem:[#allocation5] sm:$0xff] %vm216, %v1037
    %1041 = vrot.lane.b32.xlu0 %v1034, 32
    %v1042 = vpop.permute.xlu0 %1041
    %1044 = vst.msk [vmem:[#allocation4] sm:$0xff] %vm216, %v1042
    %s1045 = scalar_lea.vmem [#allocation3], 48
    %1046 = vst.msk [vmem:[%s1045] sm:$0xff] %vm216, %v1042
    %s1047 = scalar_lea.vmem [#allocation2], 56
    %v1048 = vld [vmem:[%s1047] sm:$0xff]
    %v1049 = vld [vmem:[#allocation4] sm:$0xff]
    %v1051 = vsel %vm216, %v1049, 0
    %1053 = vmatprep.subr.mxu0 0.0
    %1054 = vmatpush1.msra.mxu0 %v219
    %1055 = vmatprep.subr.mxu0 0.0
    %1056 = vmatpush1.msra.mxu0 %v220
    %1057 = vmatprep.subr.mxu0 0.0
    %1058 = vmatpush1.msra.mxu0 %v221
    %1059 = vmatprep.subr.mxu0 0.0
    %1060 = vmatpush1.msra.mxu0 %v222
    %1061 = vmatprep.subr.mxu0 0.0
    %1062 = vmatpush1.msra.mxu0 0.0
    %1063 = vmatprep.subr.mxu0 0.0
    %1064 = vmatpush1.msra.mxu0 0.0
    %1065 = vmatprep.subr.mxu0 0.0
    %1066 = vmatpush1.msra.mxu0 0.0
    %1067 = vmatprep.subr.mxu0 0.0
    %1068 = vmatpush1.msra.mxu0 0.0
    %1069 = vmatprep.subr.mxu0 0.0
    %1070 = vmatpush1.msra.mxu0 0.0
    %1071 = vmatprep.subr.mxu0 0.0
    %1072 = vmatpush1.msra.mxu0 0.0
    %1073 = vmatprep.subr.mxu0 0.0
    %1074 = vmatpush1.msra.mxu0 0.0
    %1075 = vmatprep.subr.mxu0 0.0
    %1076 = vmatpush1.msra.mxu0 0.0
    %1077 = vmatprep.subr.mxu0 0.0
    %1078 = vmatpush1.msra.mxu0 0.0
    %1079 = vmatprep.subr.mxu0 0.0
    %1080 = vmatpush1.msra.mxu0 0.0
    %1081 = vmatprep.subr.mxu0 0.0
    %1082 = vmatpush1.msra.mxu0 0.0
    %1083 = vmatprep.subr.mxu0 0.0
    %1084 = vmatpush1.msra.mxu0 0.0
    %1085 = vmatprep.subr.mxu0 0.0
    %1086 = vmatpush1.msra.mxu0 0.0
    %1087 = vmatprep.subr.mxu0 0.0
    %1088 = vmatpush1.msra.mxu0 0.0
    %1089 = vmatprep.subr.mxu0 0.0
    %1090 = vmatpush1.msra.mxu0 0.0
    %1091 = vmatprep.subr.mxu0 0.0
    %1092 = vmatpush1.msra.mxu0 0.0
    %1093 = vmatprep.subr.mxu0 0.0
    %1094 = vmatpush1.msra.mxu0 0.0
    %1095 = vmatprep.subr.mxu0 0.0
    %1096 = vmatpush1.msra.mxu0 0.0
    %1097 = vmatprep.subr.mxu0 0.0
    %1098 = vmatpush1.msra.mxu0 0.0
    %1099 = vmatprep.subr.mxu0 0.0
    %1100 = vmatpush1.msra.mxu0 0.0
    %1101 = vmatprep.subr.mxu0 0.0
    %1102 = vmatpush1.msra.mxu0 0.0
    %1103 = vmatprep.subr.mxu0 0.0
    %1104 = vmatpush1.msra.mxu0 0.0
    %1105 = vmatprep.subr.mxu0 0.0
    %1106 = vmatpush1.msra.mxu0 0.0
    %1107 = vmatprep.subr.mxu0 0.0
    %1108 = vmatpush1.msra.mxu0 0.0
    %1109 = vmatprep.subr.mxu0 0.0
    %1110 = vmatpush1.msra.mxu0 0.0
    %1111 = vmatprep.subr.mxu0 0.0
    %1112 = vmatpush1.msra.mxu0 0.0
    %1113 = vmatprep.subr.mxu0 0.0
    %1114 = vmatpush1.msra.mxu0 0.0
    %1115 = vmatprep.subr.mxu0 0.0
    %1116 = vmatpush1.msra.mxu0 0.0
    %1117 = vmatprep.mubr.f32.mxu0 0.0
    %1118 = vmatmul.mubr.f32.gmra.mrb[0].mxu0 %v1051
    %v1119 = vpop.f32.mrb[0].mxu0
    %v1120 = vadd.f32 0.0, %v1119
    %v1121 = vpop.f32.mrb[0].mxu0
    %1122 = vdwg.mxu0
    %v1123 = vadd.f32 %v1048, %v1120
    %v1124 = vxor.u32 %v1123, 2147483648
    %v1125 = vmul.f32 %v1124, 1.442695
    %v1126 = vpow.pop %v1125
    %v1127 = vadd.f32 %v1126, 1.0
    %v1128 = vrcp.pop %v1127
    %v1129 = vmul.f32 1.0, %v1128
    %v1130 = vtanh.pop %v1123
    %v1131 = vld [vmem:[#allocation5] sm:$0xff]
    %1133 = vrot.lane.b32.xlu0 %v1131, 32
    %v1134 = vpop.permute.xlu0 %1133
    %v1136 = vmul.f32 %v1129, %v1134
    %1138 = vrot.lane.b32.xlu0 %v1130, 64
    %v1139 = vpop.permute.xlu0 %1138
    %v1141 = vmul.f32 %v1129, %v1139
    %1143 = vrot.lane.b32.xlu0 %v1141, 32
    %v1144 = vpop.permute.xlu0 %1143
    %v1146 = vadd.f32 %v1136, %v1144
    %v1147 = vtanh.pop %v1146
    %1149 = vrot.lane.b32.xlu0 %v1147, 64
    %v1150 = vpop.permute.xlu0 %1149
    %v1152 = vmul.f32 %v1129, %v1150
    %1154 = vrot.lane.b32.xlu0 %v1146, 96
    %v1155 = vpop.permute.xlu0 %1154
    %1157 = vst.msk [vmem:[#allocation5] sm:$0xff] %vm216, %v1155
    %1159 = vrot.lane.b32.xlu0 %v1152, 32
    %v1160 = vpop.permute.xlu0 %1159
    %1162 = vst.msk [vmem:[#allocation4] sm:$0xff] %vm216, %v1160
    %s1163 = scalar_lea.vmem [#allocation3], 56
    %1164 = vst.msk [vmem:[%s1163] sm:$0xff] %vm216, %v1160
    %v1165 = vld [vmem:[#allocation3] sm:$0xff]
    %v1166 = vld [vmem:[#allocation3 + $0x8] sm:$0xff]
    %v1167 = vld [vmem:[#allocation3 + $0x10] sm:$0xff]
    %v1168 = vld [vmem:[#allocation3 + $0x18] sm:$0xff]
    %v1169 = vld [vmem:[#allocation3 + $0x20] sm:$0xff]
    %v1170 = vld [vmem:[#allocation3 + $0x28] sm:$0xff]
    %v1171 = vld [vmem:[#allocation3 + $0x30] sm:$0xff]
    %v1172 = vld [vmem:[#allocation3 + $0x38] sm:$0xff]
    %v1173 = vld [vmem:[%s4] sm:$0xff]
    %v1174 = vld [vmem:[%s4 + $0x8] sm:$0xff]
    %v1175 = vld [vmem:[%s4 + $0x10] sm:$0xff]
    %v1176 = vld [vmem:[%s4 + $0x18] sm:$0xff]
    %v1177 = vld [vmem:[%s6] sm:$0x1]
    %v1179 = vlaneseq
    %v1180 = vshrl.u32 %v1179, 7
    %v1181 = vsub.s32 0, %v1180
    %v1182 = vrot.slane %v1177, %v1181
    %v1185 = vsel %vm216, %v1165, 0
    %v1188 = vsel %vm216, %v1166, 0
    %v1191 = vsel %vm216, %v1167, 0
    %v1194 = vsel %vm216, %v1168, 0
    %v1197 = vsel %vm216, %v1169, 0
    %v1200 = vsel %vm216, %v1170, 0
    %v1203 = vsel %vm216, %v1171, 0
    %v1206 = vsel %vm216, %v1172, 0
    %1208 = vmatprep.subr.mxu0 0.0
    %1209 = vmatpush1.msra.mxu0 %v1173
    %1210 = vmatprep.subr.mxu0 0.0
    %1211 = vmatpush1.msra.mxu0 %v1174
    %1212 = vmatprep.subr.mxu0 0.0
    %1213 = vmatpush1.msra.mxu0 %v1175
    %1214 = vmatprep.subr.mxu0 0.0
    %1215 = vmatpush1.msra.mxu0 %v1176
    %1216 = vmatprep.subr.mxu0 0.0
    %1217 = vmatpush1.msra.mxu0 0.0
    %1218 = vmatprep.subr.mxu0 0.0
    %1219 = vmatpush1.msra.mxu0 0.0
    %1220 = vmatprep.subr.mxu0 0.0
    %1221 = vmatpush1.msra.mxu0 0.0
    %1222 = vmatprep.subr.mxu0 0.0
    %1223 = vmatpush1.msra.mxu0 0.0
    %1224 = vmatprep.subr.mxu0 0.0
    %1225 = vmatpush1.msra.mxu0 0.0
    %1226 = vmatprep.subr.mxu0 0.0
    %1227 = vmatpush1.msra.mxu0 0.0
    %1228 = vmatprep.subr.mxu0 0.0
    %1229 = vmatpush1.msra.mxu0 0.0
    %1230 = vmatprep.subr.mxu0 0.0
    %1231 = vmatpush1.msra.mxu0 0.0
    %1232 = vmatprep.subr.mxu0 0.0
    %1233 = vmatpush1.msra.mxu0 0.0
    %1234 = vmatprep.subr.mxu0 0.0
    %1235 = vmatpush1.msra.mxu0 0.0
    %1236 = vmatprep.subr.mxu0 0.0
    %1237 = vmatpush1.msra.mxu0 0.0
    %1238 = vmatprep.subr.mxu0 0.0
    %1239 = vmatpush1.msra.mxu0 0.0
    %1240 = vmatprep.subr.mxu0 0.0
    %1241 = vmatpush1.msra.mxu0 0.0
    %1242 = vmatprep.subr.mxu0 0.0
    %1243 = vmatpush1.msra.mxu0 0.0
    %1244 = vmatprep.subr.mxu0 0.0
    %1245 = vmatpush1.msra.mxu0 0.0
    %1246 = vmatprep.subr.mxu0 0.0
    %1247 = vmatpush1.msra.mxu0 0.0
    %1248 = vmatprep.subr.mxu0 0.0
    %1249 = vmatpush1.msra.mxu0 0.0
    %1250 = vmatprep.subr.mxu0 0.0
    %1251 = vmatpush1.msra.mxu0 0.0
    %1252 = vmatprep.subr.mxu0 0.0
    %1253 = vmatpush1.msra.mxu0 0.0
    %1254 = vmatprep.subr.mxu0 0.0
    %1255 = vmatpush1.msra.mxu0 0.0
    %1256 = vmatprep.subr.mxu0 0.0
    %1257 = vmatpush1.msra.mxu0 0.0
    %1258 = vmatprep.subr.mxu0 0.0
    %1259 = vmatpush1.msra.mxu0 0.0
    %1260 = vmatprep.subr.mxu0 0.0
    %1261 = vmatpush1.msra.mxu0 0.0
    %1262 = vmatprep.subr.mxu0 0.0
    %1263 = vmatpush1.msra.mxu0 0.0
    %1264 = vmatprep.subr.mxu0 0.0
    %1265 = vmatpush1.msra.mxu0 0.0
    %1266 = vmatprep.subr.mxu0 0.0
    %1267 = vmatpush1.msra.mxu0 0.0
    %1268 = vmatprep.subr.mxu0 0.0
    %1269 = vmatpush1.msra.mxu0 0.0
    %1270 = vmatprep.subr.mxu0 0.0
    %1271 = vmatpush1.msra.mxu0 0.0
    %1272 = vmatprep.mubr.f32.mxu0 0.0
    %1273 = vmatmul.mubr.f32.gmra.mrb[0].mxu0 %v1185
    %v1274 = vpop.f32.mrb[0].mxu0
    %v1275 = vadd.f32 %v1182, %v1274
    %v1276 = vpop.f32.mrb[0].mxu0
    %1277 = vmatprep.mubr.f32.mxu0 0.0
    %1278 = vmatmul.mubr.f32.gmra.mrb[0].mxu0 %v1188
    %v1279 = vpop.f32.mrb[0].mxu0
    %v1280 = vadd.f32 %v1182, %v1279
    %v1281 = vpop.f32.mrb[0].mxu0
    %1282 = vmatprep.mubr.f32.mxu0 0.0
    %1283 = vmatmul.mubr.f32.gmra.mrb[0].mxu0 %v1191
    %v1284 = vpop.f32.mrb[0].mxu0
    %v1285 = vadd.f32 %v1182, %v1284
    %v1286 = vpop.f32.mrb[0].mxu0
    %1287 = vmatprep.mubr.f32.mxu0 0.0
    %1288 = vmatmul.mubr.f32.gmra.mrb[0].mxu0 %v1194
    %v1289 = vpop.f32.mrb[0].mxu0
    %v1290 = vadd.f32 %v1182, %v1289
    %v1291 = vpop.f32.mrb[0].mxu0
    %1292 = vmatprep.mubr.f32.mxu0 0.0
    %1293 = vmatmul.mubr.f32.gmra.mrb[0].mxu0 %v1197
    %v1294 = vpop.f32.mrb[0].mxu0
    %v1295 = vadd.f32 %v1182, %v1294
    %v1296 = vpop.f32.mrb[0].mxu0
    %1297 = vmatprep.mubr.f32.mxu0 0.0
    %1298 = vmatmul.mubr.f32.gmra.mrb[0].mxu0 %v1200
    %v1299 = vpop.f32.mrb[0].mxu0
    %v1300 = vadd.f32 %v1182, %v1299
    %v1301 = vpop.f32.mrb[0].mxu0
    %1302 = vmatprep.mubr.f32.mxu0 0.0
    %1303 = vmatmul.mubr.f32.gmra.mrb[0].mxu0 %v1203
    %v1304 = vpop.f32.mrb[0].mxu0
    %v1305 = vadd.f32 %v1182, %v1304
    %v1306 = vpop.f32.mrb[0].mxu0
    %1307 = vmatprep.mubr.f32.mxu0 0.0
    %1308 = vmatmul.mubr.f32.gmra.mrb[0].mxu0 %v1206
    %v1309 = vpop.f32.mrb[0].mxu0
    %v1310 = vadd.f32 %v1182, %v1309
    %v1311 = vpop.f32.mrb[0].mxu0
    %1312 = vdwg.mxu0
    %1313 = vst [vmem:[#allocation2] sm:$0xff] %v1275
    %1314 = vst [vmem:[#allocation2 + $0x8] sm:$0xff] %v1280
    %1315 = vst [vmem:[#allocation2 + $0x10] sm:$0xff] %v1285
    %1316 = vst [vmem:[#allocation2 + $0x18] sm:$0xff] %v1290
    %1317 = vst [vmem:[#allocation2 + $0x20] sm:$0xff] %v1295
    %1318 = vst [vmem:[#allocation2 + $0x28] sm:$0xff] %v1300
    %1319 = vst [vmem:[#allocation2 + $0x30] sm:$0xff] %v1305
    %1320 = vst [vmem:[#allocation2 + $0x38] sm:$0xff] %v1310
    %1321 = vst.msk [vmem:[#allocation4] sm:$0xff] %vm216, 0.0
    %1322 = vst.msk [vmem:[#allocation5] sm:$0xff] %vm216, 0.0
    %v1323 = vld [vmem:[%s5] sm:$0xff]
    %v1324 = vld [vmem:[%s5 + $0x8] sm:$0xff]
    %v1325 = vld [vmem:[%s5 + $0x10] sm:$0xff]
    %v1326 = vld [vmem:[%s5 + $0x18] sm:$0xff]
    %v1327 = vld [vmem:[#allocation2] sm:$0xff]
    %v1328 = vld [vmem:[#allocation4] sm:$0xff]
    %v1330 = vsel %vm216, %v1328, 0
    %1332 = vmatprep.subr.mxu0 0.0
    %1333 = vmatpush1.msra.mxu0 %v1323
    %1334 = vmatprep.subr.mxu0 0.0
    %1335 = vmatpush1.msra.mxu0 %v1324
    %1336 = vmatprep.subr.mxu0 0.0
    %1337 = vmatpush1.msra.mxu0 %v1325
    %1338 = vmatprep.subr.mxu0 0.0
    %1339 = vmatpush1.msra.mxu0 %v1326
    %1340 = vmatprep.subr.mxu0 0.0
    %1341 = vmatpush1.msra.mxu0 0.0
    %1342 = vmatprep.subr.mxu0 0.0
    %1343 = vmatpush1.msra.mxu0 0.0
    %1344 = vmatprep.subr.mxu0 0.0
    %1345 = vmatpush1.msra.mxu0 0.0
    %1346 = vmatprep.subr.mxu0 0.0
    %1347 = vmatpush1.msra.mxu0 0.0
    %1348 = vmatprep.subr.mxu0 0.0
    %1349 = vmatpush1.msra.mxu0 0.0
    %1350 = vmatprep.subr.mxu0 0.0
    %1351 = vmatpush1.msra.mxu0 0.0
    %1352 = vmatprep.subr.mxu0 0.0
    %1353 = vmatpush1.msra.mxu0 0.0
    %1354 = vmatprep.subr.mxu0 0.0
    %1355 = vmatpush1.msra.mxu0 0.0
    %1356 = vmatprep.subr.mxu0 0.0
    %1357 = vmatpush1.msra.mxu0 0.0
    %1358 = vmatprep.subr.mxu0 0.0
    %1359 = vmatpush1.msra.mxu0 0.0
    %1360 = vmatprep.subr.mxu0 0.0
    %1361 = vmatpush1.msra.mxu0 0.0
    %1362 = vmatprep.subr.mxu0 0.0
    %1363 = vmatpush1.msra.mxu0 0.0
    %1364 = vmatprep.subr.mxu0 0.0
    %1365 = vmatpush1.msra.mxu0 0.0
    %1366 = vmatprep.subr.mxu0 0.0
    %1367 = vmatpush1.msra.mxu0 0.0
    %1368 = vmatprep.subr.mxu0 0.0
    %1369 = vmatpush1.msra.mxu0 0.0
    %1370 = vmatprep.subr.mxu0 0.0
    %1371 = vmatpush1.msra.mxu0 0.0
    %1372 = vmatprep.subr.mxu0 0.0
    %1373 = vmatpush1.msra.mxu0 0.0
    %1374 = vmatprep.subr.mxu0 0.0
    %1375 = vmatpush1.msra.mxu0 0.0
    %1376 = vmatprep.subr.mxu0 0.0
    %1377 = vmatpush1.msra.mxu0 0.0
    %1378 = vmatprep.subr.mxu0 0.0
    %1379 = vmatpush1.msra.mxu0 0.0
    %1380 = vmatprep.subr.mxu0 0.0
    %1381 = vmatpush1.msra.mxu0 0.0
    %1382 = vmatprep.subr.mxu0 0.0
    %1383 = vmatpush1.msra.mxu0 0.0
    %1384 = vmatprep.subr.mxu0 0.0
    %1385 = vmatpush1.msra.mxu0 0.0
    %1386 = vmatprep.subr.mxu0 0.0
    %1387 = vmatpush1.msra.mxu0 0.0
    %1388 = vmatprep.subr.mxu0 0.0
    %1389 = vmatpush1.msra.mxu0 0.0
    %1390 = vmatprep.subr.mxu0 0.0
    %1391 = vmatpush1.msra.mxu0 0.0
    %1392 = vmatprep.subr.mxu0 0.0
    %1393 = vmatpush1.msra.mxu0 0.0
    %1394 = vmatprep.subr.mxu0 0.0
    %1395 = vmatpush1.msra.mxu0 0.0
    %1396 = vmatprep.mubr.f32.mxu0 0.0
    %1397 = vmatmul.mubr.f32.gmra.mrb[0].mxu0 %v1330
    %v1398 = vpop.f32.mrb[0].mxu0
    %v1399 = vadd.f32 0.0, %v1398
    %v1400 = vpop.f32.mrb[0].mxu0
    %1401 = vdwg.mxu0
    %v1402 = vadd.f32 %v1327, %v1399
    %v1403 = vxor.u32 %v1402, 2147483648
    %v1404 = vmul.f32 %v1403, 1.442695
    %v1405 = vpow.pop %v1404
    %v1406 = vadd.f32 %v1405, 1.0
    %v1407 = vrcp.pop %v1406
    %v1408 = vmul.f32 1.0, %v1407
    %v1409 = vtanh.pop %v1402
    %v1410 = vld [vmem:[#allocation5] sm:$0xff]
    %1412 = vrot.lane.b32.xlu0 %v1410, 32
    %v1413 = vpop.permute.xlu0 %1412
    %v1415 = vmul.f32 %v1408, %v1413
    %1417 = vrot.lane.b32.xlu0 %v1409, 64
    %v1418 = vpop.permute.xlu0 %1417
    %v1420 = vmul.f32 %v1408, %v1418
    %1422 = vrot.lane.b32.xlu0 %v1420, 32
    %v1423 = vpop.permute.xlu0 %1422
    %v1425 = vadd.f32 %v1415, %v1423
    %v1426 = vtanh.pop %v1425
    %1428 = vrot.lane.b32.xlu0 %v1426, 64
    %v1429 = vpop.permute.xlu0 %1428
    %v1431 = vmul.f32 %v1408, %v1429
    %1433 = vrot.lane.b32.xlu0 %v1425, 96
    %v1434 = vpop.permute.xlu0 %1433
    %1436 = vst.msk [vmem:[#allocation5] sm:$0xff] %vm216, %v1434
    %1438 = vrot.lane.b32.xlu0 %v1431, 32
    %v1439 = vpop.permute.xlu0 %1438
    %1441 = vst.msk [vmem:[#allocation4] sm:$0xff] %vm216, %v1439
    %v1442 = vld [vmem:[%s339] sm:$0xff]
    %v1443 = vld [vmem:[#allocation4] sm:$0xff]
    %v1445 = vsel %vm216, %v1443, 0
    %1447 = vmatprep.subr.mxu0 0.0
    %1448 = vmatpush1.msra.mxu0 %v1323
    %1449 = vmatprep.subr.mxu0 0.0
    %1450 = vmatpush1.msra.mxu0 %v1324
    %1451 = vmatprep.subr.mxu0 0.0
    %1452 = vmatpush1.msra.mxu0 %v1325
    %1453 = vmatprep.subr.mxu0 0.0
    %1454 = vmatpush1.msra.mxu0 %v1326
    %1455 = vmatprep.subr.mxu0 0.0
    %1456 = vmatpush1.msra.mxu0 0.0
    %1457 = vmatprep.subr.mxu0 0.0
    %1458 = vmatpush1.msra.mxu0 0.0
    %1459 = vmatprep.subr.mxu0 0.0
    %1460 = vmatpush1.msra.mxu0 0.0
    %1461 = vmatprep.subr.mxu0 0.0
    %1462 = vmatpush1.msra.mxu0 0.0
    %1463 = vmatprep.subr.mxu0 0.0
    %1464 = vmatpush1.msra.mxu0 0.0
    %1465 = vmatprep.subr.mxu0 0.0
    %1466 = vmatpush1.msra.mxu0 0.0
    %1467 = vmatprep.subr.mxu0 0.0
    %1468 = vmatpush1.msra.mxu0 0.0
    %1469 = vmatprep.subr.mxu0 0.0
    %1470 = vmatpush1.msra.mxu0 0.0
    %1471 = vmatprep.subr.mxu0 0.0
    %1472 = vmatpush1.msra.mxu0 0.0
    %1473 = vmatprep.subr.mxu0 0.0
    %1474 = vmatpush1.msra.mxu0 0.0
    %1475 = vmatprep.subr.mxu0 0.0
    %1476 = vmatpush1.msra.mxu0 0.0
    %1477 = vmatprep.subr.mxu0 0.0
    %1478 = vmatpush1.msra.mxu0 0.0
    %1479 = vmatprep.subr.mxu0 0.0
    %1480 = vmatpush1.msra.mxu0 0.0
    %1481 = vmatprep.subr.mxu0 0.0
    %1482 = vmatpush1.msra.mxu0 0.0
    %1483 = vmatprep.subr.mxu0 0.0
    %1484 = vmatpush1.msra.mxu0 0.0
    %1485 = vmatprep.subr.mxu0 0.0
    %1486 = vmatpush1.msra.mxu0 0.0
    %1487 = vmatprep.subr.mxu0 0.0
    %1488 = vmatpush1.msra.mxu0 0.0
    %1489 = vmatprep.subr.mxu0 0.0
    %1490 = vmatpush1.msra.mxu0 0.0
    %1491 = vmatprep.subr.mxu0 0.0
    %1492 = vmatpush1.msra.mxu0 0.0
    %1493 = vmatprep.subr.mxu0 0.0
    %1494 = vmatpush1.msra.mxu0 0.0
    %1495 = vmatprep.subr.mxu0 0.0
    %1496 = vmatpush1.msra.mxu0 0.0
    %1497 = vmatprep.subr.mxu0 0.0
    %1498 = vmatpush1.msra.mxu0 0.0
    %1499 = vmatprep.subr.mxu0 0.0
    %1500 = vmatpush1.msra.mxu0 0.0
    %1501 = vmatprep.subr.mxu0 0.0
    %1502 = vmatpush1.msra.mxu0 0.0
    %1503 = vmatprep.subr.mxu0 0.0
    %1504 = vmatpush1.msra.mxu0 0.0
    %1505 = vmatprep.subr.mxu0 0.0
    %1506 = vmatpush1.msra.mxu0 0.0
    %1507 = vmatprep.subr.mxu0 0.0
    %1508 = vmatpush1.msra.mxu0 0.0
    %1509 = vmatprep.subr.mxu0 0.0
    %1510 = vmatpush1.msra.mxu0 0.0
    %1511 = vmatprep.mubr.f32.mxu0 0.0
    %1512 = vmatmul.mubr.f32.gmra.mrb[0].mxu0 %v1445
    %v1513 = vpop.f32.mrb[0].mxu0
    %v1514 = vadd.f32 0.0, %v1513
    %v1515 = vpop.f32.mrb[0].mxu0
    %1516 = vdwg.mxu0
    %v1517 = vadd.f32 %v1442, %v1514
    %v1518 = vxor.u32 %v1517, 2147483648
    %v1519 = vmul.f32 %v1518, 1.442695
    %v1520 = vpow.pop %v1519
    %v1521 = vadd.f32 %v1520, 1.0
    %v1522 = vrcp.pop %v1521
    %v1523 = vmul.f32 1.0, %v1522
    %v1524 = vtanh.pop %v1517
    %v1525 = vld [vmem:[#allocation5] sm:$0xff]
    %1527 = vrot.lane.b32.xlu0 %v1525, 32
    %v1528 = vpop.permute.xlu0 %1527
    %v1530 = vmul.f32 %v1523, %v1528
    %1532 = vrot.lane.b32.xlu0 %v1524, 64
    %v1533 = vpop.permute.xlu0 %1532
    %v1535 = vmul.f32 %v1523, %v1533
    %1537 = vrot.lane.b32.xlu0 %v1535, 32
    %v1538 = vpop.permute.xlu0 %1537
    %v1540 = vadd.f32 %v1530, %v1538
    %v1541 = vtanh.pop %v1540
    %1543 = vrot.lane.b32.xlu0 %v1541, 64
    %v1544 = vpop.permute.xlu0 %1543
    %v1546 = vmul.f32 %v1523, %v1544
    %1548 = vrot.lane.b32.xlu0 %v1540, 96
    %v1549 = vpop.permute.xlu0 %1548
    %1551 = vst.msk [vmem:[#allocation5] sm:$0xff] %vm216, %v1549
    %1553 = vrot.lane.b32.xlu0 %v1546, 32
    %v1554 = vpop.permute.xlu0 %1553
    %1556 = vst.msk [vmem:[#allocation4] sm:$0xff] %vm216, %v1554
    %v1557 = vld [vmem:[%s457] sm:$0xff]
    %v1558 = vld [vmem:[#allocation4] sm:$0xff]
    %v1560 = vsel %vm216, %v1558, 0
    %1562 = vmatprep.subr.mxu0 0.0
    %1563 = vmatpush1.msra.mxu0 %v1323
    %1564 = vmatprep.subr.mxu0 0.0
    %1565 = vmatpush1.msra.mxu0 %v1324
    %1566 = vmatprep.subr.mxu0 0.0
    %1567 = vmatpush1.msra.mxu0 %v1325
    %1568 = vmatprep.subr.mxu0 0.0
    %1569 = vmatpush1.msra.mxu0 %v1326
    %1570 = vmatprep.subr.mxu0 0.0
    %1571 = vmatpush1.msra.mxu0 0.0
    %1572 = vmatprep.subr.mxu0 0.0
    %1573 = vmatpush1.msra.mxu0 0.0
    %1574 = vmatprep.subr.mxu0 0.0
    %1575 = vmatpush1.msra.mxu0 0.0
    %1576 = vmatprep.subr.mxu0 0.0
    %1577 = vmatpush1.msra.mxu0 0.0
    %1578 = vmatprep.subr.mxu0 0.0
    %1579 = vmatpush1.msra.mxu0 0.0
    %1580 = vmatprep.subr.mxu0 0.0
    %1581 = vmatpush1.msra.mxu0 0.0
    %1582 = vmatprep.subr.mxu0 0.0
    %1583 = vmatpush1.msra.mxu0 0.0
    %1584 = vmatprep.subr.mxu0 0.0
    %1585 = vmatpush1.msra.mxu0 0.0
    %1586 = vmatprep.subr.mxu0 0.0
    %1587 = vmatpush1.msra.mxu0 0.0
    %1588 = vmatprep.subr.mxu0 0.0
    %1589 = vmatpush1.msra.mxu0 0.0
    %1590 = vmatprep.subr.mxu0 0.0
    %1591 = vmatpush1.msra.mxu0 0.0
    %1592 = vmatprep.subr.mxu0 0.0
    %1593 = vmatpush1.msra.mxu0 0.0
    %1594 = vmatprep.subr.mxu0 0.0
    %1595 = vmatpush1.msra.mxu0 0.0
    %1596 = vmatprep.subr.mxu0 0.0
    %1597 = vmatpush1.msra.mxu0 0.0
    %1598 = vmatprep.subr.mxu0 0.0
    %1599 = vmatpush1.msra.mxu0 0.0
    %1600 = vmatprep.subr.mxu0 0.0
    %1601 = vmatpush1.msra.mxu0 0.0
    %1602 = vmatprep.subr.mxu0 0.0
    %1603 = vmatpush1.msra.mxu0 0.0
    %1604 = vmatprep.subr.mxu0 0.0
    %1605 = vmatpush1.msra.mxu0 0.0
    %1606 = vmatprep.subr.mxu0 0.0
    %1607 = vmatpush1.msra.mxu0 0.0
    %1608 = vmatprep.subr.mxu0 0.0
    %1609 = vmatpush1.msra.mxu0 0.0
    %1610 = vmatprep.subr.mxu0 0.0
    %1611 = vmatpush1.msra.mxu0 0.0
    %1612 = vmatprep.subr.mxu0 0.0
    %1613 = vmatpush1.msra.mxu0 0.0
    %1614 = vmatprep.subr.mxu0 0.0
    %1615 = vmatpush1.msra.mxu0 0.0
    %1616 = vmatprep.subr.mxu0 0.0
    %1617 = vmatpush1.msra.mxu0 0.0
    %1618 = vmatprep.subr.mxu0 0.0
    %1619 = vmatpush1.msra.mxu0 0.0
    %1620 = vmatprep.subr.mxu0 0.0
    %1621 = vmatpush1.msra.mxu0 0.0
    %1622 = vmatprep.subr.mxu0 0.0
    %1623 = vmatpush1.msra.mxu0 0.0
    %1624 = vmatprep.subr.mxu0 0.0
    %1625 = vmatpush1.msra.mxu0 0.0
    %1626 = vmatprep.mubr.f32.mxu0 0.0
    %1627 = vmatmul.mubr.f32.gmra.mrb[0].mxu0 %v1560
    %v1628 = vpop.f32.mrb[0].mxu0
    %v1629 = vadd.f32 0.0, %v1628
    %v1630 = vpop.f32.mrb[0].mxu0
    %1631 = vdwg.mxu0
    %v1632 = vadd.f32 %v1557, %v1629
    %v1633 = vxor.u32 %v1632, 2147483648
    %v1634 = vmul.f32 %v1633, 1.442695
    %v1635 = vpow.pop %v1634
    %v1636 = vadd.f32 %v1635, 1.0
    %v1637 = vrcp.pop %v1636
    %v1638 = vmul.f32 1.0, %v1637
    %v1639 = vtanh.pop %v1632
    %v1640 = vld [vmem:[#allocation5] sm:$0xff]
    %1642 = vrot.lane.b32.xlu0 %v1640, 32
    %v1643 = vpop.permute.xlu0 %1642
    %v1645 = vmul.f32 %v1638, %v1643
    %1647 = vrot.lane.b32.xlu0 %v1639, 64
    %v1648 = vpop.permute.xlu0 %1647
    %v1650 = vmul.f32 %v1638, %v1648
    %1652 = vrot.lane.b32.xlu0 %v1650, 32
    %v1653 = vpop.permute.xlu0 %1652
    %v1655 = vadd.f32 %v1645, %v1653
    %v1656 = vtanh.pop %v1655
    %1658 = vrot.lane.b32.xlu0 %v1656, 64
    %v1659 = vpop.permute.xlu0 %1658
    %v1661 = vmul.f32 %v1638, %v1659
    %1663 = vrot.lane.b32.xlu0 %v1655, 96
    %v1664 = vpop.permute.xlu0 %1663
    %1666 = vst.msk [vmem:[#allocation5] sm:$0xff] %vm216, %v1664
    %1668 = vrot.lane.b32.xlu0 %v1661, 32
    %v1669 = vpop.permute.xlu0 %1668
    %1671 = vst.msk [vmem:[#allocation4] sm:$0xff] %vm216, %v1669
    %v1672 = vld [vmem:[%s575] sm:$0xff]
    %v1673 = vld [vmem:[#allocation4] sm:$0xff]
    %v1675 = vsel %vm216, %v1673, 0
    %1677 = vmatprep.subr.mxu0 0.0
    %1678 = vmatpush1.msra.mxu0 %v1323
    %1679 = vmatprep.subr.mxu0 0.0
    %1680 = vmatpush1.msra.mxu0 %v1324
    %1681 = vmatprep.subr.mxu0 0.0
    %1682 = vmatpush1.msra.mxu0 %v1325
    %1683 = vmatprep.subr.mxu0 0.0
    %1684 = vmatpush1.msra.mxu0 %v1326
    %1685 = vmatprep.subr.mxu0 0.0
    %1686 = vmatpush1.msra.mxu0 0.0
    %1687 = vmatprep.subr.mxu0 0.0
    %1688 = vmatpush1.msra.mxu0 0.0
    %1689 = vmatprep.subr.mxu0 0.0
    %1690 = vmatpush1.msra.mxu0 0.0
    %1691 = vmatprep.subr.mxu0 0.0
    %1692 = vmatpush1.msra.mxu0 0.0
    %1693 = vmatprep.subr.mxu0 0.0
    %1694 = vmatpush1.msra.mxu0 0.0
    %1695 = vmatprep.subr.mxu0 0.0
    %1696 = vmatpush1.msra.mxu0 0.0
    %1697 = vmatprep.subr.mxu0 0.0
    %1698 = vmatpush1.msra.mxu0 0.0
    %1699 = vmatprep.subr.mxu0 0.0
    %1700 = vmatpush1.msra.mxu0 0.0
    %1701 = vmatprep.subr.mxu0 0.0
    %1702 = vmatpush1.msra.mxu0 0.0
    %1703 = vmatprep.subr.mxu0 0.0
    %1704 = vmatpush1.msra.mxu0 0.0
    %1705 = vmatprep.subr.mxu0 0.0
    %1706 = vmatpush1.msra.mxu0 0.0
    %1707 = vmatprep.subr.mxu0 0.0
    %1708 = vmatpush1.msra.mxu0 0.0
    %1709 = vmatprep.subr.mxu0 0.0
    %1710 = vmatpush1.msra.mxu0 0.0
    %1711 = vmatprep.subr.mxu0 0.0
    %1712 = vmatpush1.msra.mxu0 0.0
    %1713 = vmatprep.subr.mxu0 0.0
    %1714 = vmatpush1.msra.mxu0 0.0
    %1715 = vmatprep.subr.mxu0 0.0
    %1716 = vmatpush1.msra.mxu0 0.0
    %1717 = vmatprep.subr.mxu0 0.0
    %1718 = vmatpush1.msra.mxu0 0.0
    %1719 = vmatprep.subr.mxu0 0.0
    %1720 = vmatpush1.msra.mxu0 0.0
    %1721 = vmatprep.subr.mxu0 0.0
    %1722 = vmatpush1.msra.mxu0 0.0
    %1723 = vmatprep.subr.mxu0 0.0
    %1724 = vmatpush1.msra.mxu0 0.0
    %1725 = vmatprep.subr.mxu0 0.0
    %1726 = vmatpush1.msra.mxu0 0.0
    %1727 = vmatprep.subr.mxu0 0.0
    %1728 = vmatpush1.msra.mxu0 0.0
    %1729 = vmatprep.subr.mxu0 0.0
    %1730 = vmatpush1.msra.mxu0 0.0
    %1731 = vmatprep.subr.mxu0 0.0
    %1732 = vmatpush1.msra.mxu0 0.0
    %1733 = vmatprep.subr.mxu0 0.0
    %1734 = vmatpush1.msra.mxu0 0.0
    %1735 = vmatprep.subr.mxu0 0.0
    %1736 = vmatpush1.msra.mxu0 0.0
    %1737 = vmatprep.subr.mxu0 0.0
    %1738 = vmatpush1.msra.mxu0 0.0
    %1739 = vmatprep.subr.mxu0 0.0
    %1740 = vmatpush1.msra.mxu0 0.0
    %1741 = vmatprep.mubr.f32.mxu0 0.0
    %1742 = vmatmul.mubr.f32.gmra.mrb[0].mxu0 %v1675
    %v1743 = vpop.f32.mrb[0].mxu0
    %v1744 = vadd.f32 0.0, %v1743
    %v1745 = vpop.f32.mrb[0].mxu0
    %1746 = vdwg.mxu0
    %v1747 = vadd.f32 %v1672, %v1744
    %v1748 = vxor.u32 %v1747, 2147483648
    %v1749 = vmul.f32 %v1748, 1.442695
    %v1750 = vpow.pop %v1749
    %v1751 = vadd.f32 %v1750, 1.0
    %v1752 = vrcp.pop %v1751
    %v1753 = vmul.f32 1.0, %v1752
    %v1754 = vtanh.pop %v1747
    %v1755 = vld [vmem:[#allocation5] sm:$0xff]
    %1757 = vrot.lane.b32.xlu0 %v1755, 32
    %v1758 = vpop.permute.xlu0 %1757
    %v1760 = vmul.f32 %v1753, %v1758
    %1762 = vrot.lane.b32.xlu0 %v1754, 64
    %v1763 = vpop.permute.xlu0 %1762
    %v1765 = vmul.f32 %v1753, %v1763
    %1767 = vrot.lane.b32.xlu0 %v1765, 32
    %v1768 = vpop.permute.xlu0 %1767
    %v1770 = vadd.f32 %v1760, %v1768
    %v1771 = vtanh.pop %v1770
    %1773 = vrot.lane.b32.xlu0 %v1771, 64
    %v1774 = vpop.permute.xlu0 %1773
    %v1776 = vmul.f32 %v1753, %v1774
    %1778 = vrot.lane.b32.xlu0 %v1770, 96
    %v1779 = vpop.permute.xlu0 %1778
    %1781 = vst.msk [vmem:[#allocation5] sm:$0xff] %vm216, %v1779
    %1783 = vrot.lane.b32.xlu0 %v1776, 32
    %v1784 = vpop.permute.xlu0 %1783
    %1786 = vst.msk [vmem:[#allocation4] sm:$0xff] %vm216, %v1784
    %v1787 = vld [vmem:[%s693] sm:$0xff]
    %v1788 = vld [vmem:[#allocation4] sm:$0xff]
    %v1790 = vsel %vm216, %v1788, 0
    %1792 = vmatprep.subr.mxu0 0.0
    %1793 = vmatpush1.msra.mxu0 %v1323
    %1794 = vmatprep.subr.mxu0 0.0
    %1795 = vmatpush1.msra.mxu0 %v1324
    %1796 = vmatprep.subr.mxu0 0.0
    %1797 = vmatpush1.msra.mxu0 %v1325
    %1798 = vmatprep.subr.mxu0 0.0
    %1799 = vmatpush1.msra.mxu0 %v1326
    %1800 = vmatprep.subr.mxu0 0.0
    %1801 = vmatpush1.msra.mxu0 0.0
    %1802 = vmatprep.subr.mxu0 0.0
    %1803 = vmatpush1.msra.mxu0 0.0
    %1804 = vmatprep.subr.mxu0 0.0
    %1805 = vmatpush1.msra.mxu0 0.0
    %1806 = vmatprep.subr.mxu0 0.0
    %1807 = vmatpush1.msra.mxu0 0.0
    %1808 = vmatprep.subr.mxu0 0.0
    %1809 = vmatpush1.msra.mxu0 0.0
    %1810 = vmatprep.subr.mxu0 0.0
    %1811 = vmatpush1.msra.mxu0 0.0
    %1812 = vmatprep.subr.mxu0 0.0
    %1813 = vmatpush1.msra.mxu0 0.0
    %1814 = vmatprep.subr.mxu0 0.0
    %1815 = vmatpush1.msra.mxu0 0.0
    %1816 = vmatprep.subr.mxu0 0.0
    %1817 = vmatpush1.msra.mxu0 0.0
    %1818 = vmatprep.subr.mxu0 0.0
    %1819 = vmatpush1.msra.mxu0 0.0
    %1820 = vmatprep.subr.mxu0 0.0
    %1821 = vmatpush1.msra.mxu0 0.0
    %1822 = vmatprep.subr.mxu0 0.0
    %1823 = vmatpush1.msra.mxu0 0.0
    %1824 = vmatprep.subr.mxu0 0.0
    %1825 = vmatpush1.msra.mxu0 0.0
    %1826 = vmatprep.subr.mxu0 0.0
    %1827 = vmatpush1.msra.mxu0 0.0
    %1828 = vmatprep.subr.mxu0 0.0
    %1829 = vmatpush1.msra.mxu0 0.0
    %1830 = vmatprep.subr.mxu0 0.0
    %1831 = vmatpush1.msra.mxu0 0.0
    %1832 = vmatprep.subr.mxu0 0.0
    %1833 = vmatpush1.msra.mxu0 0.0
    %1834 = vmatprep.subr.mxu0 0.0
    %1835 = vmatpush1.msra.mxu0 0.0
    %1836 = vmatprep.subr.mxu0 0.0
    %1837 = vmatpush1.msra.mxu0 0.0
    %1838 = vmatprep.subr.mxu0 0.0
    %1839 = vmatpush1.msra.mxu0 0.0
    %1840 = vmatprep.subr.mxu0 0.0
    %1841 = vmatpush1.msra.mxu0 0.0
    %1842 = vmatprep.subr.mxu0 0.0
    %1843 = vmatpush1.msra.mxu0 0.0
    %1844 = vmatprep.subr.mxu0 0.0
    %1845 = vmatpush1.msra.mxu0 0.0
    %1846 = vmatprep.subr.mxu0 0.0
    %1847 = vmatpush1.msra.mxu0 0.0
    %1848 = vmatprep.subr.mxu0 0.0
    %1849 = vmatpush1.msra.mxu0 0.0
    %1850 = vmatprep.subr.mxu0 0.0
    %1851 = vmatpush1.msra.mxu0 0.0
    %1852 = vmatprep.subr.mxu0 0.0
    %1853 = vmatpush1.msra.mxu0 0.0
    %1854 = vmatprep.subr.mxu0 0.0
    %1855 = vmatpush1.msra.mxu0 0.0
    %1856 = vmatprep.mubr.f32.mxu0 0.0
    %1857 = vmatmul.mubr.f32.gmra.mrb[0].mxu0 %v1790
    %v1858 = vpop.f32.mrb[0].mxu0
    %v1859 = vadd.f32 0.0, %v1858
    %v1860 = vpop.f32.mrb[0].mxu0
    %1861 = vdwg.mxu0
    %v1862 = vadd.f32 %v1787, %v1859
    %v1863 = vxor.u32 %v1862, 2147483648
    %v1864 = vmul.f32 %v1863, 1.442695
    %v1865 = vpow.pop %v1864
    %v1866 = vadd.f32 %v1865, 1.0
    %v1867 = vrcp.pop %v1866
    %v1868 = vmul.f32 1.0, %v1867
    %v1869 = vtanh.pop %v1862
    %v1870 = vld [vmem:[#allocation5] sm:$0xff]
    %1872 = vrot.lane.b32.xlu0 %v1870, 32
    %v1873 = vpop.permute.xlu0 %1872
    %v1875 = vmul.f32 %v1868, %v1873
    %1877 = vrot.lane.b32.xlu0 %v1869, 64
    %v1878 = vpop.permute.xlu0 %1877
    %v1880 = vmul.f32 %v1868, %v1878
    %1882 = vrot.lane.b32.xlu0 %v1880, 32
    %v1883 = vpop.permute.xlu0 %1882
    %v1885 = vadd.f32 %v1875, %v1883
    %v1886 = vtanh.pop %v1885
    %1888 = vrot.lane.b32.xlu0 %v1886, 64
    %v1889 = vpop.permute.xlu0 %1888
    %v1891 = vmul.f32 %v1868, %v1889
    %1893 = vrot.lane.b32.xlu0 %v1885, 96
    %v1894 = vpop.permute.xlu0 %1893
    %1896 = vst.msk [vmem:[#allocation5] sm:$0xff] %vm216, %v1894
    %1898 = vrot.lane.b32.xlu0 %v1891, 32
    %v1899 = vpop.permute.xlu0 %1898
    %1901 = vst.msk [vmem:[#allocation4] sm:$0xff] %vm216, %v1899
    %v1902 = vld [vmem:[%s811] sm:$0xff]
    %v1903 = vld [vmem:[#allocation4] sm:$0xff]
    %v1905 = vsel %vm216, %v1903, 0
    %1907 = vmatprep.subr.mxu0 0.0
    %1908 = vmatpush1.msra.mxu0 %v1323
    %1909 = vmatprep.subr.mxu0 0.0
    %1910 = vmatpush1.msra.mxu0 %v1324
    %1911 = vmatprep.subr.mxu0 0.0
    %1912 = vmatpush1.msra.mxu0 %v1325
    %1913 = vmatprep.subr.mxu0 0.0
    %1914 = vmatpush1.msra.mxu0 %v1326
    %1915 = vmatprep.subr.mxu0 0.0
    %1916 = vmatpush1.msra.mxu0 0.0
    %1917 = vmatprep.subr.mxu0 0.0
    %1918 = vmatpush1.msra.mxu0 0.0
    %1919 = vmatprep.subr.mxu0 0.0
    %1920 = vmatpush1.msra.mxu0 0.0
    %1921 = vmatprep.subr.mxu0 0.0
    %1922 = vmatpush1.msra.mxu0 0.0
    %1923 = vmatprep.subr.mxu0 0.0
    %1924 = vmatpush1.msra.mxu0 0.0
    %1925 = vmatprep.subr.mxu0 0.0
    %1926 = vmatpush1.msra.mxu0 0.0
    %1927 = vmatprep.subr.mxu0 0.0
    %1928 = vmatpush1.msra.mxu0 0.0
    %1929 = vmatprep.subr.mxu0 0.0
    %1930 = vmatpush1.msra.mxu0 0.0
    %1931 = vmatprep.subr.mxu0 0.0
    %1932 = vmatpush1.msra.mxu0 0.0
    %1933 = vmatprep.subr.mxu0 0.0
    %1934 = vmatpush1.msra.mxu0 0.0
    %1935 = vmatprep.subr.mxu0 0.0
    %1936 = vmatpush1.msra.mxu0 0.0
    %1937 = vmatprep.subr.mxu0 0.0
    %1938 = vmatpush1.msra.mxu0 0.0
    %1939 = vmatprep.subr.mxu0 0.0
    %1940 = vmatpush1.msra.mxu0 0.0
    %1941 = vmatprep.subr.mxu0 0.0
    %1942 = vmatpush1.msra.mxu0 0.0
    %1943 = vmatprep.subr.mxu0 0.0
    %1944 = vmatpush1.msra.mxu0 0.0
    %1945 = vmatprep.subr.mxu0 0.0
    %1946 = vmatpush1.msra.mxu0 0.0
    %1947 = vmatprep.subr.mxu0 0.0
    %1948 = vmatpush1.msra.mxu0 0.0
    %1949 = vmatprep.subr.mxu0 0.0
    %1950 = vmatpush1.msra.mxu0 0.0
    %1951 = vmatprep.subr.mxu0 0.0
    %1952 = vmatpush1.msra.mxu0 0.0
    %1953 = vmatprep.subr.mxu0 0.0
    %1954 = vmatpush1.msra.mxu0 0.0
    %1955 = vmatprep.subr.mxu0 0.0
    %1956 = vmatpush1.msra.mxu0 0.0
    %1957 = vmatprep.subr.mxu0 0.0
    %1958 = vmatpush1.msra.mxu0 0.0
    %1959 = vmatprep.subr.mxu0 0.0
    %1960 = vmatpush1.msra.mxu0 0.0
    %1961 = vmatprep.subr.mxu0 0.0
    %1962 = vmatpush1.msra.mxu0 0.0
    %1963 = vmatprep.subr.mxu0 0.0
    %1964 = vmatpush1.msra.mxu0 0.0
    %1965 = vmatprep.subr.mxu0 0.0
    %1966 = vmatpush1.msra.mxu0 0.0
    %1967 = vmatprep.subr.mxu0 0.0
    %1968 = vmatpush1.msra.mxu0 0.0
    %1969 = vmatprep.subr.mxu0 0.0
    %1970 = vmatpush1.msra.mxu0 0.0
    %1971 = vmatprep.mubr.f32.mxu0 0.0
    %1972 = vmatmul.mubr.f32.gmra.mrb[0].mxu0 %v1905
    %v1973 = vpop.f32.mrb[0].mxu0
    %v1974 = vadd.f32 0.0, %v1973
    %v1975 = vpop.f32.mrb[0].mxu0
    %1976 = vdwg.mxu0
    %v1977 = vadd.f32 %v1902, %v1974
    %v1978 = vxor.u32 %v1977, 2147483648
    %v1979 = vmul.f32 %v1978, 1.442695
    %v1980 = vpow.pop %v1979
    %v1981 = vadd.f32 %v1980, 1.0
    %v1982 = vrcp.pop %v1981
    %v1983 = vmul.f32 1.0, %v1982
    %v1984 = vtanh.pop %v1977
    %v1985 = vld [vmem:[#allocation5] sm:$0xff]
    %1987 = vrot.lane.b32.xlu0 %v1985, 32
    %v1988 = vpop.permute.xlu0 %1987
    %v1990 = vmul.f32 %v1983, %v1988
    %1992 = vrot.lane.b32.xlu0 %v1984, 64
    %v1993 = vpop.permute.xlu0 %1992
    %v1995 = vmul.f32 %v1983, %v1993
    %1997 = vrot.lane.b32.xlu0 %v1995, 32
    %v1998 = vpop.permute.xlu0 %1997
    %v2000 = vadd.f32 %v1990, %v1998
    %v2001 = vtanh.pop %v2000
    %2003 = vrot.lane.b32.xlu0 %v2001, 64
    %v2004 = vpop.permute.xlu0 %2003
    %v2006 = vmul.f32 %v1983, %v2004
    %2008 = vrot.lane.b32.xlu0 %v2000, 96
    %v2009 = vpop.permute.xlu0 %2008
    %2011 = vst.msk [vmem:[#allocation5] sm:$0xff] %vm216, %v2009
    %2013 = vrot.lane.b32.xlu0 %v2006, 32
    %v2014 = vpop.permute.xlu0 %2013
    %2016 = vst.msk [vmem:[#allocation4] sm:$0xff] %vm216, %v2014
    %v2017 = vld [vmem:[%s929] sm:$0xff]
    %v2018 = vld [vmem:[#allocation4] sm:$0xff]
    %v2020 = vsel %vm216, %v2018, 0
    %2022 = vmatprep.subr.mxu0 0.0
    %2023 = vmatpush1.msra.mxu0 %v1323
    %2024 = vmatprep.subr.mxu0 0.0
    %2025 = vmatpush1.msra.mxu0 %v1324
    %2026 = vmatprep.subr.mxu0 0.0
    %2027 = vmatpush1.msra.mxu0 %v1325
    %2028 = vmatprep.subr.mxu0 0.0
    %2029 = vmatpush1.msra.mxu0 %v1326
    %2030 = vmatprep.subr.mxu0 0.0
    %2031 = vmatpush1.msra.mxu0 0.0
    %2032 = vmatprep.subr.mxu0 0.0
    %2033 = vmatpush1.msra.mxu0 0.0
    %2034 = vmatprep.subr.mxu0 0.0
    %2035 = vmatpush1.msra.mxu0 0.0
    %2036 = vmatprep.subr.mxu0 0.0
    %2037 = vmatpush1.msra.mxu0 0.0
    %2038 = vmatprep.subr.mxu0 0.0
    %2039 = vmatpush1.msra.mxu0 0.0
    %2040 = vmatprep.subr.mxu0 0.0
    %2041 = vmatpush1.msra.mxu0 0.0
    %2042 = vmatprep.subr.mxu0 0.0
    %2043 = vmatpush1.msra.mxu0 0.0
    %2044 = vmatprep.subr.mxu0 0.0
    %2045 = vmatpush1.msra.mxu0 0.0
    %2046 = vmatprep.subr.mxu0 0.0
    %2047 = vmatpush1.msra.mxu0 0.0
    %2048 = vmatprep.subr.mxu0 0.0
    %2049 = vmatpush1.msra.mxu0 0.0
    %2050 = vmatprep.subr.mxu0 0.0
    %2051 = vmatpush1.msra.mxu0 0.0
    %2052 = vmatprep.subr.mxu0 0.0
    %2053 = vmatpush1.msra.mxu0 0.0
    %2054 = vmatprep.subr.mxu0 0.0
    %2055 = vmatpush1.msra.mxu0 0.0
    %2056 = vmatprep.subr.mxu0 0.0
    %2057 = vmatpush1.msra.mxu0 0.0
    %2058 = vmatprep.subr.mxu0 0.0
    %2059 = vmatpush1.msra.mxu0 0.0
    %2060 = vmatprep.subr.mxu0 0.0
    %2061 = vmatpush1.msra.mxu0 0.0
    %2062 = vmatprep.subr.mxu0 0.0
    %2063 = vmatpush1.msra.mxu0 0.0
    %2064 = vmatprep.subr.mxu0 0.0
    %2065 = vmatpush1.msra.mxu0 0.0
    %2066 = vmatprep.subr.mxu0 0.0
    %2067 = vmatpush1.msra.mxu0 0.0
    %2068 = vmatprep.subr.mxu0 0.0
    %2069 = vmatpush1.msra.mxu0 0.0
    %2070 = vmatprep.subr.mxu0 0.0
    %2071 = vmatpush1.msra.mxu0 0.0
    %2072 = vmatprep.subr.mxu0 0.0
    %2073 = vmatpush1.msra.mxu0 0.0
    %2074 = vmatprep.subr.mxu0 0.0
    %2075 = vmatpush1.msra.mxu0 0.0
    %2076 = vmatprep.subr.mxu0 0.0
    %2077 = vmatpush1.msra.mxu0 0.0
    %2078 = vmatprep.subr.mxu0 0.0
    %2079 = vmatpush1.msra.mxu0 0.0
    %2080 = vmatprep.subr.mxu0 0.0
    %2081 = vmatpush1.msra.mxu0 0.0
    %2082 = vmatprep.subr.mxu0 0.0
    %2083 = vmatpush1.msra.mxu0 0.0
    %2084 = vmatprep.subr.mxu0 0.0
    %2085 = vmatpush1.msra.mxu0 0.0
    %2086 = vmatprep.mubr.f32.mxu0 0.0
    %2087 = vmatmul.mubr.f32.gmra.mrb[0].mxu0 %v2020
    %v2088 = vpop.f32.mrb[0].mxu0
    %v2089 = vadd.f32 0.0, %v2088
    %v2090 = vpop.f32.mrb[0].mxu0
    %2091 = vdwg.mxu0
    %v2092 = vadd.f32 %v2017, %v2089
    %v2093 = vxor.u32 %v2092, 2147483648
    %v2094 = vmul.f32 %v2093, 1.442695
    %v2095 = vpow.pop %v2094
    %v2096 = vadd.f32 %v2095, 1.0
    %v2097 = vrcp.pop %v2096
    %v2098 = vmul.f32 1.0, %v2097
    %v2099 = vtanh.pop %v2092
    %v2100 = vld [vmem:[#allocation5] sm:$0xff]
    %2102 = vrot.lane.b32.xlu0 %v2100, 32
    %v2103 = vpop.permute.xlu0 %2102
    %v2105 = vmul.f32 %v2098, %v2103
    %2107 = vrot.lane.b32.xlu0 %v2099, 64
    %v2108 = vpop.permute.xlu0 %2107
    %v2110 = vmul.f32 %v2098, %v2108
    %2112 = vrot.lane.b32.xlu0 %v2110, 32
    %v2113 = vpop.permute.xlu0 %2112
    %v2115 = vadd.f32 %v2105, %v2113
    %v2116 = vtanh.pop %v2115
    %2118 = vrot.lane.b32.xlu0 %v2116, 64
    %v2119 = vpop.permute.xlu0 %2118
    %v2121 = vmul.f32 %v2098, %v2119
    %2123 = vrot.lane.b32.xlu0 %v2115, 96
    %v2124 = vpop.permute.xlu0 %2123
    %2126 = vst.msk [vmem:[#allocation5] sm:$0xff] %vm216, %v2124
    %2128 = vrot.lane.b32.xlu0 %v2121, 32
    %v2129 = vpop.permute.xlu0 %2128
    %2131 = vst.msk [vmem:[#allocation4] sm:$0xff] %vm216, %v2129
    %v2132 = vld [vmem:[%s1047] sm:$0xff]
    %v2133 = vld [vmem:[#allocation4] sm:$0xff]
    %v2135 = vsel %vm216, %v2133, 0
    %2137 = vmatprep.subr.mxu0 0.0
    %2138 = vmatpush1.msra.mxu0 %v1323
    %2139 = vmatprep.subr.mxu0 0.0
    %2140 = vmatpush1.msra.mxu0 %v1324
    %2141 = vmatprep.subr.mxu0 0.0
    %2142 = vmatpush1.msra.mxu0 %v1325
    %2143 = vmatprep.subr.mxu0 0.0
    %2144 = vmatpush1.msra.mxu0 %v1326
    %2145 = vmatprep.subr.mxu0 0.0
    %2146 = vmatpush1.msra.mxu0 0.0
    %2147 = vmatprep.subr.mxu0 0.0
    %2148 = vmatpush1.msra.mxu0 0.0
    %2149 = vmatprep.subr.mxu0 0.0
    %2150 = vmatpush1.msra.mxu0 0.0
    %2151 = vmatprep.subr.mxu0 0.0
    %2152 = vmatpush1.msra.mxu0 0.0
    %2153 = vmatprep.subr.mxu0 0.0
    %2154 = vmatpush1.msra.mxu0 0.0
    %2155 = vmatprep.subr.mxu0 0.0
    %2156 = vmatpush1.msra.mxu0 0.0
    %2157 = vmatprep.subr.mxu0 0.0
    %2158 = vmatpush1.msra.mxu0 0.0
    %2159 = vmatprep.subr.mxu0 0.0
    %2160 = vmatpush1.msra.mxu0 0.0
    %2161 = vmatprep.subr.mxu0 0.0
    %2162 = vmatpush1.msra.mxu0 0.0
    %2163 = vmatprep.subr.mxu0 0.0
    %2164 = vmatpush1.msra.mxu0 0.0
    %2165 = vmatprep.subr.mxu0 0.0
    %2166 = vmatpush1.msra.mxu0 0.0
    %2167 = vmatprep.subr.mxu0 0.0
    %2168 = vmatpush1.msra.mxu0 0.0
    %2169 = vmatprep.subr.mxu0 0.0
    %2170 = vmatpush1.msra.mxu0 0.0
    %2171 = vmatprep.subr.mxu0 0.0
    %2172 = vmatpush1.msra.mxu0 0.0
    %2173 = vmatprep.subr.mxu0 0.0
    %2174 = vmatpush1.msra.mxu0 0.0
    %2175 = vmatprep.subr.mxu0 0.0
    %2176 = vmatpush1.msra.mxu0 0.0
    %2177 = vmatprep.subr.mxu0 0.0
    %2178 = vmatpush1.msra.mxu0 0.0
    %2179 = vmatprep.subr.mxu0 0.0
    %2180 = vmatpush1.msra.mxu0 0.0
    %2181 = vmatprep.subr.mxu0 0.0
    %2182 = vmatpush1.msra.mxu0 0.0
    %2183 = vmatprep.subr.mxu0 0.0
    %2184 = vmatpush1.msra.mxu0 0.0
    %2185 = vmatprep.subr.mxu0 0.0
    %2186 = vmatpush1.msra.mxu0 0.0
    %2187 = vmatprep.subr.mxu0 0.0
    %2188 = vmatpush1.msra.mxu0 0.0
    %2189 = vmatprep.subr.mxu0 0.0
    %2190 = vmatpush1.msra.mxu0 0.0
    %2191 = vmatprep.subr.mxu0 0.0
    %2192 = vmatpush1.msra.mxu0 0.0
    %2193 = vmatprep.subr.mxu0 0.0
    %2194 = vmatpush1.msra.mxu0 0.0
    %2195 = vmatprep.subr.mxu0 0.0
    %2196 = vmatpush1.msra.mxu0 0.0
    %2197 = vmatprep.subr.mxu0 0.0
    %2198 = vmatpush1.msra.mxu0 0.0
    %2199 = vmatprep.subr.mxu0 0.0
    %2200 = vmatpush1.msra.mxu0 0.0
    %2201 = vmatprep.mubr.f32.mxu0 0.0
    %2202 = vmatmul.mubr.f32.gmra.mrb[0].mxu0 %v2135
    %v2203 = vpop.f32.mrb[0].mxu0
    %v2204 = vadd.f32 0.0, %v2203
    %v2205 = vpop.f32.mrb[0].mxu0
    %2206 = vdwg.mxu0
    %v2207 = vadd.f32 %v2132, %v2204
    %v2208 = vxor.u32 %v2207, 2147483648
    %v2209 = vmul.f32 %v2208, 1.442695
    %v2210 = vpow.pop %v2209
    %v2211 = vadd.f32 %v2210, 1.0
    %v2212 = vrcp.pop %v2211
    %v2213 = vmul.f32 1.0, %v2212
    %v2214 = vtanh.pop %v2207
    %v2215 = vld [vmem:[#allocation5] sm:$0xff]
    %2217 = vrot.lane.b32.xlu0 %v2215, 32
    %v2218 = vpop.permute.xlu0 %2217
    %v2220 = vmul.f32 %v2213, %v2218
    %2222 = vrot.lane.b32.xlu0 %v2214, 64
    %v2223 = vpop.permute.xlu0 %2222
    %v2225 = vmul.f32 %v2213, %v2223
    %2227 = vrot.lane.b32.xlu0 %v2225, 32
    %v2228 = vpop.permute.xlu0 %2227
    %v2230 = vadd.f32 %v2220, %v2228
    %v2231 = vtanh.pop %v2230
    %2233 = vrot.lane.b32.xlu0 %v2231, 64
    %v2234 = vpop.permute.xlu0 %2233
    %v2236 = vmul.f32 %v2213, %v2234
    %2238 = vrot.lane.b32.xlu0 %v2230, 96
    %v2239 = vpop.permute.xlu0 %2238
    %2241 = vst.msk [vmem:[#allocation5] sm:$0xff] %vm216, %v2239
    %2243 = vrot.lane.b32.xlu0 %v2236, 32
    %v2244 = vpop.permute.xlu0 %2243
    %2246 = vst.msk [vmem:[#allocation4] sm:$0xff] %vm216, %v2244
    %v2247 = vld [vmem:[#allocation4] sm:$0xff]
    %v2248 = vld [vmem:[#allocation9] sm:$0xff]
    %v2249 = vld [vmem:[#allocation9 + $0x8] sm:$0xff]
    %v2250 = vld [vmem:[#allocation9 + $0x10] sm:$0xff]
    %v2251 = vld [vmem:[#allocation9 + $0x18] sm:$0xff]
    %v2252 = vld [vmem:[%s8] sm:$0x1]
    %v2254 = vlaneseq
    %v2255 = vshrl.u32 %v2254, 7
    %v2256 = vsub.s32 0, %v2255
    %v2257 = vrot.slane %v2252, %v2256
    %v2260 = vsel %vm216, %v2247, 0
    %2262 = vmatprep.subr.mxu0 0.0
    %2263 = vmatpush1.msra.mxu0 %v2248
    %2264 = vmatprep.subr.mxu0 0.0
    %2265 = vmatpush1.msra.mxu0 %v2249
    %2266 = vmatprep.subr.mxu0 0.0
    %2267 = vmatpush1.msra.mxu0 %v2250
    %2268 = vmatprep.subr.mxu0 0.0
    %2269 = vmatpush1.msra.mxu0 %v2251
    %2270 = vmatprep.subr.mxu0 0.0
    %2271 = vmatpush1.msra.mxu0 0.0
    %2272 = vmatprep.subr.mxu0 0.0
    %2273 = vmatpush1.msra.mxu0 0.0
    %2274 = vmatprep.subr.mxu0 0.0
    %2275 = vmatpush1.msra.mxu0 0.0
    %2276 = vmatprep.subr.mxu0 0.0
    %2277 = vmatpush1.msra.mxu0 0.0
    %2278 = vmatprep.subr.mxu0 0.0
    %2279 = vmatpush1.msra.mxu0 0.0
    %2280 = vmatprep.subr.mxu0 0.0
    %2281 = vmatpush1.msra.mxu0 0.0
    %2282 = vmatprep.subr.mxu0 0.0
    %2283 = vmatpush1.msra.mxu0 0.0
    %2284 = vmatprep.subr.mxu0 0.0
    %2285 = vmatpush1.msra.mxu0 0.0
    %2286 = vmatprep.subr.mxu0 0.0
    %2287 = vmatpush1.msra.mxu0 0.0
    %2288 = vmatprep.subr.mxu0 0.0
    %2289 = vmatpush1.msra.mxu0 0.0
    %2290 = vmatprep.subr.mxu0 0.0
    %2291 = vmatpush1.msra.mxu0 0.0
    %2292 = vmatprep.subr.mxu0 0.0
    %2293 = vmatpush1.msra.mxu0 0.0
    %2294 = vmatprep.subr.mxu0 0.0
    %2295 = vmatpush1.msra.mxu0 0.0
    %2296 = vmatprep.subr.mxu0 0.0
    %2297 = vmatpush1.msra.mxu0 0.0
    %2298 = vmatprep.subr.mxu0 0.0
    %2299 = vmatpush1.msra.mxu0 0.0
    %2300 = vmatprep.subr.mxu0 0.0
    %2301 = vmatpush1.msra.mxu0 0.0
    %2302 = vmatprep.subr.mxu0 0.0
    %2303 = vmatpush1.msra.mxu0 0.0
    %2304 = vmatprep.subr.mxu0 0.0
    %2305 = vmatpush1.msra.mxu0 0.0
    %2306 = vmatprep.subr.mxu0 0.0
    %2307 = vmatpush1.msra.mxu0 0.0
    %2308 = vmatprep.subr.mxu0 0.0
    %2309 = vmatpush1.msra.mxu0 0.0
    %2310 = vmatprep.subr.mxu0 0.0
    %2311 = vmatpush1.msra.mxu0 0.0
    %2312 = vmatprep.subr.mxu0 0.0
    %2313 = vmatpush1.msra.mxu0 0.0
    %2314 = vmatprep.subr.mxu0 0.0
    %2315 = vmatpush1.msra.mxu0 0.0
    %2316 = vmatprep.subr.mxu0 0.0
    %2317 = vmatpush1.msra.mxu0 0.0
    %2318 = vmatprep.subr.mxu0 0.0
    %2319 = vmatpush1.msra.mxu0 0.0
    %2320 = vmatprep.subr.mxu0 0.0
    %2321 = vmatpush1.msra.mxu0 0.0
    %2322 = vmatprep.subr.mxu0 0.0
    %2323 = vmatpush1.msra.mxu0 0.0
    %2324 = vmatprep.subr.mxu0 0.0
    %2325 = vmatpush1.msra.mxu0 0.0
    %2326 = vmatprep.mubr.f32.mxu0 0.0
    %2327 = vmatmul.mubr.f32.gmra.mrb[0].mxu0 %v2260
    %v2328 = vpop.f32.mrb[0].mxu0
    %v2329 = vadd.f32 %v2257, %v2328
    %v2330 = vpop.f32.mrb[0].mxu0
    %2331 = vdwg.mxu0
    %2332 = vst [vmem:[#allocation11] sm:$0xff] %v2329
    // Predicated region
    $region46: #{tpu_custom_call.1} parent=1 // pred_check
      _
    $region47: #{tpu_custom_call.1} parent=1 // pred_check_branch
      %2334 = sbr.rel (0) target = $region49
    $region48: #{tpu_custom_call.1} parent=1 // pred_region
      %s2336 = ssub.s32 128, 128
      %2337 = vsyncadd [#allocation8], %s2336
      %s2339 = sshll.u32 [#allocation11], 4
      %s2340 = int_to_ptr.vmem [resolvable:$true] %s2339
      %2342 = dma.vmem_to_hbm [thread:$0]  %s2340, 128, %s9, [#allocation8]
    $region49: #{tpu_custom_call.1} parent=1 // pred_fallthru
      _
    // Predicated region
    $region50: #{tpu_custom_call.1} parent=1 // pred_check
      _
    $region51: #{tpu_custom_call.1} parent=1 // pred_check_branch
      %2344 = sbr.rel (0) target = $region53
    $region52: #{tpu_custom_call.1} parent=1 // pred_region
      %2345 = dma.done [#allocation8], 128
    $region53: #{tpu_custom_call.1} parent=1 // pred_fallthru
      _
    %2346 = vsyncpa [#allocation7], 1
    %2347 = vsyncpa [#allocation10], 1
    %2348 = vsyncpa [#allocation8], 1

</llo_original>
